<compile_context>
chip_gen: v7x
topology: tpu7x:2x2x1
jax: 0.10.0
libtpu: 0.0.40
codegen_flags: <defaults>
</compile_context>

<pallas_src>
import functools
import math

import jax
import jax.numpy as jnp
from jax.experimental import pallas as pl
from jax.experimental.pallas import tpu as pltpu


def _transformer_block_kernel(
    x_ref, cos_ref, sin_ref,
    anw_ref, wq_ref, wk_ref, wv_ref, wo_ref,
    fnw_ref, w1_ref, w2_ref, w3_ref,
    o_ref,
    *, n_heads, n_kv_heads, head_dim, eps,
):
    f32 = jnp.float32
    bf16 = jnp.bfloat16

    x = x_ref[...]                                   # (S, D) f32
    S, D = x.shape
    hd = head_dim
    hd2 = hd // 2
    n_rep = n_heads // n_kv_heads

    # ---- attention RMSNorm (f32) ----
    ms = jnp.mean(x * x, axis=-1, keepdims=True)
    xn = (x * jax.lax.rsqrt(ms + eps) * anw_ref[...]).astype(bf16)

    # ---- QKV projections: bf16 operands, f32 accumulation on the MXU ----
    # (1/sqrt(head_dim) is already folded into wq by the wrapper.)
    q = jnp.dot(xn, wq_ref[...], preferred_element_type=f32)   # (S, Hq*hd)
    k = jnp.dot(xn, wk_ref[...], preferred_element_type=f32)   # (S, Hkv*hd)
    v = jnp.dot(xn, wv_ref[...], preferred_element_type=f32)   # (S, Hkv*hd)

    # RoPE tables, (S, hd/2), shared by all heads.
    cos = cos_ref[...]
    sin = sin_ref[...]

    def rope(t):
        # t: (S, hd) in de-interleaved [re | im] per-head layout (see wrapper).
        tr = t[:, :hd2]
        ti = t[:, hd2:]
        return jnp.concatenate([tr * cos - ti * sin, tr * sin + ti * cos], axis=-1)

    # ---- causal GQA attention; per-head output projected & accumulated ----
    row = jax.lax.broadcasted_iota(jnp.int32, (S, S), 0)
    col = jax.lax.broadcasted_iota(jnp.int32, (S, S), 1)
    causal = row >= col

    wo = wo_ref[...]                                 # (Hq*hd, D) bf16
    attn = jnp.zeros((S, D), f32)
    for g in range(n_kv_heads):
        k_g = rope(k[:, g * hd:(g + 1) * hd]).astype(bf16)   # rotate once per kv head
        v_g = v[:, g * hd:(g + 1) * hd].astype(bf16)
        for r in range(n_rep):
            h = g * n_rep + r
            q_h = rope(q[:, h * hd:(h + 1) * hd]).astype(bf16)
            s = jax.lax.dot_general(q_h, k_g, (((1,), (1,)), ((), ())),
                                    preferred_element_type=f32)        # (S, S)
            s = jnp.where(causal, s, -jnp.inf)
            s = s - jnp.max(s, axis=-1, keepdims=True)
            p = jnp.exp(s)                                             # f32 softmax
            p = p * pl.reciprocal(jnp.sum(p, axis=-1, keepdims=True), approx=True)
            o_h = jnp.dot(p.astype(bf16), v_g, preferred_element_type=f32)   # (S, hd)
            # Accumulate straight into the wo output: no lane concatenate.
            attn = attn + jnp.dot(o_h.astype(bf16), wo[h * hd:(h + 1) * hd, :],
                                  preferred_element_type=f32)

    h1 = x + attn                                    # residual 1 (f32)

    # ---- FFN RMSNorm + SwiGLU ----
    ms2 = jnp.mean(h1 * h1, axis=-1, keepdims=True)
    hn = (h1 * jax.lax.rsqrt(ms2 + eps) * fnw_ref[...]).astype(bf16)
    gte = jnp.dot(hn, w1_ref[...], preferred_element_type=f32)
    up = jnp.dot(hn, w3_ref[...], preferred_element_type=f32)
    act = (gte * jax.nn.sigmoid(gte) * up).astype(bf16)
    ff = jnp.dot(act, w2_ref[...], preferred_element_type=f32)

    # TODO(synk): dropout (attn/resid/ffn) is p=0.0 in ModelArgs -> no-op, omitted.
    o_ref[...] = h1 + ff                             # residual 2


def _deinterleave_heads(w, n_h, hd):
    """Reorder (in_dim, n_h*hd) columns so each head is [even cols | odd cols].

    Q.K^T is invariant to a shared per-head column permutation, so applying RoPE
    in this 'rotate-half' layout matches the interleaved torch reference exactly.
    """
    d_in = w.shape[0]
    w4 = w.reshape(d_in, n_h, hd // 2, 2)
    w4 = jnp.transpose(w4, (0, 1, 3, 2))             # (d_in, n_h, 2, hd//2)
    return w4.reshape(d_in, n_h * hd)


def _build_block_call(B, S, D, qdim, kdim, hidden, hd2, n_heads, n_kv_heads,
                      head_dim, eps, single_buffer_weights):
    def const_spec(shape):
        # Weights / tables: block index never changes across the batch grid.
        if single_buffer_weights:
            return pl.BlockSpec(shape, lambda b: (0,) * len(shape),
                                pipeline_mode=pl.Buffered(1))
        return pl.BlockSpec(shape, lambda b: (0,) * len(shape))

    kernel = functools.partial(
        _transformer_block_kernel,
        n_heads=n_heads, n_kv_heads=n_kv_heads, head_dim=head_dim, eps=eps)

    return pl.pallas_call(
        kernel,
        out_shape=jax.ShapeDtypeStruct((B, S, D), jnp.float32),
        grid=(B,),
        in_specs=[
            pl.BlockSpec((None, S, D), lambda b: (b, 0, 0)),   # x (batch squeezed)
            const_spec((S, hd2)),     # cos  (shared across heads)
            const_spec((S, hd2)),     # sin
            const_spec((1, D)),       # attn_norm weight (f32)
            const_spec((D, qdim)),    # wq (scaled, de-interleaved, bf16)
            const_spec((D, kdim)),    # wk (de-interleaved, bf16)
            const_spec((D, kdim)),    # wv (bf16)
            const_spec((qdim, D)),    # wo (bf16)
            const_spec((1, D)),       # ffn_norm weight (f32)
            const_spec((D, hidden)),  # w1 (bf16)
            const_spec((hidden, D)),  # w2 (bf16)
            const_spec((D, hidden)),  # w3 (bf16)
        ],
        out_specs=pl.BlockSpec((None, S, D), lambda b: (b, 0, 0)),
        compiler_params=pltpu.CompilerParams(
            dimension_semantics=("parallel",),
            vmem_limit_bytes=64 * 1024 * 1024),
    )


def transformer_block(x, params, freqs_cos, freqs_sin, *, n_heads, n_kv_heads,
                      eps=1e-5):
    B, S, D = x.shape
    head_dim = D // n_heads
    hd2 = head_dim // 2
    qdim = n_heads * head_dim
    kdim = n_kv_heads * head_dim
    hidden = params["w1"].shape[1]

    bf16 = jnp.bfloat16
    scale = 1.0 / math.sqrt(head_dim)
    # Fold the attention scale into wq (free); de-interleave wq/wk per head so the
    # kernel can do rotate-half RoPE with contiguous half slices.
    wq = (_deinterleave_heads(params["wq"], n_heads, head_dim) * scale).astype(bf16)
    wk = _deinterleave_heads(params["wk"], n_kv_heads, head_dim).astype(bf16)
    wv = params["wv"].astype(bf16)
    wo = params["wo"].astype(bf16)
    w1 = params["w1"].astype(bf16)
    w2 = params["w2"].astype(bf16)
    w3 = params["w3"].astype(bf16)
    anw = params["attn_norm"].reshape(1, D).astype(jnp.float32)
    fnw = params["ffn_norm"].reshape(1, D).astype(jnp.float32)
    cos = freqs_cos.astype(jnp.float32)              # (S, head_dim // 2)
    sin = freqs_sin.astype(jnp.float32)

    args = (x.astype(jnp.float32), cos, sin, anw, wq, wk, wv, wo, fnw, w1, w2, w3)

    try:
        call = _build_block_call(B, S, D, qdim, kdim, hidden, hd2, n_heads,
                                 n_kv_heads, head_dim, eps, True)
        return call(*args)
    except Exception:
        # Fallback if this JAX build rejects pipeline_mode=pl.Buffered(1).
        call = _build_block_call(B, S, D, qdim, kdim, hidden, hd2, n_heads,
                                 n_kv_heads, head_dim, eps, False)
        return call(*args)


# ------------------------- pure-JAX reference (for checking) -------------------------
def ref_transformer_block(x, p, freqs_cos, freqs_sin, n_heads, n_kv_heads, eps=1e-5):
    def rmsnorm(t, w):
        return t * jax.lax.rsqrt(jnp.mean(t * t, axis=-1, keepdims=True) + eps) * w

    B, S, D = x.shape
    hd = D // n_heads
    n_rep = n_heads // n_kv_heads

    xn = rmsnorm(x, p["attn_norm"])
    q = (xn @ p["wq"]).reshape(B, S, n_heads, hd)
    k = (xn @ p["wk"]).reshape(B, S, n_kv_heads, hd)
    v = (xn @ p["wv"]).reshape(B, S, n_kv_heads, hd)

    def rope(t):
        tr = t.reshape(t.shape[:-1] + (hd // 2, 2))
        t_r, t_i = tr[..., 0], tr[..., 1]
        c = freqs_cos[None, :, None, :]
        s = freqs_sin[None, :, None, :]
        o_r = t_r * c - t_i * s
        o_i = t_r * s + t_i * c
        return jnp.stack([o_r, o_i], axis=-1).reshape(t.shape)

    q, k = rope(q), rope(k)
    k = jnp.repeat(k, n_rep, axis=2)
    v = jnp.repeat(v, n_rep, axis=2)
    q, k, v = (t.transpose(0, 2, 1, 3) for t in (q, k, v))
    s = jnp.einsum("bhqd,bhkd->bhqk", q, k) / math.sqrt(hd)
    mask = jnp.tril(jnp.ones((S, S), bool))
    s = jnp.where(mask, s, -jnp.inf)
    a = jax.nn.softmax(s, axis=-1)
    o = jnp.einsum("bhqk,bhkd->bhqd", a, v).transpose(0, 2, 1, 3).reshape(B, S, D)
    h = x + o @ p["wo"]
    hn = rmsnorm(h, p["ffn_norm"])
    ff = (jax.nn.silu(hn @ p["w1"]) * (hn @ p["w3"])) @ p["w2"]
    return h + ff


if __name__ == "__main__":
    # Small ModelArgs-consistent shapes
    B, S = 2, 8
    dim = 64
    n_heads = 4
    n_kv_heads = 2            # exercises GQA / repeat_kv (n_rep = 2)
    multiple_of = 32
    head_dim = dim // n_heads

    hidden = int(2 * (4 * dim) / 3)
    hidden = multiple_of * ((hidden + multiple_of - 1) // multiple_of)   # 192

    key = jax.random.PRNGKey(0)
    keys = jax.random.split(key, 9)
    init = lambda k, shp: (jax.random.normal(k, shp, jnp.float32) * 0.02)
    params = {
        "wq": init(keys[0], (dim, n_heads * head_dim)),
        "wk": init(keys[1], (dim, n_kv_heads * head_dim)),
        "wv": init(keys[2], (dim, n_kv_heads * head_dim)),
        "wo": init(keys[3], (n_heads * head_dim, dim)),
        "w1": init(keys[4], (dim, hidden)),
        "w2": init(keys[5], (hidden, dim)),
        "w3": init(keys[6], (dim, hidden)),
        "attn_norm": jnp.ones((dim,), jnp.float32),
        "ffn_norm": jnp.ones((dim,), jnp.float32),
    }

    # RoPE tables (llama convention)
    inv_freq = 1.0 / (10000.0 ** (jnp.arange(0, head_dim, 2, dtype=jnp.float32) / head_dim))
    t = jnp.arange(S, dtype=jnp.float32)
    fr = jnp.outer(t, inv_freq)                      # (S, hd/2)
    freqs_cos, freqs_sin = jnp.cos(fr), jnp.sin(fr)

    x = jax.random.normal(keys[7], (B, S, dim), jnp.float32)

    out = transformer_block(x, params, freqs_cos, freqs_sin,
                            n_heads=n_heads, n_kv_heads=n_kv_heads, eps=1e-5)
    out = jax.block_until_ready(out)

    ref = ref_transformer_block(x, params, freqs_cos, freqs_sin,
                                n_heads, n_kv_heads, eps=1e-5)
    ref = jax.block_until_ready(ref)

    assert out.shape == (B, S, dim)
    assert not bool(jnp.any(jnp.isnan(out)))
    max_err = float(jnp.max(jnp.abs(out - ref)))
    assert max_err < 2e-2, f"mismatch vs reference: max |diff| = {max_err}"

    print("KERNEL_OK")
</pallas_src>

<mosaic_0001>
module attributes {stable_mosaic.version = 11 : i64} {
  func.func @_transformer_block_kernel(%arg0: i32, %arg1: memref<1x8x64xf32, #tpu.memory_space<vmem>>, %arg2: memref<8x8xf32, #tpu.memory_space<vmem>>, %arg3: memref<8x8xf32, #tpu.memory_space<vmem>>, %arg4: memref<1x64xf32, #tpu.memory_space<vmem>>, %arg5: memref<64x64xbf16, #tpu.memory_space<vmem>>, %arg6: memref<64x32xbf16, #tpu.memory_space<vmem>>, %arg7: memref<64x32xbf16, #tpu.memory_space<vmem>>, %arg8: memref<64x64xbf16, #tpu.memory_space<vmem>>, %arg9: memref<1x64xf32, #tpu.memory_space<vmem>>, %arg10: memref<64x192xbf16, #tpu.memory_space<vmem>>, %arg11: memref<192x64xbf16, #tpu.memory_space<vmem>>, %arg12: memref<64x192xbf16, #tpu.memory_space<vmem>>, %arg13: memref<1x8x64xf32, #tpu.memory_space<vmem>>) attributes {dimension_semantics = [#tpu.dimension_semantics<parallel>], iteration_bounds = array<i64: 2>, scalar_prefetch = 0 : i64, scratch_operands = 0 : i64, tpu.core_type = #tpu.core_type<tc>, window_params = [{transform_indices = @transform_0, window_bounds = array<i64: 1, 8, 64>}, {pipeline_mode = #tpu.pipeline_mode<synchronous>, transform_indices = @transform_1, window_bounds = array<i64: 8, 8>}, {pipeline_mode = #tpu.pipeline_mode<synchronous>, transform_indices = @transform_2, window_bounds = array<i64: 8, 8>}, {pipeline_mode = #tpu.pipeline_mode<synchronous>, transform_indices = @transform_3, window_bounds = array<i64: 1, 64>}, {pipeline_mode = #tpu.pipeline_mode<synchronous>, transform_indices = @transform_4, window_bounds = array<i64: 64, 64>}, {pipeline_mode = #tpu.pipeline_mode<synchronous>, transform_indices = @transform_5, window_bounds = array<i64: 64, 32>}, {pipeline_mode = #tpu.pipeline_mode<synchronous>, transform_indices = @transform_6, window_bounds = array<i64: 64, 32>}, {pipeline_mode = #tpu.pipeline_mode<synchronous>, transform_indices = @transform_7, window_bounds = array<i64: 64, 64>}, {pipeline_mode = #tpu.pipeline_mode<synchronous>, transform_indices = @transform_8, window_bounds = array<i64: 1, 64>}, {pipeline_mode = #tpu.pipeline_mode<synchronous>, transform_indices = @transform_9, window_bounds = array<i64: 64, 192>}, {pipeline_mode = #tpu.pipeline_mode<synchronous>, transform_indices = @transform_10, window_bounds = array<i64: 192, 64>}, {pipeline_mode = #tpu.pipeline_mode<synchronous>, transform_indices = @transform_11, window_bounds = array<i64: 64, 192>}, {transform_indices = @transform_12, window_bounds = array<i64: 1, 8, 64>}]} {
    %c0 = arith.constant 0 : index
    %c0_0 = arith.constant 0 : index
    %c0_1 = arith.constant 0 : index
    %0 = vector.load %arg1[%c0, %c0_0, %c0_1] : memref<1x8x64xf32, #tpu.memory_space<vmem>>, vector<1x8x64xf32>
    %1 = vector.shape_cast %0 : vector<1x8x64xf32> to vector<8x64xf32>
    %2 = arith.mulf %1, %1 : vector<8x64xf32>
    %cst = arith.constant dense<0.000000e+00> : vector<8xf32>
    %3 = vector.multi_reduction <add>, %2, %cst [1] : vector<8x64xf32> to vector<8xf32>
    %4 = vector.shape_cast %3 : vector<8xf32> to vector<8x1xf32>
    %cst_2 = arith.constant 6.400000e+01 : f32
    %5 = vector.broadcast %cst_2 : f32 to vector<8x1xf32>
    %6 = arith.divf %4, %5 : vector<8x1xf32>
    %cst_3 = arith.constant 9.99999974E-6 : f32
    %7 = vector.broadcast %cst_3 : f32 to vector<8x1xf32>
    %8 = arith.addf %6, %7 : vector<8x1xf32>
    %9 = math.rsqrt %8 : vector<8x1xf32>
    %10 = vector.broadcast %9 : vector<8x1xf32> to vector<8x64xf32>
    %11 = arith.mulf %1, %10 : vector<8x64xf32>
    %c0_4 = arith.constant 0 : index
    %c0_5 = arith.constant 0 : index
    %12 = vector.load %arg4[%c0_4, %c0_5] : memref<1x64xf32, #tpu.memory_space<vmem>>, vector<1x64xf32>
    %13 = vector.broadcast %12 : vector<1x64xf32> to vector<8x64xf32>
    %14 = arith.mulf %11, %13 : vector<8x64xf32>
    %15 = arith.truncf %14 : vector<8x64xf32> to vector<8x64xbf16>
    %c0_6 = arith.constant 0 : index
    %c0_7 = arith.constant 0 : index
    %16 = vector.load %arg5[%c0_6, %c0_7] : memref<64x64xbf16, #tpu.memory_space<vmem>>, vector<64x64xbf16>
    %cst_8 = arith.constant dense<0.000000e+00> : vector<8x64xf32>
    %17 = tpu.matmul %15, %16, %cst_8 {dimension_numbers = #tpu.dot_dimension_numbers<[1], [0], [0], [1], [0, 0, 1, 1], [], []>} : vector<8x64xbf16>, vector<64x64xbf16>, vector<8x64xf32> -> vector<8x64xf32>
    %c0_9 = arith.constant 0 : index
    %c0_10 = arith.constant 0 : index
    %18 = vector.load %arg6[%c0_9, %c0_10] : memref<64x32xbf16, #tpu.memory_space<vmem>>, vector<64x32xbf16>
    %cst_11 = arith.constant dense<0.000000e+00> : vector<8x32xf32>
    %19 = tpu.matmul %15, %18, %cst_11 {dimension_numbers = #tpu.dot_dimension_numbers<[1], [0], [0], [1], [0, 0, 1, 1], [], []>} : vector<8x64xbf16>, vector<64x32xbf16>, vector<8x32xf32> -> vector<8x32xf32>
    %c0_12 = arith.constant 0 : index
    %c0_13 = arith.constant 0 : index
    %20 = vector.load %arg7[%c0_12, %c0_13] : memref<64x32xbf16, #tpu.memory_space<vmem>>, vector<64x32xbf16>
    %cst_14 = arith.constant dense<0.000000e+00> : vector<8x32xf32>
    %21 = tpu.matmul %15, %20, %cst_14 {dimension_numbers = #tpu.dot_dimension_numbers<[1], [0], [0], [1], [0, 0, 1, 1], [], []>} : vector<8x64xbf16>, vector<64x32xbf16>, vector<8x32xf32> -> vector<8x32xf32>
    %c0_15 = arith.constant 0 : index
    %c0_16 = arith.constant 0 : index
    %22 = vector.load %arg2[%c0_15, %c0_16] : memref<8x8xf32, #tpu.memory_space<vmem>>, vector<8x8xf32>
    %c0_17 = arith.constant 0 : index
    %c0_18 = arith.constant 0 : index
    %23 = vector.load %arg3[%c0_17, %c0_18] : memref<8x8xf32, #tpu.memory_space<vmem>>, vector<8x8xf32>
    %24 = tpu.iota {dimensions = array<i32: 0>} : vector<8x8xi32>
    %25 = tpu.iota {dimensions = array<i32: 1>} : vector<8x8xi32>
    %26 = arith.cmpi sge, %24, %25 : vector<8x8xi32>
    %c0_19 = arith.constant 0 : index
    %c0_20 = arith.constant 0 : index
    %27 = vector.load %arg8[%c0_19, %c0_20] : memref<64x64xbf16, #tpu.memory_space<vmem>>, vector<64x64xbf16>
    %cst_21 = arith.constant 0.000000e+00 : f32
    %28 = vector.broadcast %cst_21 : f32 to vector<8x64xf32>
    %29 = vector.extract_strided_slice %19 {offsets = [0, 0], sizes = [8, 16], strides = [1, 1]} : vector<8x32xf32> to vector<8x16xf32>
    %30 = vector.extract_strided_slice %29 {offsets = [0, 0], sizes = [8, 8], strides = [1, 1]} : vector<8x16xf32> to vector<8x8xf32>
    %31 = vector.extract_strided_slice %29 {offsets = [0, 8], sizes = [8, 8], strides = [1, 1]} : vector<8x16xf32> to vector<8x8xf32>
    %32 = arith.mulf %30, %22 : vector<8x8xf32>
    %33 = arith.mulf %31, %23 : vector<8x8xf32>
    %34 = arith.subf %32, %33 : vector<8x8xf32>
    %35 = arith.mulf %30, %23 : vector<8x8xf32>
    %36 = arith.mulf %31, %22 : vector<8x8xf32>
    %37 = arith.addf %35, %36 : vector<8x8xf32>
    %38 = tpu.concatenate %34, %37 in 1 : vector<8x8xf32>, vector<8x8xf32> -> vector<8x16xf32>
    %39 = arith.truncf %38 : vector<8x16xf32> to vector<8x16xbf16>
    %40 = vector.extract_strided_slice %21 {offsets = [0, 0], sizes = [8, 16], strides = [1, 1]} : vector<8x32xf32> to vector<8x16xf32>
    %41 = arith.truncf %40 : vector<8x16xf32> to vector<8x16xbf16>
    %42 = vector.extract_strided_slice %17 {offsets = [0, 0], sizes = [8, 16], strides = [1, 1]} : vector<8x64xf32> to vector<8x16xf32>
    %43 = vector.extract_strided_slice %42 {offsets = [0, 0], sizes = [8, 8], strides = [1, 1]} : vector<8x16xf32> to vector<8x8xf32>
    %44 = vector.extract_strided_slice %42 {offsets = [0, 8], sizes = [8, 8], strides = [1, 1]} : vector<8x16xf32> to vector<8x8xf32>
    %45 = arith.mulf %43, %22 : vector<8x8xf32>
    %46 = arith.mulf %44, %23 : vector<8x8xf32>
    %47 = arith.subf %45, %46 : vector<8x8xf32>
    %48 = arith.mulf %43, %23 : vector<8x8xf32>
    %49 = arith.mulf %44, %22 : vector<8x8xf32>
    %50 = arith.addf %48, %49 : vector<8x8xf32>
    %51 = tpu.concatenate %47, %50 in 1 : vector<8x8xf32>, vector<8x8xf32> -> vector<8x16xf32>
    %52 = arith.truncf %51 : vector<8x16xf32> to vector<8x16xbf16>
    %cst_22 = arith.constant dense<0.000000e+00> : vector<8x8xf32>
    %53 = tpu.matmul %52, %39, %cst_22 {dimension_numbers = #tpu.dot_dimension_numbers<[1], [1], [0], [0], [0, 0, 1, 0], [], []>} : vector<8x16xbf16>, vector<8x16xbf16>, vector<8x8xf32> -> vector<8x8xf32>
    %cst_23 = arith.constant 0xFF800000 : f32
    %54 = vector.broadcast %cst_23 : f32 to vector<8x8xf32>
    %55 = arith.select %26, %53, %54 : vector<8x8xi1>, vector<8x8xf32>
    %cst_24 = arith.constant dense<0xFF800000> : vector<8xf32>
    %56 = vector.multi_reduction <maximumf>, %55, %cst_24 [1] : vector<8x8xf32> to vector<8xf32>
    %57 = vector.shape_cast %56 : vector<8xf32> to vector<8x1xf32>
    %58 = vector.broadcast %57 : vector<8x1xf32> to vector<8x8xf32>
    %59 = arith.subf %55, %58 : vector<8x8xf32>
    %60 = math.exp %59 : vector<8x8xf32>
    %cst_25 = arith.constant dense<0.000000e+00> : vector<8xf32>
    %61 = vector.multi_reduction <add>, %60, %cst_25 [1] : vector<8x8xf32> to vector<8xf32>
    %62 = vector.shape_cast %61 : vector<8xf32> to vector<8x1xf32>
    %63 = tpu.reciprocal %62 {approx = true} : vector<8x1xf32> -> vector<8x1xf32>
    %64 = vector.broadcast %63 : vector<8x1xf32> to vector<8x8xf32>
    %65 = arith.mulf %60, %64 : vector<8x8xf32>
    %66 = arith.truncf %65 : vector<8x8xf32> to vector<8x8xbf16>
    %cst_26 = arith.constant dense<0.000000e+00> : vector<8x16xf32>
    %67 = tpu.matmul %66, %41, %cst_26 {dimension_numbers = #tpu.dot_dimension_numbers<[1], [0], [0], [1], [0, 0, 1, 1], [], []>} : vector<8x8xbf16>, vector<8x16xbf16>, vector<8x16xf32> -> vector<8x16xf32>
    %68 = arith.truncf %67 : vector<8x16xf32> to vector<8x16xbf16>
    %69 = vector.extract_strided_slice %27 {offsets = [0, 0], sizes = [16, 64], strides = [1, 1]} : vector<64x64xbf16> to vector<16x64xbf16>
    %cst_27 = arith.constant dense<0.000000e+00> : vector<8x64xf32>
    %70 = tpu.matmul %68, %69, %cst_27 {dimension_numbers = #tpu.dot_dimension_numbers<[1], [0], [0], [1], [0, 0, 1, 1], [], []>} : vector<8x16xbf16>, vector<16x64xbf16>, vector<8x64xf32> -> vector<8x64xf32>
    %71 = arith.addf %28, %70 : vector<8x64xf32>
    %72 = vector.extract_strided_slice %17 {offsets = [0, 16], sizes = [8, 16], strides = [1, 1]} : vector<8x64xf32> to vector<8x16xf32>
    %73 = vector.extract_strided_slice %72 {offsets = [0, 0], sizes = [8, 8], strides = [1, 1]} : vector<8x16xf32> to vector<8x8xf32>
    %74 = vector.extract_strided_slice %72 {offsets = [0, 8], sizes = [8, 8], strides = [1, 1]} : vector<8x16xf32> to vector<8x8xf32>
    %75 = arith.mulf %73, %22 : vector<8x8xf32>
    %76 = arith.mulf %74, %23 : vector<8x8xf32>
    %77 = arith.subf %75, %76 : vector<8x8xf32>
    %78 = arith.mulf %73, %23 : vector<8x8xf32>
    %79 = arith.mulf %74, %22 : vector<8x8xf32>
    %80 = arith.addf %78, %79 : vector<8x8xf32>
    %81 = tpu.concatenate %77, %80 in 1 : vector<8x8xf32>, vector<8x8xf32> -> vector<8x16xf32>
    %82 = arith.truncf %81 : vector<8x16xf32> to vector<8x16xbf16>
    %cst_28 = arith.constant dense<0.000000e+00> : vector<8x8xf32>
    %83 = tpu.matmul %82, %39, %cst_28 {dimension_numbers = #tpu.dot_dimension_numbers<[1], [1], [0], [0], [0, 0, 1, 0], [], []>} : vector<8x16xbf16>, vector<8x16xbf16>, vector<8x8xf32> -> vector<8x8xf32>
    %cst_29 = arith.constant 0xFF800000 : f32
    %84 = vector.broadcast %cst_29 : f32 to vector<8x8xf32>
    %85 = arith.select %26, %83, %84 : vector<8x8xi1>, vector<8x8xf32>
    %cst_30 = arith.constant dense<0xFF800000> : vector<8xf32>
    %86 = vector.multi_reduction <maximumf>, %85, %cst_30 [1] : vector<8x8xf32> to vector<8xf32>
    %87 = vector.shape_cast %86 : vector<8xf32> to vector<8x1xf32>
    %88 = vector.broadcast %87 : vector<8x1xf32> to vector<8x8xf32>
    %89 = arith.subf %85, %88 : vector<8x8xf32>
    %90 = math.exp %89 : vector<8x8xf32>
    %cst_31 = arith.constant dense<0.000000e+00> : vector<8xf32>
    %91 = vector.multi_reduction <add>, %90, %cst_31 [1] : vector<8x8xf32> to vector<8xf32>
    %92 = vector.shape_cast %91 : vector<8xf32> to vector<8x1xf32>
    %93 = tpu.reciprocal %92 {approx = true} : vector<8x1xf32> -> vector<8x1xf32>
    %94 = vector.broadcast %93 : vector<8x1xf32> to vector<8x8xf32>
    %95 = arith.mulf %90, %94 : vector<8x8xf32>
    %96 = arith.truncf %95 : vector<8x8xf32> to vector<8x8xbf16>
    %cst_32 = arith.constant dense<0.000000e+00> : vector<8x16xf32>
    %97 = tpu.matmul %96, %41, %cst_32 {dimension_numbers = #tpu.dot_dimension_numbers<[1], [0], [0], [1], [0, 0, 1, 1], [], []>} : vector<8x8xbf16>, vector<8x16xbf16>, vector<8x16xf32> -> vector<8x16xf32>
    %98 = arith.truncf %97 : vector<8x16xf32> to vector<8x16xbf16>
    %99 = vector.extract_strided_slice %27 {offsets = [16, 0], sizes = [16, 64], strides = [1, 1]} : vector<64x64xbf16> to vector<16x64xbf16>
    %cst_33 = arith.constant dense<0.000000e+00> : vector<8x64xf32>
    %100 = tpu.matmul %98, %99, %cst_33 {dimension_numbers = #tpu.dot_dimension_numbers<[1], [0], [0], [1], [0, 0, 1, 1], [], []>} : vector<8x16xbf16>, vector<16x64xbf16>, vector<8x64xf32> -> vector<8x64xf32>
    %101 = arith.addf %71, %100 : vector<8x64xf32>
    %102 = vector.extract_strided_slice %19 {offsets = [0, 16], sizes = [8, 16], strides = [1, 1]} : vector<8x32xf32> to vector<8x16xf32>
    %103 = vector.extract_strided_slice %102 {offsets = [0, 0], sizes = [8, 8], strides = [1, 1]} : vector<8x16xf32> to vector<8x8xf32>
    %104 = vector.extract_strided_slice %102 {offsets = [0, 8], sizes = [8, 8], strides = [1, 1]} : vector<8x16xf32> to vector<8x8xf32>
    %105 = arith.mulf %103, %22 : vector<8x8xf32>
    %106 = arith.mulf %104, %23 : vector<8x8xf32>
    %107 = arith.subf %105, %106 : vector<8x8xf32>
    %108 = arith.mulf %103, %23 : vector<8x8xf32>
    %109 = arith.mulf %104, %22 : vector<8x8xf32>
    %110 = arith.addf %108, %109 : vector<8x8xf32>
    %111 = tpu.concatenate %107, %110 in 1 : vector<8x8xf32>, vector<8x8xf32> -> vector<8x16xf32>
    %112 = arith.truncf %111 : vector<8x16xf32> to vector<8x16xbf16>
    %113 = vector.extract_strided_slice %21 {offsets = [0, 16], sizes = [8, 16], strides = [1, 1]} : vector<8x32xf32> to vector<8x16xf32>
    %114 = arith.truncf %113 : vector<8x16xf32> to vector<8x16xbf16>
    %115 = vector.extract_strided_slice %17 {offsets = [0, 32], sizes = [8, 16], strides = [1, 1]} : vector<8x64xf32> to vector<8x16xf32>
    %116 = vector.extract_strided_slice %115 {offsets = [0, 0], sizes = [8, 8], strides = [1, 1]} : vector<8x16xf32> to vector<8x8xf32>
    %117 = vector.extract_strided_slice %115 {offsets = [0, 8], sizes = [8, 8], strides = [1, 1]} : vector<8x16xf32> to vector<8x8xf32>
    %118 = arith.mulf %116, %22 : vector<8x8xf32>
    %119 = arith.mulf %117, %23 : vector<8x8xf32>
    %120 = arith.subf %118, %119 : vector<8x8xf32>
    %121 = arith.mulf %116, %23 : vector<8x8xf32>
    %122 = arith.mulf %117, %22 : vector<8x8xf32>
    %123 = arith.addf %121, %122 : vector<8x8xf32>
    %124 = tpu.concatenate %120, %123 in 1 : vector<8x8xf32>, vector<8x8xf32> -> vector<8x16xf32>
    %125 = arith.truncf %124 : vector<8x16xf32> to vector<8x16xbf16>
    %cst_34 = arith.constant dense<0.000000e+00> : vector<8x8xf32>
    %126 = tpu.matmul %125, %112, %cst_34 {dimension_numbers = #tpu.dot_dimension_numbers<[1], [1], [0], [0], [0, 0, 1, 0], [], []>} : vector<8x16xbf16>, vector<8x16xbf16>, vector<8x8xf32> -> vector<8x8xf32>
    %cst_35 = arith.constant 0xFF800000 : f32
    %127 = vector.broadcast %cst_35 : f32 to vector<8x8xf32>
    %128 = arith.select %26, %126, %127 : vector<8x8xi1>, vector<8x8xf32>
    %cst_36 = arith.constant dense<0xFF800000> : vector<8xf32>
    %129 = vector.multi_reduction <maximumf>, %128, %cst_36 [1] : vector<8x8xf32> to vector<8xf32>
    %130 = vector.shape_cast %129 : vector<8xf32> to vector<8x1xf32>
    %131 = vector.broadcast %130 : vector<8x1xf32> to vector<8x8xf32>
    %132 = arith.subf %128, %131 : vector<8x8xf32>
    %133 = math.exp %132 : vector<8x8xf32>
    %cst_37 = arith.constant dense<0.000000e+00> : vector<8xf32>
    %134 = vector.multi_reduction <add>, %133, %cst_37 [1] : vector<8x8xf32> to vector<8xf32>
    %135 = vector.shape_cast %134 : vector<8xf32> to vector<8x1xf32>
    %136 = tpu.reciprocal %135 {approx = true} : vector<8x1xf32> -> vector<8x1xf32>
    %137 = vector.broadcast %136 : vector<8x1xf32> to vector<8x8xf32>
    %138 = arith.mulf %133, %137 : vector<8x8xf32>
    %139 = arith.truncf %138 : vector<8x8xf32> to vector<8x8xbf16>
    %cst_38 = arith.constant dense<0.000000e+00> : vector<8x16xf32>
    %140 = tpu.matmul %139, %114, %cst_38 {dimension_numbers = #tpu.dot_dimension_numbers<[1], [0], [0], [1], [0, 0, 1, 1], [], []>} : vector<8x8xbf16>, vector<8x16xbf16>, vector<8x16xf32> -> vector<8x16xf32>
    %141 = arith.truncf %140 : vector<8x16xf32> to vector<8x16xbf16>
    %142 = vector.extract_strided_slice %27 {offsets = [32, 0], sizes = [16, 64], strides = [1, 1]} : vector<64x64xbf16> to vector<16x64xbf16>
    %cst_39 = arith.constant dense<0.000000e+00> : vector<8x64xf32>
    %143 = tpu.matmul %141, %142, %cst_39 {dimension_numbers = #tpu.dot_dimension_numbers<[1], [0], [0], [1], [0, 0, 1, 1], [], []>} : vector<8x16xbf16>, vector<16x64xbf16>, vector<8x64xf32> -> vector<8x64xf32>
    %144 = arith.addf %101, %143 : vector<8x64xf32>
    %145 = vector.extract_strided_slice %17 {offsets = [0, 48], sizes = [8, 16], strides = [1, 1]} : vector<8x64xf32> to vector<8x16xf32>
    %146 = vector.extract_strided_slice %145 {offsets = [0, 0], sizes = [8, 8], strides = [1, 1]} : vector<8x16xf32> to vector<8x8xf32>
    %147 = vector.extract_strided_slice %145 {offsets = [0, 8], sizes = [8, 8], strides = [1, 1]} : vector<8x16xf32> to vector<8x8xf32>
    %148 = arith.mulf %146, %22 : vector<8x8xf32>
    %149 = arith.mulf %147, %23 : vector<8x8xf32>
    %150 = arith.subf %148, %149 : vector<8x8xf32>
    %151 = arith.mulf %146, %23 : vector<8x8xf32>
    %152 = arith.mulf %147, %22 : vector<8x8xf32>
    %153 = arith.addf %151, %152 : vector<8x8xf32>
    %154 = tpu.concatenate %150, %153 in 1 : vector<8x8xf32>, vector<8x8xf32> -> vector<8x16xf32>
    %155 = arith.truncf %154 : vector<8x16xf32> to vector<8x16xbf16>
    %cst_40 = arith.constant dense<0.000000e+00> : vector<8x8xf32>
    %156 = tpu.matmul %155, %112, %cst_40 {dimension_numbers = #tpu.dot_dimension_numbers<[1], [1], [0], [0], [0, 0, 1, 0], [], []>} : vector<8x16xbf16>, vector<8x16xbf16>, vector<8x8xf32> -> vector<8x8xf32>
    %cst_41 = arith.constant 0xFF800000 : f32
    %157 = vector.broadcast %cst_41 : f32 to vector<8x8xf32>
    %158 = arith.select %26, %156, %157 : vector<8x8xi1>, vector<8x8xf32>
    %cst_42 = arith.constant dense<0xFF800000> : vector<8xf32>
    %159 = vector.multi_reduction <maximumf>, %158, %cst_42 [1] : vector<8x8xf32> to vector<8xf32>
    %160 = vector.shape_cast %159 : vector<8xf32> to vector<8x1xf32>
    %161 = vector.broadcast %160 : vector<8x1xf32> to vector<8x8xf32>
    %162 = arith.subf %158, %161 : vector<8x8xf32>
    %163 = math.exp %162 : vector<8x8xf32>
    %cst_43 = arith.constant dense<0.000000e+00> : vector<8xf32>
    %164 = vector.multi_reduction <add>, %163, %cst_43 [1] : vector<8x8xf32> to vector<8xf32>
    %165 = vector.shape_cast %164 : vector<8xf32> to vector<8x1xf32>
    %166 = tpu.reciprocal %165 {approx = true} : vector<8x1xf32> -> vector<8x1xf32>
    %167 = vector.broadcast %166 : vector<8x1xf32> to vector<8x8xf32>
    %168 = arith.mulf %163, %167 : vector<8x8xf32>
    %169 = arith.truncf %168 : vector<8x8xf32> to vector<8x8xbf16>
    %cst_44 = arith.constant dense<0.000000e+00> : vector<8x16xf32>
    %170 = tpu.matmul %169, %114, %cst_44 {dimension_numbers = #tpu.dot_dimension_numbers<[1], [0], [0], [1], [0, 0, 1, 1], [], []>} : vector<8x8xbf16>, vector<8x16xbf16>, vector<8x16xf32> -> vector<8x16xf32>
    %171 = arith.truncf %170 : vector<8x16xf32> to vector<8x16xbf16>
    %172 = vector.extract_strided_slice %27 {offsets = [48, 0], sizes = [16, 64], strides = [1, 1]} : vector<64x64xbf16> to vector<16x64xbf16>
    %cst_45 = arith.constant dense<0.000000e+00> : vector<8x64xf32>
    %173 = tpu.matmul %171, %172, %cst_45 {dimension_numbers = #tpu.dot_dimension_numbers<[1], [0], [0], [1], [0, 0, 1, 1], [], []>} : vector<8x16xbf16>, vector<16x64xbf16>, vector<8x64xf32> -> vector<8x64xf32>
    %174 = arith.addf %144, %173 : vector<8x64xf32>
    %175 = arith.addf %1, %174 : vector<8x64xf32>
    %176 = arith.mulf %175, %175 : vector<8x64xf32>
    %cst_46 = arith.constant dense<0.000000e+00> : vector<8xf32>
    %177 = vector.multi_reduction <add>, %176, %cst_46 [1] : vector<8x64xf32> to vector<8xf32>
    %178 = vector.shape_cast %177 : vector<8xf32> to vector<8x1xf32>
    %cst_47 = arith.constant 6.400000e+01 : f32
    %179 = vector.broadcast %cst_47 : f32 to vector<8x1xf32>
    %180 = arith.divf %178, %179 : vector<8x1xf32>
    %cst_48 = arith.constant 9.99999974E-6 : f32
    %181 = vector.broadcast %cst_48 : f32 to vector<8x1xf32>
    %182 = arith.addf %180, %181 : vector<8x1xf32>
    %183 = math.rsqrt %182 : vector<8x1xf32>
    %184 = vector.broadcast %183 : vector<8x1xf32> to vector<8x64xf32>
    %185 = arith.mulf %175, %184 : vector<8x64xf32>
    %c0_49 = arith.constant 0 : index
    %c0_50 = arith.constant 0 : index
    %186 = vector.load %arg9[%c0_49, %c0_50] : memref<1x64xf32, #tpu.memory_space<vmem>>, vector<1x64xf32>
    %187 = vector.broadcast %186 : vector<1x64xf32> to vector<8x64xf32>
    %188 = arith.mulf %185, %187 : vector<8x64xf32>
    %189 = arith.truncf %188 : vector<8x64xf32> to vector<8x64xbf16>
    %c0_51 = arith.constant 0 : index
    %c0_52 = arith.constant 0 : index
    %190 = vector.load %arg10[%c0_51, %c0_52] : memref<64x192xbf16, #tpu.memory_space<vmem>>, vector<64x192xbf16>
    %cst_53 = arith.constant dense<0.000000e+00> : vector<8x192xf32>
    %191 = tpu.matmul %189, %190, %cst_53 {dimension_numbers = #tpu.dot_dimension_numbers<[1], [0], [0], [1], [0, 0, 1, 1], [], []>} : vector<8x64xbf16>, vector<64x192xbf16>, vector<8x192xf32> -> vector<8x192xf32>
    %c0_54 = arith.constant 0 : index
    %c0_55 = arith.constant 0 : index
    %192 = vector.load %arg12[%c0_54, %c0_55] : memref<64x192xbf16, #tpu.memory_space<vmem>>, vector<64x192xbf16>
    %cst_56 = arith.constant dense<0.000000e+00> : vector<8x192xf32>
    %193 = tpu.matmul %189, %192, %cst_56 {dimension_numbers = #tpu.dot_dimension_numbers<[1], [0], [0], [1], [0, 0, 1, 1], [], []>} : vector<8x64xbf16>, vector<64x192xbf16>, vector<8x192xf32> -> vector<8x192xf32>
    %194 = arith.negf %191 : vector<8x192xf32>
    %195 = math.exp %194 : vector<8x192xf32>
    %cst_57 = arith.constant 1.000000e+00 : f32
    %196 = vector.broadcast %cst_57 : f32 to vector<8x192xf32>
    %197 = arith.addf %196, %195 : vector<8x192xf32>
    %198 = arith.divf %196, %197 : vector<8x192xf32>
    %199 = arith.mulf %191, %198 : vector<8x192xf32>
    %200 = arith.mulf %199, %193 : vector<8x192xf32>
    %201 = arith.truncf %200 : vector<8x192xf32> to vector<8x192xbf16>
    %c0_58 = arith.constant 0 : index
    %c0_59 = arith.constant 0 : index
    %202 = vector.load %arg11[%c0_58, %c0_59] : memref<192x64xbf16, #tpu.memory_space<vmem>>, vector<192x64xbf16>
    %cst_60 = arith.constant dense<0.000000e+00> : vector<8x64xf32>
    %203 = tpu.matmul %201, %202, %cst_60 {dimension_numbers = #tpu.dot_dimension_numbers<[1], [0], [0], [1], [0, 0, 1, 1], [], []>} : vector<8x192xbf16>, vector<192x64xbf16>, vector<8x64xf32> -> vector<8x64xf32>
    %204 = arith.addf %175, %203 : vector<8x64xf32>
    %c0_61 = arith.constant 0 : index
    %c0_62 = arith.constant 0 : index
    %c0_63 = arith.constant 0 : index
    %205 = vector.load %arg13[%c0_61, %c0_62, %c0_63] : memref<1x8x64xf32, #tpu.memory_space<vmem>>, vector<1x8x64xf32>
    %206 = vector.shape_cast %205 : vector<1x8x64xf32> to vector<8x64xf32>
    %207 = vector.shape_cast %204 : vector<8x64xf32> to vector<1x8x64xf32>
    tpu.vector_store %arg13[%c0_61, %c0_62, %c0_63], %207 {strides = array<i32>} : memref<1x8x64xf32, #tpu.memory_space<vmem>>, vector<1x8x64xf32>,
    return
  }
  func.func @transform_0(%arg0: i32) -> (i32, i32, i32) {
    %c0_i32 = arith.constant 0 : i32
    %c0_i32_0 = arith.constant 0 : i32
    %c0_i32_1 = arith.constant 0 : i32
    return %arg0, %c0_i32, %c0_i32_0 : i32, i32, i32
  }
  func.func @transform_1(%arg0: i32) -> (i32, i32) {
    %c0_i32 = arith.constant 0 : i32
    %c0_i32_0 = arith.constant 0 : i32
    %c0_i32_1 = arith.constant 0 : i32
    return %c0_i32, %c0_i32_0 : i32, i32
  }
  func.func @transform_2(%arg0: i32) -> (i32, i32) {
    %c0_i32 = arith.constant 0 : i32
    %c0_i32_0 = arith.constant 0 : i32
    %c0_i32_1 = arith.constant 0 : i32
    return %c0_i32, %c0_i32_0 : i32, i32
  }
  func.func @transform_3(%arg0: i32) -> (i32, i32) {
    %c0_i32 = arith.constant 0 : i32
    %c0_i32_0 = arith.constant 0 : i32
    %c0_i32_1 = arith.constant 0 : i32
    return %c0_i32, %c0_i32_0 : i32, i32
  }
  func.func @transform_4(%arg0: i32) -> (i32, i32) {
    %c0_i32 = arith.constant 0 : i32
    %c0_i32_0 = arith.constant 0 : i32
    %c0_i32_1 = arith.constant 0 : i32
    return %c0_i32, %c0_i32_0 : i32, i32
  }
  func.func @transform_5(%arg0: i32) -> (i32, i32) {
    %c0_i32 = arith.constant 0 : i32
    %c0_i32_0 = arith.constant 0 : i32
    %c0_i32_1 = arith.constant 0 : i32
    return %c0_i32, %c0_i32_0 : i32, i32
  }
  func.func @transform_6(%arg0: i32) -> (i32, i32) {
    %c0_i32 = arith.constant 0 : i32
    %c0_i32_0 = arith.constant 0 : i32
    %c0_i32_1 = arith.constant 0 : i32
    return %c0_i32, %c0_i32_0 : i32, i32
  }
  func.func @transform_7(%arg0: i32) -> (i32, i32) {
    %c0_i32 = arith.constant 0 : i32
    %c0_i32_0 = arith.constant 0 : i32
    %c0_i32_1 = arith.constant 0 : i32
    return %c0_i32, %c0_i32_0 : i32, i32
  }
  func.func @transform_8(%arg0: i32) -> (i32, i32) {
    %c0_i32 = arith.constant 0 : i32
    %c0_i32_0 = arith.constant 0 : i32
    %c0_i32_1 = arith.constant 0 : i32
    return %c0_i32, %c0_i32_0 : i32, i32
  }
  func.func @transform_9(%arg0: i32) -> (i32, i32) {
    %c0_i32 = arith.constant 0 : i32
    %c0_i32_0 = arith.constant 0 : i32
    %c0_i32_1 = arith.constant 0 : i32
    return %c0_i32, %c0_i32_0 : i32, i32
  }
  func.func @transform_10(%arg0: i32) -> (i32, i32) {
    %c0_i32 = arith.constant 0 : i32
    %c0_i32_0 = arith.constant 0 : i32
    %c0_i32_1 = arith.constant 0 : i32
    return %c0_i32, %c0_i32_0 : i32, i32
  }
  func.func @transform_11(%arg0: i32) -> (i32, i32) {
    %c0_i32 = arith.constant 0 : i32
    %c0_i32_0 = arith.constant 0 : i32
    %c0_i32_1 = arith.constant 0 : i32
    return %c0_i32, %c0_i32_0 : i32, i32
  }
  func.func @transform_12(%arg0: i32) -> (i32, i32, i32) {
    %c0_i32 = arith.constant 0 : i32
    %c0_i32_0 = arith.constant 0 : i32
    %c0_i32_1 = arith.constant 0 : i32
    return %arg0, %c0_i32, %c0_i32_0 : i32, i32, i32
  }
}

module attributes {stable_mosaic.version = 11 : i64} {
  func.func @_transformer_block_kernel(%arg0: i32, %arg1: memref<1x8x64xf32, #tpu.memory_space<vmem>>, %arg2: memref<8x8xf32, #tpu.memory_space<vmem>>, %arg3: memref<8x8xf32, #tpu.memory_space<vmem>>, %arg4: memref<1x64xf32, #tpu.memory_space<vmem>>, %arg5: memref<64x64xbf16, #tpu.memory_space<vmem>>, %arg6: memref<64x32xbf16, #tpu.memory_space<vmem>>, %arg7: memref<64x32xbf16, #tpu.memory_space<vmem>>, %arg8: memref<64x64xbf16, #tpu.memory_space<vmem>>, %arg9: memref<1x64xf32, #tpu.memory_space<vmem>>, %arg10: memref<64x192xbf16, #tpu.memory_space<vmem>>, %arg11: memref<192x64xbf16, #tpu.memory_space<vmem>>, %arg12: memref<64x192xbf16, #tpu.memory_space<vmem>>, %arg13: memref<1x8x64xf32, #tpu.memory_space<vmem>>) attributes {dimension_semantics = [#tpu.dimension_semantics<parallel>], iteration_bounds = array<i64: 2>, scalar_prefetch = 0 : i64, scratch_operands = 0 : i64, tpu.core_type = #tpu.core_type<tc>, window_params = [{transform_indices = @transform_0, window_bounds = array<i64: 1, 8, 64>}, {pipeline_mode = #tpu.pipeline_mode<synchronous>, transform_indices = @transform_1, window_bounds = array<i64: 8, 8>}, {pipeline_mode = #tpu.pipeline_mode<synchronous>, transform_indices = @transform_2, window_bounds = array<i64: 8, 8>}, {pipeline_mode = #tpu.pipeline_mode<synchronous>, transform_indices = @transform_3, window_bounds = array<i64: 1, 64>}, {pipeline_mode = #tpu.pipeline_mode<synchronous>, transform_indices = @transform_4, window_bounds = array<i64: 64, 64>}, {pipeline_mode = #tpu.pipeline_mode<synchronous>, transform_indices = @transform_5, window_bounds = array<i64: 64, 32>}, {pipeline_mode = #tpu.pipeline_mode<synchronous>, transform_indices = @transform_6, window_bounds = array<i64: 64, 32>}, {pipeline_mode = #tpu.pipeline_mode<synchronous>, transform_indices = @transform_7, window_bounds = array<i64: 64, 64>}, {pipeline_mode = #tpu.pipeline_mode<synchronous>, transform_indices = @transform_8, window_bounds = array<i64: 1, 64>}, {pipeline_mode = #tpu.pipeline_mode<synchronous>, transform_indices = @transform_9, window_bounds = array<i64: 64, 192>}, {pipeline_mode = #tpu.pipeline_mode<synchronous>, transform_indices = @transform_10, window_bounds = array<i64: 192, 64>}, {pipeline_mode = #tpu.pipeline_mode<synchronous>, transform_indices = @transform_11, window_bounds = array<i64: 64, 192>}, {transform_indices = @transform_12, window_bounds = array<i64: 1, 8, 64>}]} {
    %c0 = arith.constant 0 : index
    %c0_0 = arith.constant 0 : index
    %c0_1 = arith.constant 0 : index
    %0 = vector.load %arg1[%c0, %c0_0, %c0_1] : memref<1x8x64xf32, #tpu.memory_space<vmem>>, vector<1x8x64xf32>
    %1 = vector.shape_cast %0 : vector<1x8x64xf32> to vector<8x64xf32>
    %2 = arith.mulf %1, %1 : vector<8x64xf32>
    %cst = arith.constant dense<0.000000e+00> : vector<8xf32>
    %3 = vector.multi_reduction <add>, %2, %cst [1] : vector<8x64xf32> to vector<8xf32>
    %4 = vector.shape_cast %3 : vector<8xf32> to vector<8x1xf32>
    %cst_2 = arith.constant 6.400000e+01 : f32
    %5 = vector.broadcast %cst_2 : f32 to vector<8x1xf32>
    %6 = arith.divf %4, %5 : vector<8x1xf32>
    %cst_3 = arith.constant 9.99999974E-6 : f32
    %7 = vector.broadcast %cst_3 : f32 to vector<8x1xf32>
    %8 = arith.addf %6, %7 : vector<8x1xf32>
    %9 = math.rsqrt %8 : vector<8x1xf32>
    %10 = vector.broadcast %9 : vector<8x1xf32> to vector<8x64xf32>
    %11 = arith.mulf %1, %10 : vector<8x64xf32>
    %c0_4 = arith.constant 0 : index
    %c0_5 = arith.constant 0 : index
    %12 = vector.load %arg4[%c0_4, %c0_5] : memref<1x64xf32, #tpu.memory_space<vmem>>, vector<1x64xf32>
    %13 = vector.broadcast %12 : vector<1x64xf32> to vector<8x64xf32>
    %14 = arith.mulf %11, %13 : vector<8x64xf32>
    %15 = arith.truncf %14 : vector<8x64xf32> to vector<8x64xbf16>
    %c0_6 = arith.constant 0 : index
    %c0_7 = arith.constant 0 : index
    %16 = vector.load %arg5[%c0_6, %c0_7] : memref<64x64xbf16, #tpu.memory_space<vmem>>, vector<64x64xbf16>
    %cst_8 = arith.constant dense<0.000000e+00> : vector<8x64xf32>
    %17 = tpu.matmul %15, %16, %cst_8 {dimension_numbers = #tpu.dot_dimension_numbers<[1], [0], [0], [1], [0, 0, 1, 1], [], []>} : vector<8x64xbf16>, vector<64x64xbf16>, vector<8x64xf32> -> vector<8x64xf32>
    %c0_9 = arith.constant 0 : index
    %c0_10 = arith.constant 0 : index
    %18 = vector.load %arg6[%c0_9, %c0_10] : memref<64x32xbf16, #tpu.memory_space<vmem>>, vector<64x32xbf16>
    %cst_11 = arith.constant dense<0.000000e+00> : vector<8x32xf32>
    %19 = tpu.matmul %15, %18, %cst_11 {dimension_numbers = #tpu.dot_dimension_numbers<[1], [0], [0], [1], [0, 0, 1, 1], [], []>} : vector<8x64xbf16>, vector<64x32xbf16>, vector<8x32xf32> -> vector<8x32xf32>
    %c0_12 = arith.constant 0 : index
    %c0_13 = arith.constant 0 : index
    %20 = vector.load %arg7[%c0_12, %c0_13] : memref<64x32xbf16, #tpu.memory_space<vmem>>, vector<64x32xbf16>
    %cst_14 = arith.constant dense<0.000000e+00> : vector<8x32xf32>
    %21 = tpu.matmul %15, %20, %cst_14 {dimension_numbers = #tpu.dot_dimension_numbers<[1], [0], [0], [1], [0, 0, 1, 1], [], []>} : vector<8x64xbf16>, vector<64x32xbf16>, vector<8x32xf32> -> vector<8x32xf32>
    %c0_15 = arith.constant 0 : index
    %c0_16 = arith.constant 0 : index
    %22 = vector.load %arg2[%c0_15, %c0_16] : memref<8x8xf32, #tpu.memory_space<vmem>>, vector<8x8xf32>
    %c0_17 = arith.constant 0 : index
    %c0_18 = arith.constant 0 : index
    %23 = vector.load %arg3[%c0_17, %c0_18] : memref<8x8xf32, #tpu.memory_space<vmem>>, vector<8x8xf32>
    %24 = tpu.iota {dimensions = array<i32: 0>} : vector<8x8xi32>
    %25 = tpu.iota {dimensions = array<i32: 1>} : vector<8x8xi32>
    %26 = arith.cmpi sge, %24, %25 : vector<8x8xi32>
    %c0_19 = arith.constant 0 : index
    %c0_20 = arith.constant 0 : index
    %27 = vector.load %arg8[%c0_19, %c0_20] : memref<64x64xbf16, #tpu.memory_space<vmem>>, vector<64x64xbf16>
    %cst_21 = arith.constant 0.000000e+00 : f32
    %28 = vector.broadcast %cst_21 : f32 to vector<8x64xf32>
    %29 = vector.extract_strided_slice %19 {offsets = [0, 0], sizes = [8, 16], strides = [1, 1]} : vector<8x32xf32> to vector<8x16xf32>
    %30 = vector.extract_strided_slice %29 {offsets = [0, 0], sizes = [8, 8], strides = [1, 1]} : vector<8x16xf32> to vector<8x8xf32>
    %31 = vector.extract_strided_slice %29 {offsets = [0, 8], sizes = [8, 8], strides = [1, 1]} : vector<8x16xf32> to vector<8x8xf32>
    %32 = arith.mulf %30, %22 : vector<8x8xf32>
    %33 = arith.mulf %31, %23 : vector<8x8xf32>
    %34 = arith.subf %32, %33 : vector<8x8xf32>
    %35 = arith.mulf %30, %23 : vector<8x8xf32>
    %36 = arith.mulf %31, %22 : vector<8x8xf32>
    %37 = arith.addf %35, %36 : vector<8x8xf32>
    %38 = tpu.concatenate %34, %37 in 1 : vector<8x8xf32>, vector<8x8xf32> -> vector<8x16xf32>
    %39 = arith.truncf %38 : vector<8x16xf32> to vector<8x16xbf16>
    %40 = vector.extract_strided_slice %21 {offsets = [0, 0], sizes = [8, 16], strides = [1, 1]} : vector<8x32xf32> to vector<8x16xf32>
    %41 = arith.truncf %40 : vector<8x16xf32> to vector<8x16xbf16>
    %42 = vector.extract_strided_slice %17 {offsets = [0, 0], sizes = [8, 16], strides = [1, 1]} : vector<8x64xf32> to vector<8x16xf32>
    %43 = vector.extract_strided_slice %42 {offsets = [0, 0], sizes = [8, 8], strides = [1, 1]} : vector<8x16xf32> to vector<8x8xf32>
    %44 = vector.extract_strided_slice %42 {offsets = [0, 8], sizes = [8, 8], strides = [1, 1]} : vector<8x16xf32> to vector<8x8xf32>
    %45 = arith.mulf %43, %22 : vector<8x8xf32>
    %46 = arith.mulf %44, %23 : vector<8x8xf32>
    %47 = arith.subf %45, %46 : vector<8x8xf32>
    %48 = arith.mulf %43, %23 : vector<8x8xf32>
    %49 = arith.mulf %44, %22 : vector<8x8xf32>
    %50 = arith.addf %48, %49 : vector<8x8xf32>
    %51 = tpu.concatenate %47, %50 in 1 : vector<8x8xf32>, vector<8x8xf32> -> vector<8x16xf32>
    %52 = arith.truncf %51 : vector<8x16xf32> to vector<8x16xbf16>
    %cst_22 = arith.constant dense<0.000000e+00> : vector<8x8xf32>
    %53 = tpu.matmul %52, %39, %cst_22 {dimension_numbers = #tpu.dot_dimension_numbers<[1], [1], [0], [0], [0, 0, 1, 0], [], []>} : vector<8x16xbf16>, vector<8x16xbf16>, vector<8x8xf32> -> vector<8x8xf32>
    %cst_23 = arith.constant 0xFF800000 : f32
    %54 = vector.broadcast %cst_23 : f32 to vector<8x8xf32>
    %55 = arith.select %26, %53, %54 : vector<8x8xi1>, vector<8x8xf32>
    %cst_24 = arith.constant dense<0xFF800000> : vector<8xf32>
    %56 = vector.multi_reduction <maximumf>, %55, %cst_24 [1] : vector<8x8xf32> to vector<8xf32>
    %57 = vector.shape_cast %56 : vector<8xf32> to vector<8x1xf32>
    %58 = vector.broadcast %57 : vector<8x1xf32> to vector<8x8xf32>
    %59 = arith.subf %55, %58 : vector<8x8xf32>
    %60 = math.exp %59 : vector<8x8xf32>
    %cst_25 = arith.constant dense<0.000000e+00> : vector<8xf32>
    %61 = vector.multi_reduction <add>, %60, %cst_25 [1] : vector<8x8xf32> to vector<8xf32>
    %62 = vector.shape_cast %61 : vector<8xf32> to vector<8x1xf32>
    %63 = tpu.reciprocal %62 {approx = true} : vector<8x1xf32> -> vector<8x1xf32>
    %64 = vector.broadcast %63 : vector<8x1xf32> to vector<8x8xf32>
    %65 = arith.mulf %60, %64 : vector<8x8xf32>
    %66 = arith.truncf %65 : vector<8x8xf32> to vector<8x8xbf16>
    %cst_26 = arith.constant dense<0.000000e+00> : vector<8x16xf32>
    %67 = tpu.matmul %66, %41, %cst_26 {dimension_numbers = #tpu.dot_dimension_numbers<[1], [0], [0], [1], [0, 0, 1, 1], [], []>} : vector<8x8xbf16>, vector<8x16xbf16>, vector<8x16xf32> -> vector<8x16xf32>
    %68 = arith.truncf %67 : vector<8x16xf32> to vector<8x16xbf16>
    %69 = vector.extract_strided_slice %27 {offsets = [0, 0], sizes = [16, 64], strides = [1, 1]} : vector<64x64xbf16> to vector<16x64xbf16>
    %cst_27 = arith.constant dense<0.000000e+00> : vector<8x64xf32>
    %70 = tpu.matmul %68, %69, %cst_27 {dimension_numbers = #tpu.dot_dimension_numbers<[1], [0], [0], [1], [0, 0, 1, 1], [], []>} : vector<8x16xbf16>, vector<16x64xbf16>, vector<8x64xf32> -> vector<8x64xf32>
    %71 = arith.addf %28, %70 : vector<8x64xf32>
    %72 = vector.extract_strided_slice %17 {offsets = [0, 16], sizes = [8, 16], strides = [1, 1]} : vector<8x64xf32> to vector<8x16xf32>
    %73 = vector.extract_strided_slice %72 {offsets = [0, 0], sizes = [8, 8], strides = [1, 1]} : vector<8x16xf32> to vector<8x8xf32>
    %74 = vector.extract_strided_slice %72 {offsets = [0, 8], sizes = [8, 8], strides = [1, 1]} : vector<8x16xf32> to vector<8x8xf32>
    %75 = arith.mulf %73, %22 : vector<8x8xf32>
    %76 = arith.mulf %74, %23 : vector<8x8xf32>
    %77 = arith.subf %75, %76 : vector<8x8xf32>
    %78 = arith.mulf %73, %23 : vector<8x8xf32>
    %79 = arith.mulf %74, %22 : vector<8x8xf32>
    %80 = arith.addf %78, %79 : vector<8x8xf32>
    %81 = tpu.concatenate %77, %80 in 1 : vector<8x8xf32>, vector<8x8xf32> -> vector<8x16xf32>
    %82 = arith.truncf %81 : vector<8x16xf32> to vector<8x16xbf16>
    %cst_28 = arith.constant dense<0.000000e+00> : vector<8x8xf32>
    %83 = tpu.matmul %82, %39, %cst_28 {dimension_numbers = #tpu.dot_dimension_numbers<[1], [1], [0], [0], [0, 0, 1, 0], [], []>} : vector<8x16xbf16>, vector<8x16xbf16>, vector<8x8xf32> -> vector<8x8xf32>
    %cst_29 = arith.constant 0xFF800000 : f32
    %84 = vector.broadcast %cst_29 : f32 to vector<8x8xf32>
    %85 = arith.select %26, %83, %84 : vector<8x8xi1>, vector<8x8xf32>
    %cst_30 = arith.constant dense<0xFF800000> : vector<8xf32>
    %86 = vector.multi_reduction <maximumf>, %85, %cst_30 [1] : vector<8x8xf32> to vector<8xf32>
    %87 = vector.shape_cast %86 : vector<8xf32> to vector<8x1xf32>
    %88 = vector.broadcast %87 : vector<8x1xf32> to vector<8x8xf32>
    %89 = arith.subf %85, %88 : vector<8x8xf32>
    %90 = math.exp %89 : vector<8x8xf32>
    %cst_31 = arith.constant dense<0.000000e+00> : vector<8xf32>
    %91 = vector.multi_reduction <add>, %90, %cst_31 [1] : vector<8x8xf32> to vector<8xf32>
    %92 = vector.shape_cast %91 : vector<8xf32> to vector<8x1xf32>
    %93 = tpu.reciprocal %92 {approx = true} : vector<8x1xf32> -> vector<8x1xf32>
    %94 = vector.broadcast %93 : vector<8x1xf32> to vector<8x8xf32>
    %95 = arith.mulf %90, %94 : vector<8x8xf32>
    %96 = arith.truncf %95 : vector<8x8xf32> to vector<8x8xbf16>
    %cst_32 = arith.constant dense<0.000000e+00> : vector<8x16xf32>
    %97 = tpu.matmul %96, %41, %cst_32 {dimension_numbers = #tpu.dot_dimension_numbers<[1], [0], [0], [1], [0, 0, 1, 1], [], []>} : vector<8x8xbf16>, vector<8x16xbf16>, vector<8x16xf32> -> vector<8x16xf32>
    %98 = arith.truncf %97 : vector<8x16xf32> to vector<8x16xbf16>
    %99 = vector.extract_strided_slice %27 {offsets = [16, 0], sizes = [16, 64], strides = [1, 1]} : vector<64x64xbf16> to vector<16x64xbf16>
    %cst_33 = arith.constant dense<0.000000e+00> : vector<8x64xf32>
    %100 = tpu.matmul %98, %99, %cst_33 {dimension_numbers = #tpu.dot_dimension_numbers<[1], [0], [0], [1], [0, 0, 1, 1], [], []>} : vector<8x16xbf16>, vector<16x64xbf16>, vector<8x64xf32> -> vector<8x64xf32>
    %101 = arith.addf %71, %100 : vector<8x64xf32>
    %102 = vector.extract_strided_slice %19 {offsets = [0, 16], sizes = [8, 16], strides = [1, 1]} : vector<8x32xf32> to vector<8x16xf32>
    %103 = vector.extract_strided_slice %102 {offsets = [0, 0], sizes = [8, 8], strides = [1, 1]} : vector<8x16xf32> to vector<8x8xf32>
    %104 = vector.extract_strided_slice %102 {offsets = [0, 8], sizes = [8, 8], strides = [1, 1]} : vector<8x16xf32> to vector<8x8xf32>
    %105 = arith.mulf %103, %22 : vector<8x8xf32>
    %106 = arith.mulf %104, %23 : vector<8x8xf32>
    %107 = arith.subf %105, %106 : vector<8x8xf32>
    %108 = arith.mulf %103, %23 : vector<8x8xf32>
    %109 = arith.mulf %104, %22 : vector<8x8xf32>
    %110 = arith.addf %108, %109 : vector<8x8xf32>
    %111 = tpu.concatenate %107, %110 in 1 : vector<8x8xf32>, vector<8x8xf32> -> vector<8x16xf32>
    %112 = arith.truncf %111 : vector<8x16xf32> to vector<8x16xbf16>
    %113 = vector.extract_strided_slice %21 {offsets = [0, 16], sizes = [8, 16], strides = [1, 1]} : vector<8x32xf32> to vector<8x16xf32>
    %114 = arith.truncf %113 : vector<8x16xf32> to vector<8x16xbf16>
    %115 = vector.extract_strided_slice %17 {offsets = [0, 32], sizes = [8, 16], strides = [1, 1]} : vector<8x64xf32> to vector<8x16xf32>
    %116 = vector.extract_strided_slice %115 {offsets = [0, 0], sizes = [8, 8], strides = [1, 1]} : vector<8x16xf32> to vector<8x8xf32>
    %117 = vector.extract_strided_slice %115 {offsets = [0, 8], sizes = [8, 8], strides = [1, 1]} : vector<8x16xf32> to vector<8x8xf32>
    %118 = arith.mulf %116, %22 : vector<8x8xf32>
    %119 = arith.mulf %117, %23 : vector<8x8xf32>
    %120 = arith.subf %118, %119 : vector<8x8xf32>
    %121 = arith.mulf %116, %23 : vector<8x8xf32>
    %122 = arith.mulf %117, %22 : vector<8x8xf32>
    %123 = arith.addf %121, %122 : vector<8x8xf32>
    %124 = tpu.concatenate %120, %123 in 1 : vector<8x8xf32>, vector<8x8xf32> -> vector<8x16xf32>
    %125 = arith.truncf %124 : vector<8x16xf32> to vector<8x16xbf16>
    %cst_34 = arith.constant dense<0.000000e+00> : vector<8x8xf32>
    %126 = tpu.matmul %125, %112, %cst_34 {dimension_numbers = #tpu.dot_dimension_numbers<[1], [1], [0], [0], [0, 0, 1, 0], [], []>} : vector<8x16xbf16>, vector<8x16xbf16>, vector<8x8xf32> -> vector<8x8xf32>
    %cst_35 = arith.constant 0xFF800000 : f32
    %127 = vector.broadcast %cst_35 : f32 to vector<8x8xf32>
    %128 = arith.select %26, %126, %127 : vector<8x8xi1>, vector<8x8xf32>
    %cst_36 = arith.constant dense<0xFF800000> : vector<8xf32>
    %129 = vector.multi_reduction <maximumf>, %128, %cst_36 [1] : vector<8x8xf32> to vector<8xf32>
    %130 = vector.shape_cast %129 : vector<8xf32> to vector<8x1xf32>
    %131 = vector.broadcast %130 : vector<8x1xf32> to vector<8x8xf32>
    %132 = arith.subf %128, %131 : vector<8x8xf32>
    %133 = math.exp %132 : vector<8x8xf32>
    %cst_37 = arith.constant dense<0.000000e+00> : vector<8xf32>
    %134 = vector.multi_reduction <add>, %133, %cst_37 [1] : vector<8x8xf32> to vector<8xf32>
    %135 = vector.shape_cast %134 : vector<8xf32> to vector<8x1xf32>
    %136 = tpu.reciprocal %135 {approx = true} : vector<8x1xf32> -> vector<8x1xf32>
    %137 = vector.broadcast %136 : vector<8x1xf32> to vector<8x8xf32>
    %138 = arith.mulf %133, %137 : vector<8x8xf32>
    %139 = arith.truncf %138 : vector<8x8xf32> to vector<8x8xbf16>
    %cst_38 = arith.constant dense<0.000000e+00> : vector<8x16xf32>
    %140 = tpu.matmul %139, %114, %cst_38 {dimension_numbers = #tpu.dot_dimension_numbers<[1], [0], [0], [1], [0, 0, 1, 1], [], []>} : vector<8x8xbf16>, vector<8x16xbf16>, vector<8x16xf32> -> vector<8x16xf32>
    %141 = arith.truncf %140 : vector<8x16xf32> to vector<8x16xbf16>
    %142 = vector.extract_strided_slice %27 {offsets = [32, 0], sizes = [16, 64], strides = [1, 1]} : vector<64x64xbf16> to vector<16x64xbf16>
    %cst_39 = arith.constant dense<0.000000e+00> : vector<8x64xf32>
    %143 = tpu.matmul %141, %142, %cst_39 {dimension_numbers = #tpu.dot_dimension_numbers<[1], [0], [0], [1], [0, 0, 1, 1], [], []>} : vector<8x16xbf16>, vector<16x64xbf16>, vector<8x64xf32> -> vector<8x64xf32>
    %144 = arith.addf %101, %143 : vector<8x64xf32>
    %145 = vector.extract_strided_slice %17 {offsets = [0, 48], sizes = [8, 16], strides = [1, 1]} : vector<8x64xf32> to vector<8x16xf32>
    %146 = vector.extract_strided_slice %145 {offsets = [0, 0], sizes = [8, 8], strides = [1, 1]} : vector<8x16xf32> to vector<8x8xf32>
    %147 = vector.extract_strided_slice %145 {offsets = [0, 8], sizes = [8, 8], strides = [1, 1]} : vector<8x16xf32> to vector<8x8xf32>
    %148 = arith.mulf %146, %22 : vector<8x8xf32>
    %149 = arith.mulf %147, %23 : vector<8x8xf32>
    %150 = arith.subf %148, %149 : vector<8x8xf32>
    %151 = arith.mulf %146, %23 : vector<8x8xf32>
    %152 = arith.mulf %147, %22 : vector<8x8xf32>
    %153 = arith.addf %151, %152 : vector<8x8xf32>
    %154 = tpu.concatenate %150, %153 in 1 : vector<8x8xf32>, vector<8x8xf32> -> vector<8x16xf32>
    %155 = arith.truncf %154 : vector<8x16xf32> to vector<8x16xbf16>
    %cst_40 = arith.constant dense<0.000000e+00> : vector<8x8xf32>
    %156 = tpu.matmul %155, %112, %cst_40 {dimension_numbers = #tpu.dot_dimension_numbers<[1], [1], [0], [0], [0, 0, 1, 0], [], []>} : vector<8x16xbf16>, vector<8x16xbf16>, vector<8x8xf32> -> vector<8x8xf32>
    %cst_41 = arith.constant 0xFF800000 : f32
    %157 = vector.broadcast %cst_41 : f32 to vector<8x8xf32>
    %158 = arith.select %26, %156, %157 : vector<8x8xi1>, vector<8x8xf32>
    %cst_42 = arith.constant dense<0xFF800000> : vector<8xf32>
    %159 = vector.multi_reduction <maximumf>, %158, %cst_42 [1] : vector<8x8xf32> to vector<8xf32>
    %160 = vector.shape_cast %159 : vector<8xf32> to vector<8x1xf32>
    %161 = vector.broadcast %160 : vector<8x1xf32> to vector<8x8xf32>
    %162 = arith.subf %158, %161 : vector<8x8xf32>
    %163 = math.exp %162 : vector<8x8xf32>
    %cst_43 = arith.constant dense<0.000000e+00> : vector<8xf32>
    %164 = vector.multi_reduction <add>, %163, %cst_43 [1] : vector<8x8xf32> to vector<8xf32>
    %165 = vector.shape_cast %164 : vector<8xf32> to vector<8x1xf32>
    %166 = tpu.reciprocal %165 {approx = true} : vector<8x1xf32> -> vector<8x1xf32>
    %167 = vector.broadcast %166 : vector<8x1xf32> to vector<8x8xf32>
    %168 = arith.mulf %163, %167 : vector<8x8xf32>
    %169 = arith.truncf %168 : vector<8x8xf32> to vector<8x8xbf16>
    %cst_44 = arith.constant dense<0.000000e+00> : vector<8x16xf32>
    %170 = tpu.matmul %169, %114, %cst_44 {dimension_numbers = #tpu.dot_dimension_numbers<[1], [0], [0], [1], [0, 0, 1, 1], [], []>} : vector<8x8xbf16>, vector<8x16xbf16>, vector<8x16xf32> -> vector<8x16xf32>
    %171 = arith.truncf %170 : vector<8x16xf32> to vector<8x16xbf16>
    %172 = vector.extract_strided_slice %27 {offsets = [48, 0], sizes = [16, 64], strides = [1, 1]} : vector<64x64xbf16> to vector<16x64xbf16>
    %cst_45 = arith.constant dense<0.000000e+00> : vector<8x64xf32>
    %173 = tpu.matmul %171, %172, %cst_45 {dimension_numbers = #tpu.dot_dimension_numbers<[1], [0], [0], [1], [0, 0, 1, 1], [], []>} : vector<8x16xbf16>, vector<16x64xbf16>, vector<8x64xf32> -> vector<8x64xf32>
    %174 = arith.addf %144, %173 : vector<8x64xf32>
    %175 = arith.addf %1, %174 : vector<8x64xf32>
    %176 = arith.mulf %175, %175 : vector<8x64xf32>
    %cst_46 = arith.constant dense<0.000000e+00> : vector<8xf32>
    %177 = vector.multi_reduction <add>, %176, %cst_46 [1] : vector<8x64xf32> to vector<8xf32>
    %178 = vector.shape_cast %177 : vector<8xf32> to vector<8x1xf32>
    %cst_47 = arith.constant 6.400000e+01 : f32
    %179 = vector.broadcast %cst_47 : f32 to vector<8x1xf32>
    %180 = arith.divf %178, %179 : vector<8x1xf32>
    %cst_48 = arith.constant 9.99999974E-6 : f32
    %181 = vector.broadcast %cst_48 : f32 to vector<8x1xf32>
    %182 = arith.addf %180, %181 : vector<8x1xf32>
    %183 = math.rsqrt %182 : vector<8x1xf32>
    %184 = vector.broadcast %183 : vector<8x1xf32> to vector<8x64xf32>
    %185 = arith.mulf %175, %184 : vector<8x64xf32>
    %c0_49 = arith.constant 0 : index
    %c0_50 = arith.constant 0 : index
    %186 = vector.load %arg9[%c0_49, %c0_50] : memref<1x64xf32, #tpu.memory_space<vmem>>, vector<1x64xf32>
    %187 = vector.broadcast %186 : vector<1x64xf32> to vector<8x64xf32>
    %188 = arith.mulf %185, %187 : vector<8x64xf32>
    %189 = arith.truncf %188 : vector<8x64xf32> to vector<8x64xbf16>
    %c0_51 = arith.constant 0 : index
    %c0_52 = arith.constant 0 : index
    %190 = vector.load %arg10[%c0_51, %c0_52] : memref<64x192xbf16, #tpu.memory_space<vmem>>, vector<64x192xbf16>
    %cst_53 = arith.constant dense<0.000000e+00> : vector<8x192xf32>
    %191 = tpu.matmul %189, %190, %cst_53 {dimension_numbers = #tpu.dot_dimension_numbers<[1], [0], [0], [1], [0, 0, 1, 1], [], []>} : vector<8x64xbf16>, vector<64x192xbf16>, vector<8x192xf32> -> vector<8x192xf32>
    %c0_54 = arith.constant 0 : index
    %c0_55 = arith.constant 0 : index
    %192 = vector.load %arg12[%c0_54, %c0_55] : memref<64x192xbf16, #tpu.memory_space<vmem>>, vector<64x192xbf16>
    %cst_56 = arith.constant dense<0.000000e+00> : vector<8x192xf32>
    %193 = tpu.matmul %189, %192, %cst_56 {dimension_numbers = #tpu.dot_dimension_numbers<[1], [0], [0], [1], [0, 0, 1, 1], [], []>} : vector<8x64xbf16>, vector<64x192xbf16>, vector<8x192xf32> -> vector<8x192xf32>
    %194 = arith.negf %191 : vector<8x192xf32>
    %195 = math.exp %194 : vector<8x192xf32>
    %cst_57 = arith.constant 1.000000e+00 : f32
    %196 = vector.broadcast %cst_57 : f32 to vector<8x192xf32>
    %197 = arith.addf %196, %195 : vector<8x192xf32>
    %198 = arith.divf %196, %197 : vector<8x192xf32>
    %199 = arith.mulf %191, %198 : vector<8x192xf32>
    %200 = arith.mulf %199, %193 : vector<8x192xf32>
    %201 = arith.truncf %200 : vector<8x192xf32> to vector<8x192xbf16>
    %c0_58 = arith.constant 0 : index
    %c0_59 = arith.constant 0 : index
    %202 = vector.load %arg11[%c0_58, %c0_59] : memref<192x64xbf16, #tpu.memory_space<vmem>>, vector<192x64xbf16>
    %cst_60 = arith.constant dense<0.000000e+00> : vector<8x64xf32>
    %203 = tpu.matmul %201, %202, %cst_60 {dimension_numbers = #tpu.dot_dimension_numbers<[1], [0], [0], [1], [0, 0, 1, 1], [], []>} : vector<8x192xbf16>, vector<192x64xbf16>, vector<8x64xf32> -> vector<8x64xf32>
    %204 = arith.addf %175, %203 : vector<8x64xf32>
    %c0_61 = arith.constant 0 : index
    %c0_62 = arith.constant 0 : index
    %c0_63 = arith.constant 0 : index
    %205 = vector.load %arg13[%c0_61, %c0_62, %c0_63] : memref<1x8x64xf32, #tpu.memory_space<vmem>>, vector<1x8x64xf32>
    %206 = vector.shape_cast %205 : vector<1x8x64xf32> to vector<8x64xf32>
    %207 = vector.shape_cast %204 : vector<8x64xf32> to vector<1x8x64xf32>
    tpu.vector_store %arg13[%c0_61, %c0_62, %c0_63], %207 {strides = array<i32>} : memref<1x8x64xf32, #tpu.memory_space<vmem>>, vector<1x8x64xf32>,
    return
  }
  func.func @transform_0(%arg0: i32) -> (i32, i32, i32) {
    %c0_i32 = arith.constant 0 : i32
    %c0_i32_0 = arith.constant 0 : i32
    %c0_i32_1 = arith.constant 0 : i32
    return %arg0, %c0_i32, %c0_i32_0 : i32, i32, i32
  }
  func.func @transform_1(%arg0: i32) -> (i32, i32) {
    %c0_i32 = arith.constant 0 : i32
    %c0_i32_0 = arith.constant 0 : i32
    %c0_i32_1 = arith.constant 0 : i32
    return %c0_i32, %c0_i32_0 : i32, i32
  }
  func.func @transform_2(%arg0: i32) -> (i32, i32) {
    %c0_i32 = arith.constant 0 : i32
    %c0_i32_0 = arith.constant 0 : i32
    %c0_i32_1 = arith.constant 0 : i32
    return %c0_i32, %c0_i32_0 : i32, i32
  }
  func.func @transform_3(%arg0: i32) -> (i32, i32) {
    %c0_i32 = arith.constant 0 : i32
    %c0_i32_0 = arith.constant 0 : i32
    %c0_i32_1 = arith.constant 0 : i32
    return %c0_i32, %c0_i32_0 : i32, i32
  }
  func.func @transform_4(%arg0: i32) -> (i32, i32) {
    %c0_i32 = arith.constant 0 : i32
    %c0_i32_0 = arith.constant 0 : i32
    %c0_i32_1 = arith.constant 0 : i32
    return %c0_i32, %c0_i32_0 : i32, i32
  }
  func.func @transform_5(%arg0: i32) -> (i32, i32) {
    %c0_i32 = arith.constant 0 : i32
    %c0_i32_0 = arith.constant 0 : i32
    %c0_i32_1 = arith.constant 0 : i32
    return %c0_i32, %c0_i32_0 : i32, i32
  }
  func.func @transform_6(%arg0: i32) -> (i32, i32) {
    %c0_i32 = arith.constant 0 : i32
    %c0_i32_0 = arith.constant 0 : i32
    %c0_i32_1 = arith.constant 0 : i32
    return %c0_i32, %c0_i32_0 : i32, i32
  }
  func.func @transform_7(%arg0: i32) -> (i32, i32) {
    %c0_i32 = arith.constant 0 : i32
    %c0_i32_0 = arith.constant 0 : i32
    %c0_i32_1 = arith.constant 0 : i32
    return %c0_i32, %c0_i32_0 : i32, i32
  }
  func.func @transform_8(%arg0: i32) -> (i32, i32) {
    %c0_i32 = arith.constant 0 : i32
    %c0_i32_0 = arith.constant 0 : i32
    %c0_i32_1 = arith.constant 0 : i32
    return %c0_i32, %c0_i32_0 : i32, i32
  }
  func.func @transform_9(%arg0: i32) -> (i32, i32) {
    %c0_i32 = arith.constant 0 : i32
    %c0_i32_0 = arith.constant 0 : i32
    %c0_i32_1 = arith.constant 0 : i32
    return %c0_i32, %c0_i32_0 : i32, i32
  }
  func.func @transform_10(%arg0: i32) -> (i32, i32) {
    %c0_i32 = arith.constant 0 : i32
    %c0_i32_0 = arith.constant 0 : i32
    %c0_i32_1 = arith.constant 0 : i32
    return %c0_i32, %c0_i32_0 : i32, i32
  }
  func.func @transform_11(%arg0: i32) -> (i32, i32) {
    %c0_i32 = arith.constant 0 : i32
    %c0_i32_0 = arith.constant 0 : i32
    %c0_i32_1 = arith.constant 0 : i32
    return %c0_i32, %c0_i32_0 : i32, i32
  }
  func.func @transform_12(%arg0: i32) -> (i32, i32, i32) {
    %c0_i32 = arith.constant 0 : i32
    %c0_i32_0 = arith.constant 0 : i32
    %c0_i32_1 = arith.constant 0 : i32
    return %arg0, %c0_i32, %c0_i32_0 : i32, i32, i32
  }
}

</mosaic_0001>

<llo_original>
// kernel: tpu_custom_call.1
$region0: #{tpu_custom_call.1}
  #allocation0 [shape = 'u32[]', space=smem, size = 0x4, offset = 0x4, fixed_abs, tag = 'smem constant byte address 0x4 - core index']
  #allocation1 [shape = 'u32[144,128]{1,0:T(1,128)}', space=vmem, size = 0x12000, scoped, tag = 'internal scratch']
  %s0 = inlined_call_operand.hbm [shape: f32[2,8,64], index: 0, kind: input, shape index: {}]
  %s1 = inlined_call_operand.hbm [shape: f32[8,8], index: 1, kind: input, shape index: {}]
  %s2 = inlined_call_operand.hbm [shape: f32[8,8], index: 2, kind: input, shape index: {}]
  %s3 = inlined_call_operand.hbm [shape: f32[1,64], index: 3, kind: input, shape index: {}]
  %s4 = inlined_call_operand.hbm [shape: bf16[64,64], index: 4, kind: input, shape index: {}]
  %s5 = inlined_call_operand.hbm [shape: bf16[64,32], index: 5, kind: input, shape index: {}]
  %s6 = inlined_call_operand.hbm [shape: bf16[64,32], index: 6, kind: input, shape index: {}]
  %s7 = inlined_call_operand.hbm [shape: bf16[64,64], index: 7, kind: input, shape index: {}]
  %s8 = inlined_call_operand.hbm [shape: f32[1,64], index: 8, kind: input, shape index: {}]
  %s9 = inlined_call_operand.hbm [shape: bf16[64,192], index: 9, kind: input, shape index: {}]
  %s10 = inlined_call_operand.hbm [shape: bf16[192,64], index: 10, kind: input, shape index: {}]
  %s11 = inlined_call_operand.hbm [shape: bf16[64,192], index: 11, kind: input, shape index: {}]
  %s12 = inlined_call_operand.hbm [shape: f32[2,8,64], index: 12, kind: output, shape index: {}]
  %s13 = sld [smem:[#allocation0]]
  $region129: #{tpu_custom_call.1} parent=0
    _
  %s15 = ssub.s32 1, %s13
  %s16 = scalar_select 0, %s15, %s13
  $region1: #{tpu_custom_call.1} parent=0
    #allocation2 [shape = 'u8[8192]{0}', space=vmem, size = 0x2000, scoped, tag = 'input window, operand 0']
    #allocation3 [shape = 's32[2]{0}', space=sflag, size = 0x8, scoped, tag = 'scoped memory for tpu_custom_call.1']
    #allocation4 [shape = 's32[2]{0}', space=sflag, size = 0x8, scoped, tag = 'scoped memory for tpu_custom_call.1']
    #allocation5 [shape = 'u8[4096]{0}', space=vmem, size = 0x1000, scoped, tag = 'input window, operand 1, single buffered']
    #allocation6 [shape = 's32[1]{0}', space=sflag, size = 0x4, scoped, tag = 'scoped memory for tpu_custom_call.1']
    #allocation7 [shape = 'u8[4096]{0}', space=vmem, size = 0x1000, scoped, tag = 'input window, operand 2, single buffered']
    #allocation8 [shape = 'u8[512]{0}', space=vmem, size = 0x400, scoped, tag = 'input window, operand 3, single buffered']
    #allocation9 [shape = 's32[1]{0}', space=sflag, size = 0x4, scoped, tag = 'scoped memory for tpu_custom_call.1']
    #allocation10 [shape = 'u8[16384]{0}', space=vmem, size = 0x4000, scoped, tag = 'input window, operand 4, single buffered']
    #allocation11 [shape = 'u8[16384]{0}', space=vmem, size = 0x4000, scoped, tag = 'input window, operand 5, single buffered']
    #allocation12 [shape = 's32[1]{0}', space=sflag, size = 0x4, scoped, tag = 'scoped memory for tpu_custom_call.1']
    #allocation13 [shape = 'u8[16384]{0}', space=vmem, size = 0x4000, scoped, tag = 'input window, operand 6, single buffered']
    #allocation14 [shape = 'u8[16384]{0}', space=vmem, size = 0x4000, scoped, tag = 'input window, operand 7, single buffered']
    #allocation15 [shape = 's32[1]{0}', space=sflag, size = 0x4, scoped, tag = 'scoped memory for tpu_custom_call.1']
    #allocation16 [shape = 'u8[512]{0}', space=vmem, size = 0x400, scoped, tag = 'input window, operand 8, single buffered']
    #allocation17 [shape = 'u8[32768]{0}', space=vmem, size = 0x8000, scoped, tag = 'input window, operand 9, single buffered']
    #allocation18 [shape = 's32[1]{0}', space=sflag, size = 0x4, scoped, tag = 'scoped memory for tpu_custom_call.1']
    #allocation19 [shape = 'u8[49152]{0}', space=vmem, size = 0xc000, scoped, tag = 'input window, operand 10, single buffered']
    #allocation20 [shape = 'u8[32768]{0}', space=vmem, size = 0x8000, scoped, tag = 'input window, operand 11, single buffered']
    #allocation21 [shape = 's32[1]{0}', space=sflag, size = 0x4, scoped, tag = 'scoped memory for tpu_custom_call.1']
    #allocation22 [shape = 'u8[8192]{0}', space=vmem, size = 0x2000, scoped, tag = 'output window, operand 0']
    %17 = vsyncpa [#allocation3], 0
    %s18 = scalar_lea.sflag [#allocation3], 1
    %19 = vsyncpa %s18, 0
    %20 = vsyncpa [#allocation6], 0
    %21 = vsyncpa [#allocation9], 0
    %22 = vsyncpa [#allocation12], 0
    %23 = vsyncpa [#allocation15], 0
    %24 = vsyncpa [#allocation18], 0
    %25 = vsyncpa [#allocation21], 0
    %26 = vsyncpa [#allocation4], 0
    %s27 = scalar_lea.sflag [#allocation4], 1
    %28 = vsyncpa %s27, 0
    loop: start=0, step=1, limit=4
    $region2: #{tpu_custom_call.1} parent=1 // loop_pre_header
      _
    $region3: #{tpu_custom_call.1} parent=1 // loop_header
      %s30 = sphi 0, %s34
      %p31 = scmp.ge.s32.totalorder %s30, 4
      %s40 = sphi 0, %s42
      %s43 = sphi 0, %s40
      %s44 = sphi 0, %s43
      %s60 = sphi 0, %s44
      %s64 = sphi 0, %s64
      %s66 = sphi 0, %s64
      %s67 = sphi 0, %s66
      %s81 = sphi 0, %s67
      %s85 = sphi 0, %s85
      %s87 = sphi 0, %s85
      %s88 = sphi 0, %s87
      %s102 = sphi 0, %s88
      %s106 = sphi 0, %s106
      %s108 = sphi 0, %s106
      %s109 = sphi 0, %s108
      %s123 = sphi 0, %s109
      %s127 = sphi 0, %s127
      %s129 = sphi 0, %s127
      %s130 = sphi 0, %s129
      %s144 = sphi 0, %s130
      %s148 = sphi 0, %s148
      %s150 = sphi 0, %s148
      %s151 = sphi 0, %s150
      %s165 = sphi 0, %s151
      %s169 = sphi 0, %s169
      %s171 = sphi 0, %s169
      %s172 = sphi 0, %s171
      %s186 = sphi 0, %s172
      %s190 = sphi 0, %s190
      %s192 = sphi 0, %s190
      %s193 = sphi 0, %s192
      %s207 = sphi 0, %s193
      %s211 = sphi 0, %s211
      %s213 = sphi 0, %s211
      %s214 = sphi 0, %s213
      %s228 = sphi 0, %s214
      %s232 = sphi 0, %s232
      %s234 = sphi 0, %s232
      %s235 = sphi 0, %s234
      %s249 = sphi 0, %s235
      %s253 = sphi 0, %s253
      %s255 = sphi 0, %s253
      %s256 = sphi 0, %s255
      %s270 = sphi 0, %s256
      %s274 = sphi 0, %s274
      %s276 = sphi 0, %s274
      %s277 = sphi 0, %s276
      %s291 = sphi 0, %s277
      %s297 = sphi 0, %s299
      %s300 = sphi 0, %s297
      %s301 = sphi 0, %s300
      %s317 = sphi 0, %s301
    $region4: #{tpu_custom_call.1} parent=1 // loop_header_branch
      %33 = sbr.rel (%p31) target = $region8
    $region5: #{tpu_custom_call.1} parent=1 // loop_body
      %s35 = ssub.s32 %s30, 1
      %s36 = ssub.s32 %s30, 2
      %s37 = sadd.s32 %s30, 1
      %s38 = ssub.s32 %s30, %s37
      %p39 = scmp.eq.s32.totalorder %s38, 0
      %s41 = sadd.s32 %s40, 1
      %s42 = scalar_select %p39, %s40, %s41
      %p45 = pneg %p39
      %p46 = scmp.eq.s32.totalorder %s30, 1
      %p47 = por %p45, %p46
      %p48 = scmp.ne.s32.totalorder %s40, %s43
      %p49 = scmp.eq.s32.totalorder %s30, 0
      %p50 = por %p48, %p49
      %p51 = scmp.ne.s32.totalorder %s40, %s43
      %p52 = scmp.eq.s32.totalorder %s35, 1
      %p53 = por %p51, %p52
      %p54 = scmp.ne.s32.totalorder %s43, %s44
      %p55 = scmp.eq.s32.totalorder %s35, 0
      %p56 = por %p54, %p55
      %p57 = scmp.ne.s32.totalorder %s43, %s44
      %p58 = scmp.eq.s32.totalorder %s36, 1
      %p59 = por %p57, %p58
      %p61 = scmp.ne.s32.totalorder %s44, %s60
      %p62 = scmp.eq.s32.totalorder %s36, 0
      %p63 = por %p61, %p62
      %s65 = sadd.s32 %s64, 1
      %p68 = scmp.eq.s32.totalorder %s30, 1
      %p69 = scmp.ne.s32.totalorder %s64, %s66
      %p70 = scmp.eq.s32.totalorder %s30, 0
      %p71 = por %p69, %p70
      %p72 = scmp.ne.s32.totalorder %s64, %s66
      %p73 = scmp.eq.s32.totalorder %s35, 1
      %p74 = por %p72, %p73
      %p75 = scmp.ne.s32.totalorder %s66, %s67
      %p76 = scmp.eq.s32.totalorder %s35, 0
      %p77 = por %p75, %p76
      %p78 = scmp.ne.s32.totalorder %s66, %s67
      %p79 = scmp.eq.s32.totalorder %s36, 1
      %p80 = por %p78, %p79
      %p82 = scmp.ne.s32.totalorder %s67, %s81
      %p83 = scmp.eq.s32.totalorder %s36, 0
      %p84 = por %p82, %p83
      %s86 = sadd.s32 %s85, 1
      %p89 = scmp.eq.s32.totalorder %s30, 1
      %p90 = scmp.ne.s32.totalorder %s85, %s87
      %p91 = scmp.eq.s32.totalorder %s30, 0
      %p92 = por %p90, %p91
      %p93 = scmp.ne.s32.totalorder %s85, %s87
      %p94 = scmp.eq.s32.totalorder %s35, 1
      %p95 = por %p93, %p94
      %p96 = scmp.ne.s32.totalorder %s87, %s88
      %p97 = scmp.eq.s32.totalorder %s35, 0
      %p98 = por %p96, %p97
      %p99 = scmp.ne.s32.totalorder %s87, %s88
      %p100 = scmp.eq.s32.totalorder %s36, 1
      %p101 = por %p99, %p100
      %p103 = scmp.ne.s32.totalorder %s88, %s102
      %p104 = scmp.eq.s32.totalorder %s36, 0
      %p105 = por %p103, %p104
      %s107 = sadd.s32 %s106, 1
      %p110 = scmp.eq.s32.totalorder %s30, 1
      %p111 = scmp.ne.s32.totalorder %s106, %s108
      %p112 = scmp.eq.s32.totalorder %s30, 0
      %p113 = por %p111, %p112
      %p114 = scmp.ne.s32.totalorder %s106, %s108
      %p115 = scmp.eq.s32.totalorder %s35, 1
      %p116 = por %p114, %p115
      %p117 = scmp.ne.s32.totalorder %s108, %s109
      %p118 = scmp.eq.s32.totalorder %s35, 0
      %p119 = por %p117, %p118
      %p120 = scmp.ne.s32.totalorder %s108, %s109
      %p121 = scmp.eq.s32.totalorder %s36, 1
      %p122 = por %p120, %p121
      %p124 = scmp.ne.s32.totalorder %s109, %s123
      %p125 = scmp.eq.s32.totalorder %s36, 0
      %p126 = por %p124, %p125
      %s128 = sadd.s32 %s127, 1
      %p131 = scmp.eq.s32.totalorder %s30, 1
      %p132 = scmp.ne.s32.totalorder %s127, %s129
      %p133 = scmp.eq.s32.totalorder %s30, 0
      %p134 = por %p132, %p133
      %p135 = scmp.ne.s32.totalorder %s127, %s129
      %p136 = scmp.eq.s32.totalorder %s35, 1
      %p137 = por %p135, %p136
      %p138 = scmp.ne.s32.totalorder %s129, %s130
      %p139 = scmp.eq.s32.totalorder %s35, 0
      %p140 = por %p138, %p139
      %p141 = scmp.ne.s32.totalorder %s129, %s130
      %p142 = scmp.eq.s32.totalorder %s36, 1
      %p143 = por %p141, %p142
      %p145 = scmp.ne.s32.totalorder %s130, %s144
      %p146 = scmp.eq.s32.totalorder %s36, 0
      %p147 = por %p145, %p146
      %s149 = sadd.s32 %s148, 1
      %p152 = scmp.eq.s32.totalorder %s30, 1
      %p153 = scmp.ne.s32.totalorder %s148, %s150
      %p154 = scmp.eq.s32.totalorder %s30, 0
      %p155 = por %p153, %p154
      %p156 = scmp.ne.s32.totalorder %s148, %s150
      %p157 = scmp.eq.s32.totalorder %s35, 1
      %p158 = por %p156, %p157
      %p159 = scmp.ne.s32.totalorder %s150, %s151
      %p160 = scmp.eq.s32.totalorder %s35, 0
      %p161 = por %p159, %p160
      %p162 = scmp.ne.s32.totalorder %s150, %s151
      %p163 = scmp.eq.s32.totalorder %s36, 1
      %p164 = por %p162, %p163
      %p166 = scmp.ne.s32.totalorder %s151, %s165
      %p167 = scmp.eq.s32.totalorder %s36, 0
      %p168 = por %p166, %p167
      %s170 = sadd.s32 %s169, 1
      %p173 = scmp.eq.s32.totalorder %s30, 1
      %p174 = scmp.ne.s32.totalorder %s169, %s171
      %p175 = scmp.eq.s32.totalorder %s30, 0
      %p176 = por %p174, %p175
      %p177 = scmp.ne.s32.totalorder %s169, %s171
      %p178 = scmp.eq.s32.totalorder %s35, 1
      %p179 = por %p177, %p178
      %p180 = scmp.ne.s32.totalorder %s171, %s172
      %p181 = scmp.eq.s32.totalorder %s35, 0
      %p182 = por %p180, %p181
      %p183 = scmp.ne.s32.totalorder %s171, %s172
      %p184 = scmp.eq.s32.totalorder %s36, 1
      %p185 = por %p183, %p184
      %p187 = scmp.ne.s32.totalorder %s172, %s186
      %p188 = scmp.eq.s32.totalorder %s36, 0
      %p189 = por %p187, %p188
      %s191 = sadd.s32 %s190, 1
      %p194 = scmp.eq.s32.totalorder %s30, 1
      %p195 = scmp.ne.s32.totalorder %s190, %s192
      %p196 = scmp.eq.s32.totalorder %s30, 0
      %p197 = por %p195, %p196
      %p198 = scmp.ne.s32.totalorder %s190, %s192
      %p199 = scmp.eq.s32.totalorder %s35, 1
      %p200 = por %p198, %p199
      %p201 = scmp.ne.s32.totalorder %s192, %s193
      %p202 = scmp.eq.s32.totalorder %s35, 0
      %p203 = por %p201, %p202
      %p204 = scmp.ne.s32.totalorder %s192, %s193
      %p205 = scmp.eq.s32.totalorder %s36, 1
      %p206 = por %p204, %p205
      %p208 = scmp.ne.s32.totalorder %s193, %s207
      %p209 = scmp.eq.s32.totalorder %s36, 0
      %p210 = por %p208, %p209
      %s212 = sadd.s32 %s211, 1
      %p215 = scmp.eq.s32.totalorder %s30, 1
      %p216 = scmp.ne.s32.totalorder %s211, %s213
      %p217 = scmp.eq.s32.totalorder %s30, 0
      %p218 = por %p216, %p217
      %p219 = scmp.ne.s32.totalorder %s211, %s213
      %p220 = scmp.eq.s32.totalorder %s35, 1
      %p221 = por %p219, %p220
      %p222 = scmp.ne.s32.totalorder %s213, %s214
      %p223 = scmp.eq.s32.totalorder %s35, 0
      %p224 = por %p222, %p223
      %p225 = scmp.ne.s32.totalorder %s213, %s214
      %p226 = scmp.eq.s32.totalorder %s36, 1
      %p227 = por %p225, %p226
      %p229 = scmp.ne.s32.totalorder %s214, %s228
      %p230 = scmp.eq.s32.totalorder %s36, 0
      %p231 = por %p229, %p230
      %s233 = sadd.s32 %s232, 1
      %p236 = scmp.eq.s32.totalorder %s30, 1
      %p237 = scmp.ne.s32.totalorder %s232, %s234
      %p238 = scmp.eq.s32.totalorder %s30, 0
      %p239 = por %p237, %p238
      %p240 = scmp.ne.s32.totalorder %s232, %s234
      %p241 = scmp.eq.s32.totalorder %s35, 1
      %p242 = por %p240, %p241
      %p243 = scmp.ne.s32.totalorder %s234, %s235
      %p244 = scmp.eq.s32.totalorder %s35, 0
      %p245 = por %p243, %p244
      %p246 = scmp.ne.s32.totalorder %s234, %s235
      %p247 = scmp.eq.s32.totalorder %s36, 1
      %p248 = por %p246, %p247
      %p250 = scmp.ne.s32.totalorder %s235, %s249
      %p251 = scmp.eq.s32.totalorder %s36, 0
      %p252 = por %p250, %p251
      %s254 = sadd.s32 %s253, 1
      %p257 = scmp.eq.s32.totalorder %s30, 1
      %p258 = scmp.ne.s32.totalorder %s253, %s255
      %p259 = scmp.eq.s32.totalorder %s30, 0
      %p260 = por %p258, %p259
      %p261 = scmp.ne.s32.totalorder %s253, %s255
      %p262 = scmp.eq.s32.totalorder %s35, 1
      %p263 = por %p261, %p262
      %p264 = scmp.ne.s32.totalorder %s255, %s256
      %p265 = scmp.eq.s32.totalorder %s35, 0
      %p266 = por %p264, %p265
      %p267 = scmp.ne.s32.totalorder %s255, %s256
      %p268 = scmp.eq.s32.totalorder %s36, 1
      %p269 = por %p267, %p268
      %p271 = scmp.ne.s32.totalorder %s256, %s270
      %p272 = scmp.eq.s32.totalorder %s36, 0
      %p273 = por %p271, %p272
      %s275 = sadd.s32 %s274, 1
      %p278 = scmp.eq.s32.totalorder %s30, 1
      %p279 = scmp.ne.s32.totalorder %s274, %s276
      %p280 = scmp.eq.s32.totalorder %s30, 0
      %p281 = por %p279, %p280
      %p282 = scmp.ne.s32.totalorder %s274, %s276
      %p283 = scmp.eq.s32.totalorder %s35, 1
      %p284 = por %p282, %p283
      %p285 = scmp.ne.s32.totalorder %s276, %s277
      %p286 = scmp.eq.s32.totalorder %s35, 0
      %p287 = por %p285, %p286
      %p288 = scmp.ne.s32.totalorder %s276, %s277
      %p289 = scmp.eq.s32.totalorder %s36, 1
      %p290 = por %p288, %p289
      %p292 = scmp.ne.s32.totalorder %s277, %s291
      %p293 = scmp.eq.s32.totalorder %s36, 0
      %p294 = por %p292, %p293
      %s295 = ssub.s32 %s30, %s37
      %p296 = scmp.eq.s32.totalorder %s295, 0
      %s298 = sadd.s32 %s297, 1
      %s299 = scalar_select %p296, %s297, %s298
      %p302 = pneg %p296
      %p303 = scmp.eq.s32.totalorder %s30, 1
      %p304 = por %p302, %p303
      %p305 = scmp.ne.s32.totalorder %s297, %s300
      %p306 = scmp.eq.s32.totalorder %s30, 0
      %p307 = por %p305, %p306
      %p308 = scmp.ne.s32.totalorder %s297, %s300
      %p309 = scmp.eq.s32.totalorder %s35, 1
      %p310 = por %p308, %p309
      %p311 = scmp.ne.s32.totalorder %s300, %s301
      %p312 = scmp.eq.s32.totalorder %s35, 0
      %p313 = por %p311, %p312
      %p314 = scmp.ne.s32.totalorder %s300, %s301
      %p315 = scmp.eq.s32.totalorder %s36, 1
      %p316 = por %p314, %p315
      %p318 = scmp.ne.s32.totalorder %s301, %s317
      %p319 = scmp.eq.s32.totalorder %s36, 0
      %p320 = por %p318, %p319
      %p321 = scmp.le.s32.totalorder 1, %s30
      %p322 = scmp.lt.s32.totalorder %s30, 3
      %p323 = pnand %p321, %p322
      %p324 = pneg %p323
      // Predicated region
      $region9: #{tpu_custom_call.1} parent=5 // pred_check
        _
      $region10: #{tpu_custom_call.1} parent=5 // pred_check_branch
        %326 = sbr.rel (%p323) target = $region12
      $region11: #{tpu_custom_call.1} parent=5 // pred_region
        %s327 = ssub.s32 %s30, 1
        // Predicated region
        $region13: #{tpu_custom_call.1} parent=11 // pred_check
          %p328 = pneg %p77
        $region14: #{tpu_custom_call.1} parent=11 // pred_check_branch
          %330 = sbr.rel (%p328) target = $region16
        $region15: #{tpu_custom_call.1} parent=11 // pred_region
          %s332 = ssub.s32 128, 128
          %333 = vsyncadd [#allocation6], %s332
          %s335 = sshll.u32 [#allocation5], 4
          %s336 = int_to_ptr.vmem [resolvable:$true] %s335
          %338 = dma.hbm_to_vmem [thread:$0]  %s1, 128, %s336, [#allocation6]
        $region16: #{tpu_custom_call.1} parent=11 // pred_fallthru
          _
        // Predicated region
        $region17: #{tpu_custom_call.1} parent=11 // pred_check
          %p339 = pneg %p98
        $region18: #{tpu_custom_call.1} parent=11 // pred_check_branch
          %341 = sbr.rel (%p339) target = $region20
        $region19: #{tpu_custom_call.1} parent=11 // pred_region
          %s343 = ssub.s32 128, 128
          %344 = vsyncadd [#allocation6], %s343
          %s346 = sshll.u32 [#allocation7], 4
          %s347 = int_to_ptr.vmem [resolvable:$true] %s346
          %349 = dma.hbm_to_vmem [thread:$0]  %s2, 128, %s347, [#allocation6]
        $region20: #{tpu_custom_call.1} parent=11 // pred_fallthru
          _
        // Predicated region
        $region21: #{tpu_custom_call.1} parent=11 // pred_check
          %p350 = pneg %p119
        $region22: #{tpu_custom_call.1} parent=11 // pred_check_branch
          %352 = sbr.rel (%p350) target = $region24
        $region23: #{tpu_custom_call.1} parent=11 // pred_region
          %s354 = ssub.s32 16, 16
          %355 = vsyncadd [#allocation9], %s354
          %s357 = sshll.u32 [#allocation8], 4
          %s358 = int_to_ptr.vmem [resolvable:$true] %s357
          %360 = dma.hbm_to_vmem [thread:$0]  %s3, 16, %s358, [#allocation9]
        $region24: #{tpu_custom_call.1} parent=11 // pred_fallthru
          _
        // Predicated region
        $region25: #{tpu_custom_call.1} parent=11 // pred_check
          %p361 = pneg %p140
        $region26: #{tpu_custom_call.1} parent=11 // pred_check_branch
          %363 = sbr.rel (%p361) target = $region28
        $region27: #{tpu_custom_call.1} parent=11 // pred_region
          %s365 = ssub.s32 512, 512
          %366 = vsyncadd [#allocation9], %s365
          %s367 = sshll.u32 [#allocation10], 4
          %s368 = int_to_ptr.vmem [resolvable:$true] %s367
          %373 = dma.hbm_to_vmem [thread:$0]  %s4, 512, %s368, [#allocation9], 64, 64, 4
        $region28: #{tpu_custom_call.1} parent=11 // pred_fallthru
          _
        // Predicated region
        $region29: #{tpu_custom_call.1} parent=11 // pred_check
          %p374 = pneg %p161
        $region30: #{tpu_custom_call.1} parent=11 // pred_check_branch
          %376 = sbr.rel (%p374) target = $region32
        $region31: #{tpu_custom_call.1} parent=11 // pred_region
          %s378 = ssub.s32 512, 512
          %379 = vsyncadd [#allocation12], %s378
          %s380 = sshll.u32 [#allocation11], 4
          %s381 = int_to_ptr.vmem [resolvable:$true] %s380
          %386 = dma.hbm_to_vmem [thread:$0]  %s5, 512, %s381, [#allocation12], 64, 64, 4
        $region32: #{tpu_custom_call.1} parent=11 // pred_fallthru
          _
        // Predicated region
        $region33: #{tpu_custom_call.1} parent=11 // pred_check
          %p387 = pneg %p182
        $region34: #{tpu_custom_call.1} parent=11 // pred_check_branch
          %389 = sbr.rel (%p387) target = $region36
        $region35: #{tpu_custom_call.1} parent=11 // pred_region
          %s391 = ssub.s32 512, 512
          %392 = vsyncadd [#allocation12], %s391
          %s393 = sshll.u32 [#allocation13], 4
          %s394 = int_to_ptr.vmem [resolvable:$true] %s393
          %399 = dma.hbm_to_vmem [thread:$0]  %s6, 512, %s394, [#allocation12], 64, 64, 4
        $region36: #{tpu_custom_call.1} parent=11 // pred_fallthru
          _
        // Predicated region
        $region37: #{tpu_custom_call.1} parent=11 // pred_check
          %p400 = pneg %p203
        $region38: #{tpu_custom_call.1} parent=11 // pred_check_branch
          %402 = sbr.rel (%p400) target = $region40
        $region39: #{tpu_custom_call.1} parent=11 // pred_region
          %s404 = ssub.s32 512, 512
          %405 = vsyncadd [#allocation15], %s404
          %s406 = sshll.u32 [#allocation14], 4
          %s407 = int_to_ptr.vmem [resolvable:$true] %s406
          %412 = dma.hbm_to_vmem [thread:$0]  %s7, 512, %s407, [#allocation15], 64, 64, 4
        $region40: #{tpu_custom_call.1} parent=11 // pred_fallthru
          _
        // Predicated region
        $region41: #{tpu_custom_call.1} parent=11 // pred_check
          %p413 = pneg %p224
        $region42: #{tpu_custom_call.1} parent=11 // pred_check_branch
          %415 = sbr.rel (%p413) target = $region44
        $region43: #{tpu_custom_call.1} parent=11 // pred_region
          %s417 = ssub.s32 16, 16
          %418 = vsyncadd [#allocation15], %s417
          %s420 = sshll.u32 [#allocation16], 4
          %s421 = int_to_ptr.vmem [resolvable:$true] %s420
          %423 = dma.hbm_to_vmem [thread:$0]  %s8, 16, %s421, [#allocation15]
        $region44: #{tpu_custom_call.1} parent=11 // pred_fallthru
          _
        // Predicated region
        $region45: #{tpu_custom_call.1} parent=11 // pred_check
          %p424 = pneg %p245
        $region46: #{tpu_custom_call.1} parent=11 // pred_check_branch
          %426 = sbr.rel (%p424) target = $region48
        $region47: #{tpu_custom_call.1} parent=11 // pred_region
          %s428 = ssub.s32 1024, 1024
          %429 = vsyncadd [#allocation18], %s428
          %s430 = sshll.u32 [#allocation17], 4
          %s431 = int_to_ptr.vmem [resolvable:$true] %s430
          %436 = dma.hbm_to_vmem [thread:$0]  %s9, 1024, %s431, [#allocation18], 128, 128, 8
        $region48: #{tpu_custom_call.1} parent=11 // pred_fallthru
          _
        // Predicated region
        $region49: #{tpu_custom_call.1} parent=11 // pred_check
          %p437 = pneg %p266
        $region50: #{tpu_custom_call.1} parent=11 // pred_check_branch
          %439 = sbr.rel (%p437) target = $region52
        $region51: #{tpu_custom_call.1} parent=11 // pred_region
          %s441 = ssub.s32 1536, 1536
          %442 = vsyncadd [#allocation18], %s441
          %s443 = sshll.u32 [#allocation19], 4
          %s444 = int_to_ptr.vmem [resolvable:$true] %s443
          %449 = dma.hbm_to_vmem [thread:$0]  %s10, 1536, %s444, [#allocation18], 64, 64, 4
        $region52: #{tpu_custom_call.1} parent=11 // pred_fallthru
          _
        // Predicated region
        $region53: #{tpu_custom_call.1} parent=11 // pred_check
          %p450 = pneg %p287
        $region54: #{tpu_custom_call.1} parent=11 // pred_check_branch
          %452 = sbr.rel (%p450) target = $region56
        $region55: #{tpu_custom_call.1} parent=11 // pred_region
          %s454 = ssub.s32 1024, 1024
          %455 = vsyncadd [#allocation21], %s454
          %s456 = sshll.u32 [#allocation20], 4
          %s457 = int_to_ptr.vmem [resolvable:$true] %s456
          %462 = dma.hbm_to_vmem [thread:$0]  %s11, 1024, %s457, [#allocation21], 128, 128, 8
        $region56: #{tpu_custom_call.1} parent=11 // pred_fallthru
          _
      $region12: #{tpu_custom_call.1} parent=5 // pred_fallthru
        _
      %p463 = scmp.lt.s32.totalorder %s30, 2
      // Predicated region
      $region57: #{tpu_custom_call.1} parent=5 // pred_check
        %p464 = pneg %p463
      $region58: #{tpu_custom_call.1} parent=5 // pred_check_branch
        %466 = sbr.rel (%p464) target = $region60
      $region59: #{tpu_custom_call.1} parent=5 // pred_region
        // Predicated region
        $region61: #{tpu_custom_call.1} parent=59 // pred_check
          %p467 = pneg %p50
        $region62: #{tpu_custom_call.1} parent=59 // pred_check_branch
          %469 = sbr.rel (%p467) target = $region64
        $region63: #{tpu_custom_call.1} parent=59 // pred_region
          %s470 = sand.u32 %s40, 1
          %s471 = scalar_lea.sflag [#allocation3], %s470
          %s472 = sand.u32 %s40, 1
          %s473 = smul.addr %s472, 8
          %s474 = scalar_lea.vmem [#allocation2], %s473
          %s476 = ssub.s32 128, 128
          %477 = vsyncadd %s471, %s476
          %s478 = smul.addr %s30, 128
          %s479 = scalar_lea.hbm %s0, %s478
          %s481 = sshll.u32 %s474, 4
          %s482 = int_to_ptr.vmem [resolvable:$true] %s481
          %484 = dma.hbm_to_vmem [thread:$0]  %s479, 128, %s482, %s471
        $region64: #{tpu_custom_call.1} parent=59 // pred_fallthru
          _
      $region60: #{tpu_custom_call.1} parent=5 // pred_fallthru
        _
      %p485 = scmp.le.s32.totalorder 1, %s30
      %p486 = scmp.lt.s32.totalorder %s30, 3
      %p487 = pnand %p485, %p486
      %p488 = pneg %p487
      // Predicated region
      $region65: #{tpu_custom_call.1} parent=5 // pred_check
        _
      $region66: #{tpu_custom_call.1} parent=5 // pred_check_branch
        %490 = sbr.rel (%p487) target = $region68
      $region67: #{tpu_custom_call.1} parent=5 // pred_region
        %s491 = ssub.s32 %s30, 1
        %s492 = sand.u32 %s43, 1
        %s493 = scalar_lea.sflag [#allocation3], %s492
        %s494 = sand.u32 %s43, 1
        %s495 = smul.addr %s494, 8
        %s496 = scalar_lea.vmem [#allocation2], %s495
        // Predicated region
        $region69: #{tpu_custom_call.1} parent=67 // pred_check
          %p497 = pneg %p56
        $region70: #{tpu_custom_call.1} parent=67 // pred_check_branch
          %499 = sbr.rel (%p497) target = $region72
        $region71: #{tpu_custom_call.1} parent=67 // pred_region
          %500 = dma.done %s493, 128
        $region72: #{tpu_custom_call.1} parent=67 // pred_fallthru
          _
        // Predicated region
        $region73: #{tpu_custom_call.1} parent=67 // pred_check
          %p501 = pneg %p77
        $region74: #{tpu_custom_call.1} parent=67 // pred_check_branch
          %503 = sbr.rel (%p501) target = $region76
        $region75: #{tpu_custom_call.1} parent=67 // pred_region
          %504 = dma.done [#allocation6], 128
        $region76: #{tpu_custom_call.1} parent=67 // pred_fallthru
          _
        // Predicated region
        $region77: #{tpu_custom_call.1} parent=67 // pred_check
          %p505 = pneg %p98
        $region78: #{tpu_custom_call.1} parent=67 // pred_check_branch
          %507 = sbr.rel (%p505) target = $region80
        $region79: #{tpu_custom_call.1} parent=67 // pred_region
          %508 = dma.done [#allocation6], 128
        $region80: #{tpu_custom_call.1} parent=67 // pred_fallthru
          _
        // Predicated region
        $region81: #{tpu_custom_call.1} parent=67 // pred_check
          %p509 = pneg %p119
        $region82: #{tpu_custom_call.1} parent=67 // pred_check_branch
          %511 = sbr.rel (%p509) target = $region84
        $region83: #{tpu_custom_call.1} parent=67 // pred_region
          %512 = dma.done [#allocation9], 16
        $region84: #{tpu_custom_call.1} parent=67 // pred_fallthru
          _
        // Predicated region
        $region85: #{tpu_custom_call.1} parent=67 // pred_check
          %p513 = pneg %p140
        $region86: #{tpu_custom_call.1} parent=67 // pred_check_branch
          %515 = sbr.rel (%p513) target = $region88
        $region87: #{tpu_custom_call.1} parent=67 // pred_region
          %516 = dma.done [#allocation9], 512
        $region88: #{tpu_custom_call.1} parent=67 // pred_fallthru
          _
        // Predicated region
        $region89: #{tpu_custom_call.1} parent=67 // pred_check
          %p517 = pneg %p161
        $region90: #{tpu_custom_call.1} parent=67 // pred_check_branch
          %519 = sbr.rel (%p517) target = $region92
        $region91: #{tpu_custom_call.1} parent=67 // pred_region
          %520 = dma.done [#allocation12], 512
        $region92: #{tpu_custom_call.1} parent=67 // pred_fallthru
          _
        // Predicated region
        $region93: #{tpu_custom_call.1} parent=67 // pred_check
          %p521 = pneg %p182
        $region94: #{tpu_custom_call.1} parent=67 // pred_check_branch
          %523 = sbr.rel (%p521) target = $region96
        $region95: #{tpu_custom_call.1} parent=67 // pred_region
          %524 = dma.done [#allocation12], 512
        $region96: #{tpu_custom_call.1} parent=67 // pred_fallthru
          _
        // Predicated region
        $region97: #{tpu_custom_call.1} parent=67 // pred_check
          %p525 = pneg %p203
        $region98: #{tpu_custom_call.1} parent=67 // pred_check_branch
          %527 = sbr.rel (%p525) target = $region100
        $region99: #{tpu_custom_call.1} parent=67 // pred_region
          %528 = dma.done [#allocation15], 512
        $region100: #{tpu_custom_call.1} parent=67 // pred_fallthru
          _
        // Predicated region
        $region101: #{tpu_custom_call.1} parent=67 // pred_check
          %p529 = pneg %p224
        $region102: #{tpu_custom_call.1} parent=67 // pred_check_branch
          %531 = sbr.rel (%p529) target = $region104
        $region103: #{tpu_custom_call.1} parent=67 // pred_region
          %532 = dma.done [#allocation15], 16
        $region104: #{tpu_custom_call.1} parent=67 // pred_fallthru
          _
        // Predicated region
        $region105: #{tpu_custom_call.1} parent=67 // pred_check
          %p533 = pneg %p245
        $region106: #{tpu_custom_call.1} parent=67 // pred_check_branch
          %535 = sbr.rel (%p533) target = $region108
        $region107: #{tpu_custom_call.1} parent=67 // pred_region
          %536 = dma.done [#allocation18], 1024
        $region108: #{tpu_custom_call.1} parent=67 // pred_fallthru
          _
        // Predicated region
        $region109: #{tpu_custom_call.1} parent=67 // pred_check
          %p537 = pneg %p266
        $region110: #{tpu_custom_call.1} parent=67 // pred_check_branch
          %539 = sbr.rel (%p537) target = $region112
        $region111: #{tpu_custom_call.1} parent=67 // pred_region
          %540 = dma.done [#allocation18], 1536
        $region112: #{tpu_custom_call.1} parent=67 // pred_fallthru
          _
        // Predicated region
        $region113: #{tpu_custom_call.1} parent=67 // pred_check
          %p541 = pneg %p287
        $region114: #{tpu_custom_call.1} parent=67 // pred_check_branch
          %543 = sbr.rel (%p541) target = $region116
        $region115: #{tpu_custom_call.1} parent=67 // pred_region
          %544 = dma.done [#allocation21], 1024
        $region116: #{tpu_custom_call.1} parent=67 // pred_fallthru
          _
        %s545 = sand.u32 %s43, 1
        %s546 = scalar_lea.sflag [#allocation3], %s545
        %s547 = sand.u32 %s43, 1
        %s548 = smul.addr %s547, 8
        %s549 = scalar_lea.vmem [#allocation2], %s548
        %p550 = pneg %p56
        %p551 = pneg %p53
        %p552 = pneg %p77
        %p553 = pneg %p74
        %p554 = pneg %p98
        %p555 = pneg %p95
        %p556 = pneg %p119
        %p557 = pneg %p116
        %p558 = pneg %p140
        %p559 = pneg %p137
        %p560 = pneg %p161
        %p561 = pneg %p158
        %p562 = pneg %p182
        %p563 = pneg %p179
        %p564 = pneg %p203
        %p565 = pneg %p200
        %p566 = pneg %p224
        %p567 = pneg %p221
        %p568 = pneg %p245
        %p569 = pneg %p242
        %p570 = pneg %p266
        %p571 = pneg %p263
        %p572 = pneg %p287
        %p573 = pneg %p284
        %p574 = pneg %p313
        %p575 = pneg %p310
        %s576 = sand.u32 %s300, 1
        %s577 = scalar_lea.sflag [#allocation4], %s576
        %s578 = sand.u32 %s300, 1
        %s579 = smul.addr %s578, 8
        %s580 = scalar_lea.vmem [#allocation22], %s579
        %v582 = vld [vmem:[%s496] sm:$0xff]
        %v583 = vmul.f32 %v582, %v582
        %vm584 = vcmask 523264
        %v585 = vsel %vm584, %v583, 0.0
        %586 = vadd.xlane.f32.xlu0 %v585
        %v587 = vpop.xlane.xlu0 %586
        %v588 = vrcp.pop 64.0
        %v589 = vmul.f32 %v587, %v588
        %v590 = vadd.f32 %v589, 1e-05
        %v591 = vrsqrt.pop %v590
        %v592 = vmul.f32 %v582, %v591
        %v593 = vld [vmem:[#allocation8] sm:$0x1]
        %v595 = vlaneseq
        %v596 = vshrl.u32 %v595, 7
        %v597 = vsub.s32 0, %v596
        %v598 = vrot.slane %v593, %v597
        %v600 = vmul.f32 %v592, %v598
        %v601 = vpack.c.bf16 %v600, %v600
        %v602 = vld [vmem:[#allocation10] sm:$0xf]
        %v603 = vld [vmem:[#allocation10 + $0x4] sm:$0xf]
        %v604 = vld [vmem:[#allocation10 + $0x8] sm:$0xf]
        %v605 = vld [vmem:[#allocation10 + $0xc] sm:$0xf]
        %v606 = vld [vmem:[#allocation10 + $0x10] sm:$0xf]
        %v607 = vld [vmem:[#allocation10 + $0x14] sm:$0xf]
        %v608 = vld [vmem:[#allocation10 + $0x18] sm:$0xf]
        %v609 = vld [vmem:[#allocation10 + $0x1c] sm:$0xf]
        %v618 = vunpack.c.l.b16 %v602
        %v619 = vunpack.c.l.b16 %v603
        %v620 = vunpack.c.l.b16 %v604
        %v621 = vunpack.c.l.b16 %v605
        %v622 = vunpack.c.l.b16 %v606
        %v623 = vunpack.c.l.b16 %v607
        %v624 = vunpack.c.l.b16 %v608
        %v625 = vunpack.c.l.b16 %v609
        %v626 = vpack.c.b16 %v619, %v618
        %v627 = vpack.c.b16 %v621, %v620
        %v628 = vpack.c.b16 %v623, %v622
        %v629 = vpack.c.b16 %v625, %v624
        %v635 = vsel %vm584, %v601, 0
        %637 = vmatprep.subr.bf16.mxu0 0
        %638 = vmatpush1.bf16.msra.mxu0 %v626
        %639 = vmatprep.subr.bf16.mxu0 0
        %640 = vmatpush1.bf16.msra.mxu0 %v627
        %641 = vmatprep.subr.bf16.mxu0 0
        %642 = vmatpush1.bf16.msra.mxu0 %v628
        %643 = vmatprep.subr.bf16.mxu0 0
        %644 = vmatpush1.bf16.msra.mxu0 %v629
        %645 = vmatprep.subr.bf16.mxu0 0
        %646 = vmatpush1.bf16.msra.mxu0 0
        %647 = vmatprep.subr.bf16.mxu0 0
        %648 = vmatpush1.bf16.msra.mxu0 0
        %649 = vmatprep.subr.bf16.mxu0 0
        %650 = vmatpush1.bf16.msra.mxu0 0
        %651 = vmatprep.subr.bf16.mxu0 0
        %652 = vmatpush1.bf16.msra.mxu0 0
        %653 = vmatprep.subr.bf16.mxu0 0
        %654 = vmatpush1.bf16.msra.mxu0 0
        %655 = vmatprep.subr.bf16.mxu0 0
        %656 = vmatpush1.bf16.msra.mxu0 0
        %657 = vmatprep.subr.bf16.mxu0 0
        %658 = vmatpush1.bf16.msra.mxu0 0
        %659 = vmatprep.subr.bf16.mxu0 0
        %660 = vmatpush1.bf16.msra.mxu0 0
        %661 = vmatprep.subr.bf16.mxu0 0
        %662 = vmatpush1.bf16.msra.mxu0 0
        %663 = vmatprep.subr.bf16.mxu0 0
        %664 = vmatpush1.bf16.msra.mxu0 0
        %665 = vmatprep.subr.bf16.mxu0 0
        %666 = vmatpush1.bf16.msra.mxu0 0
        %667 = vmatprep.subr.bf16.mxu0 0
        %668 = vmatpush1.bf16.msra.mxu0 0
        %669 = vmatprep.mubr.bf16.mxu0 0
        %670 = vmatmul.mubr.bf16.gmra.mrb[0].mxu0 %v635
        %v671 = vpop.f32.mrb[0].mxu0
        %v672 = vadd.f32 0.0, %v671
        %v673 = vpop.f32.mrb[0].mxu0
        %v674 = vpop.f32.mrb[0].mxu0
        %v675 = vpop.f32.mrb[0].mxu0
        %676 = vdwg.mxu0
        %v677 = vld [vmem:[#allocation11] sm:$0xf]
        %v678 = vld [vmem:[#allocation11 + $0x4] sm:$0xf]
        %v679 = vld [vmem:[#allocation11 + $0x8] sm:$0xf]
        %v680 = vld [vmem:[#allocation11 + $0xc] sm:$0xf]
        %v681 = vld [vmem:[#allocation11 + $0x10] sm:$0xf]
        %v682 = vld [vmem:[#allocation11 + $0x14] sm:$0xf]
        %v683 = vld [vmem:[#allocation11 + $0x18] sm:$0xf]
        %v684 = vld [vmem:[#allocation11 + $0x1c] sm:$0xf]
        %v693 = vunpack.c.l.b16 %v677
        %v694 = vunpack.c.l.b16 %v678
        %v695 = vunpack.c.l.b16 %v679
        %v696 = vunpack.c.l.b16 %v680
        %v697 = vunpack.c.l.b16 %v681
        %v698 = vunpack.c.l.b16 %v682
        %v699 = vunpack.c.l.b16 %v683
        %v700 = vunpack.c.l.b16 %v684
        %v701 = vpack.c.b16 %v694, %v693
        %v702 = vpack.c.b16 %v696, %v695
        %v703 = vpack.c.b16 %v698, %v697
        %v704 = vpack.c.b16 %v700, %v699
        %709 = vmatprep.subr.bf16.mxu0 0
        %710 = vmatpush1.bf16.msra.mxu0 %v701
        %711 = vmatprep.subr.bf16.mxu0 0
        %712 = vmatpush1.bf16.msra.mxu0 %v702
        %713 = vmatprep.subr.bf16.mxu0 0
        %714 = vmatpush1.bf16.msra.mxu0 %v703
        %715 = vmatprep.subr.bf16.mxu0 0
        %716 = vmatpush1.bf16.msra.mxu0 %v704
        %717 = vmatprep.subr.bf16.mxu0 0
        %718 = vmatpush1.bf16.msra.mxu0 0
        %719 = vmatprep.subr.bf16.mxu0 0
        %720 = vmatpush1.bf16.msra.mxu0 0
        %721 = vmatprep.subr.bf16.mxu0 0
        %722 = vmatpush1.bf16.msra.mxu0 0
        %723 = vmatprep.subr.bf16.mxu0 0
        %724 = vmatpush1.bf16.msra.mxu0 0
        %725 = vmatprep.subr.bf16.mxu0 0
        %726 = vmatpush1.bf16.msra.mxu0 0
        %727 = vmatprep.subr.bf16.mxu0 0
        %728 = vmatpush1.bf16.msra.mxu0 0
        %729 = vmatprep.subr.bf16.mxu0 0
        %730 = vmatpush1.bf16.msra.mxu0 0
        %731 = vmatprep.subr.bf16.mxu0 0
        %732 = vmatpush1.bf16.msra.mxu0 0
        %733 = vmatprep.subr.bf16.mxu0 0
        %734 = vmatpush1.bf16.msra.mxu0 0
        %735 = vmatprep.subr.bf16.mxu0 0
        %736 = vmatpush1.bf16.msra.mxu0 0
        %737 = vmatprep.subr.bf16.mxu0 0
        %738 = vmatpush1.bf16.msra.mxu0 0
        %739 = vmatprep.subr.bf16.mxu0 0
        %740 = vmatpush1.bf16.msra.mxu0 0
        %741 = vmatprep.mubr.bf16.mxu0 0
        %742 = vmatmul.mubr.bf16.gmra.mrb[0].mxu0 %v635
        %v743 = vpop.f32.mrb[0].mxu0
        %v744 = vadd.f32 0.0, %v743
        %v745 = vpop.f32.mrb[0].mxu0
        %v746 = vpop.f32.mrb[0].mxu0
        %v747 = vpop.f32.mrb[0].mxu0
        %748 = vdwg.mxu0
        %v749 = vld [vmem:[#allocation13] sm:$0xf]
        %v750 = vld [vmem:[#allocation13 + $0x4] sm:$0xf]
        %v751 = vld [vmem:[#allocation13 + $0x8] sm:$0xf]
        %v752 = vld [vmem:[#allocation13 + $0xc] sm:$0xf]
        %v753 = vld [vmem:[#allocation13 + $0x10] sm:$0xf]
        %v754 = vld [vmem:[#allocation13 + $0x14] sm:$0xf]
        %v755 = vld [vmem:[#allocation13 + $0x18] sm:$0xf]
        %v756 = vld [vmem:[#allocation13 + $0x1c] sm:$0xf]
        %v765 = vunpack.c.l.b16 %v749
        %v766 = vunpack.c.l.b16 %v750
        %v767 = vunpack.c.l.b16 %v751
        %v768 = vunpack.c.l.b16 %v752
        %v769 = vunpack.c.l.b16 %v753
        %v770 = vunpack.c.l.b16 %v754
        %v771 = vunpack.c.l.b16 %v755
        %v772 = vunpack.c.l.b16 %v756
        %v773 = vpack.c.b16 %v766, %v765
        %v774 = vpack.c.b16 %v768, %v767
        %v775 = vpack.c.b16 %v770, %v769
        %v776 = vpack.c.b16 %v772, %v771
        %781 = vmatprep.subr.bf16.mxu0 0
        %782 = vmatpush1.bf16.msra.mxu0 %v773
        %783 = vmatprep.subr.bf16.mxu0 0
        %784 = vmatpush1.bf16.msra.mxu0 %v774
        %785 = vmatprep.subr.bf16.mxu0 0
        %786 = vmatpush1.bf16.msra.mxu0 %v775
        %787 = vmatprep.subr.bf16.mxu0 0
        %788 = vmatpush1.bf16.msra.mxu0 %v776
        %789 = vmatprep.subr.bf16.mxu0 0
        %790 = vmatpush1.bf16.msra.mxu0 0
        %791 = vmatprep.subr.bf16.mxu0 0
        %792 = vmatpush1.bf16.msra.mxu0 0
        %793 = vmatprep.subr.bf16.mxu0 0
        %794 = vmatpush1.bf16.msra.mxu0 0
        %795 = vmatprep.subr.bf16.mxu0 0
        %796 = vmatpush1.bf16.msra.mxu0 0
        %797 = vmatprep.subr.bf16.mxu0 0
        %798 = vmatpush1.bf16.msra.mxu0 0
        %799 = vmatprep.subr.bf16.mxu0 0
        %800 = vmatpush1.bf16.msra.mxu0 0
        %801 = vmatprep.subr.bf16.mxu0 0
        %802 = vmatpush1.bf16.msra.mxu0 0
        %803 = vmatprep.subr.bf16.mxu0 0
        %804 = vmatpush1.bf16.msra.mxu0 0
        %805 = vmatprep.subr.bf16.mxu0 0
        %806 = vmatpush1.bf16.msra.mxu0 0
        %807 = vmatprep.subr.bf16.mxu0 0
        %808 = vmatpush1.bf16.msra.mxu0 0
        %809 = vmatprep.subr.bf16.mxu0 0
        %810 = vmatpush1.bf16.msra.mxu0 0
        %811 = vmatprep.subr.bf16.mxu0 0
        %812 = vmatpush1.bf16.msra.mxu0 0
        %813 = vmatprep.mubr.bf16.mxu0 0
        %814 = vmatmul.mubr.bf16.gmra.mrb[0].mxu0 %v635
        %v815 = vpop.f32.mrb[0].mxu0
        %v816 = vadd.f32 0.0, %v815
        %v817 = vpop.f32.mrb[0].mxu0
        %v818 = vpop.f32.mrb[0].mxu0
        %v819 = vpop.f32.mrb[0].mxu0
        %820 = vdwg.mxu0
        %v821 = vld [vmem:[#allocation5] sm:$0xff]
        %v822 = vld [vmem:[#allocation7] sm:$0xff]
        %v823 = vlaneseq
        %v824 = vshrl.u32 %v823, 7
        %v825 = vlaneseq
        %v826 = vand.u32 %v825, 127
        %vm827 = vcmp.ge.s32.totalorder %v824, %v826
        %v828 = vld [vmem:[#allocation14] sm:$0xf]
        %v829 = vld [vmem:[#allocation14 + $0x4] sm:$0xf]
        %v830 = vld [vmem:[#allocation14 + $0x8] sm:$0xf]
        %v831 = vld [vmem:[#allocation14 + $0xc] sm:$0xf]
        %v832 = vld [vmem:[#allocation14 + $0x10] sm:$0xf]
        %v833 = vld [vmem:[#allocation14 + $0x14] sm:$0xf]
        %v834 = vld [vmem:[#allocation14 + $0x18] sm:$0xf]
        %v835 = vld [vmem:[#allocation14 + $0x1c] sm:$0xf]
        %v836 = vmul.f32 %v744, %v821
        %838 = vrot.lane.b32.xlu0 %v822, 8
        %v839 = vpop.permute.xlu0 %838
        %v841 = vmul.f32 %v744, %v839
        %843 = vrot.lane.b32.xlu0 %v841, 120
        %v844 = vpop.permute.xlu0 %843
        %v846 = vsub.f32 %v836, %v844
        %v847 = vmul.f32 %v744, %v822
        %849 = vrot.lane.b32.xlu0 %v821, 8
        %v850 = vpop.permute.xlu0 %849
        %v852 = vmul.f32 %v744, %v850
        %854 = vrot.lane.b32.xlu0 %v852, 120
        %v855 = vpop.permute.xlu0 %854
        %v857 = vadd.f32 %v847, %v855
        %859 = vrot.lane.b32.xlu0 %v857, 8
        %v860 = vpop.permute.xlu0 %859
        %vm862 = vcmask 64512
        %v863 = vsel %vm862, %v846, %v860
        %v864 = vpack.c.bf16 %v863, %v863
        %v865 = vpack.c.bf16 %v816, %v816
        %v866 = vmul.f32 %v672, %v821
        %v867 = vmul.f32 %v672, %v839
        %869 = vrot.lane.b32.xlu0 %v867, 120
        %v870 = vpop.permute.xlu0 %869
        %v872 = vsub.f32 %v866, %v870
        %v873 = vmul.f32 %v672, %v822
        %v874 = vmul.f32 %v672, %v850
        %876 = vrot.lane.b32.xlu0 %v874, 120
        %v877 = vpop.permute.xlu0 %876
        %v879 = vadd.f32 %v873, %v877
        %881 = vrot.lane.b32.xlu0 %v879, 8
        %v882 = vpop.permute.xlu0 %881
        %v884 = vsel %vm862, %v872, %v882
        %v885 = vpack.c.bf16 %v884, %v884
        %vm886 = vcmask 130048
        %v888 = vsel %vm886, %v885, 0
        %v891 = vsel %vm886, %v864, 0
        %893 = vmatprep.subr.bf16.mxu0 0
        %894 = vmatpush1.bf16.xpose.msra.mxu0 %v891
        %895 = vmatprep.subr.bf16.mxu0 0
        %896 = vmatpush1.bf16.xpose.msra.mxu0 0
        %897 = vmatprep.subr.bf16.mxu0 0
        %898 = vmatpush1.bf16.xpose.msra.mxu0 0
        %899 = vmatprep.subr.bf16.mxu0 0
        %900 = vmatpush1.bf16.xpose.msra.mxu0 0
        %901 = vmatprep.subr.bf16.mxu0 0
        %902 = vmatpush1.bf16.xpose.msra.mxu0 0
        %903 = vmatprep.subr.bf16.mxu0 0
        %904 = vmatpush1.bf16.xpose.msra.mxu0 0
        %905 = vmatprep.subr.bf16.mxu0 0
        %906 = vmatpush1.bf16.xpose.msra.mxu0 0
        %907 = vmatprep.subr.bf16.mxu0 0
        %908 = vmatpush1.bf16.xpose.msra.mxu0 0
        %909 = vmatprep.subr.bf16.mxu0 0
        %910 = vmatpush1.bf16.xpose.msra.mxu0 0
        %911 = vmatprep.subr.bf16.mxu0 0
        %912 = vmatpush1.bf16.xpose.msra.mxu0 0
        %913 = vmatprep.subr.bf16.mxu0 0
        %914 = vmatpush1.bf16.xpose.msra.mxu0 0
        %915 = vmatprep.subr.bf16.mxu0 0
        %916 = vmatpush1.bf16.xpose.msra.mxu0 0
        %917 = vmatprep.subr.bf16.mxu0 0
        %918 = vmatpush1.bf16.xpose.msra.mxu0 0
        %919 = vmatprep.subr.bf16.mxu0 0
        %920 = vmatpush1.bf16.xpose.msra.mxu0 0
        %921 = vmatprep.subr.bf16.mxu0 0
        %922 = vmatpush1.bf16.xpose.msra.mxu0 0
        %923 = vmatprep.subr.bf16.mxu0 0
        %924 = vmatpush1.bf16.xpose.msra.mxu0 0
        %925 = vmatprep.mubr.bf16.mxu0 0
        %926 = vmatmul.mubr.bf16.gmra.mrb[0].mxu0 %v888
        %v927 = vpop.f32.mrb[0].mxu0
        %v928 = vadd.f32 0.0, %v927
        %v929 = vpop.f32.mrb[0].mxu0
        %v930 = vpop.f32.mrb[0].mxu0
        %v931 = vpop.f32.mrb[0].mxu0
        %932 = vdwg.mxu0
        %v933 = vsel %vm827, %v928, -inf
        %v934 = vsel %vm862, %v933, -inf
        %935 = vmax.xlane.f32.xlu0 %v934
        %v936 = vpop.xlane.xlu0 %935
        %v937 = vsub.f32 %v933, %v936
        %v938 = vmul.f32 %v937, 1.442695
        %v939 = vpow.pop %v938
        %v940 = vsel %vm862, %v939, 0.0
        %941 = vadd.xlane.f32.xlu0 %v940
        %v942 = vpop.xlane.xlu0 %941
        %v943 = vrcp.pop %v942
        %v944 = vmul.f32 %v939, %v943
        %v945 = vpack.c.bf16 %v944, %v944
        %v947 = vsel %vm862, %v945, 0
        %vm949 = vcmask 1043456
        %v951 = vsel %vm949, %v865, 0
        %953 = vmatprep.subr.bf16.mxu0 0
        %954 = vmatpush1.bf16.msra.mxu0 %v951
        %955 = vmatprep.subr.bf16.mxu0 0
        %956 = vmatpush1.bf16.msra.mxu0 0
        %957 = vmatprep.subr.bf16.mxu0 0
        %958 = vmatpush1.bf16.msra.mxu0 0
        %959 = vmatprep.subr.bf16.mxu0 0
        %960 = vmatpush1.bf16.msra.mxu0 0
        %961 = vmatprep.subr.bf16.mxu0 0
        %962 = vmatpush1.bf16.msra.mxu0 0
        %963 = vmatprep.subr.bf16.mxu0 0
        %964 = vmatpush1.bf16.msra.mxu0 0
        %965 = vmatprep.subr.bf16.mxu0 0
        %966 = vmatpush1.bf16.msra.mxu0 0
        %967 = vmatprep.subr.bf16.mxu0 0
        %968 = vmatpush1.bf16.msra.mxu0 0
        %969 = vmatprep.subr.bf16.mxu0 0
        %970 = vmatpush1.bf16.msra.mxu0 0
        %971 = vmatprep.subr.bf16.mxu0 0
        %972 = vmatpush1.bf16.msra.mxu0 0
        %973 = vmatprep.subr.bf16.mxu0 0
        %974 = vmatpush1.bf16.msra.mxu0 0
        %975 = vmatprep.subr.bf16.mxu0 0
        %976 = vmatpush1.bf16.msra.mxu0 0
        %977 = vmatprep.subr.bf16.mxu0 0
        %978 = vmatpush1.bf16.msra.mxu0 0
        %979 = vmatprep.subr.bf16.mxu0 0
        %980 = vmatpush1.bf16.msra.mxu0 0
        %981 = vmatprep.subr.bf16.mxu0 0
        %982 = vmatpush1.bf16.msra.mxu0 0
        %983 = vmatprep.subr.bf16.mxu0 0
        %984 = vmatpush1.bf16.msra.mxu0 0
        %985 = vmatprep.mubr.bf16.mxu0 0
        %986 = vmatmul.mubr.bf16.gmra.mrb[0].mxu0 %v947
        %v987 = vpop.f32.mrb[0].mxu0
        %v988 = vadd.f32 0.0, %v987
        %v989 = vpop.f32.mrb[0].mxu0
        %v990 = vpop.f32.mrb[0].mxu0
        %v991 = vpop.f32.mrb[0].mxu0
        %992 = vdwg.mxu0
        %v993 = vpack.c.bf16 %v988, %v988
        %994 = vrot.lane.b32.xlu0 %v821, 16
        %v995 = vpop.permute.xlu0 %994
        %v997 = vmul.f32 %v672, %v995
        %998 = vrot.lane.b32.xlu0 %v822, 24
        %v999 = vpop.permute.xlu0 %998
        %v1001 = vmul.f32 %v672, %v999
        %1003 = vrot.lane.b32.xlu0 %v1001, 120
        %v1004 = vpop.permute.xlu0 %1003
        %v1006 = vsub.f32 %v997, %v1004
        %1007 = vrot.lane.b32.xlu0 %v822, 16
        %v1008 = vpop.permute.xlu0 %1007
        %v1010 = vmul.f32 %v672, %v1008
        %1011 = vrot.lane.b32.xlu0 %v821, 24
        %v1012 = vpop.permute.xlu0 %1011
        %v1014 = vmul.f32 %v672, %v1012
        %1016 = vrot.lane.b32.xlu0 %v1014, 120
        %v1017 = vpop.permute.xlu0 %1016
        %v1019 = vadd.f32 %v1010, %v1017
        %1021 = vrot.lane.b32.xlu0 %v1006, 112
        %v1022 = vpop.permute.xlu0 %1021
        %1025 = vrot.lane.b32.xlu0 %v1019, 120
        %v1026 = vpop.permute.xlu0 %1025
        %v1028 = vsel %vm862, %v1022, %v1026
        %v1029 = vpack.c.bf16 %v1028, %v1028
        %v1031 = vsel %vm886, %v1029, 0
        %1033 = vmatprep.subr.bf16.mxu0 0
        %1034 = vmatpush1.bf16.xpose.msra.mxu0 %v891
        %1035 = vmatprep.subr.bf16.mxu0 0
        %1036 = vmatpush1.bf16.xpose.msra.mxu0 0
        %1037 = vmatprep.subr.bf16.mxu0 0
        %1038 = vmatpush1.bf16.xpose.msra.mxu0 0
        %1039 = vmatprep.subr.bf16.mxu0 0
        %1040 = vmatpush1.bf16.xpose.msra.mxu0 0
        %1041 = vmatprep.subr.bf16.mxu0 0
        %1042 = vmatpush1.bf16.xpose.msra.mxu0 0
        %1043 = vmatprep.subr.bf16.mxu0 0
        %1044 = vmatpush1.bf16.xpose.msra.mxu0 0
        %1045 = vmatprep.subr.bf16.mxu0 0
        %1046 = vmatpush1.bf16.xpose.msra.mxu0 0
        %1047 = vmatprep.subr.bf16.mxu0 0
        %1048 = vmatpush1.bf16.xpose.msra.mxu0 0
        %1049 = vmatprep.subr.bf16.mxu0 0
        %1050 = vmatpush1.bf16.xpose.msra.mxu0 0
        %1051 = vmatprep.subr.bf16.mxu0 0
        %1052 = vmatpush1.bf16.xpose.msra.mxu0 0
        %1053 = vmatprep.subr.bf16.mxu0 0
        %1054 = vmatpush1.bf16.xpose.msra.mxu0 0
        %1055 = vmatprep.subr.bf16.mxu0 0
        %1056 = vmatpush1.bf16.xpose.msra.mxu0 0
        %1057 = vmatprep.subr.bf16.mxu0 0
        %1058 = vmatpush1.bf16.xpose.msra.mxu0 0
        %1059 = vmatprep.subr.bf16.mxu0 0
        %1060 = vmatpush1.bf16.xpose.msra.mxu0 0
        %1061 = vmatprep.subr.bf16.mxu0 0
        %1062 = vmatpush1.bf16.xpose.msra.mxu0 0
        %1063 = vmatprep.subr.bf16.mxu0 0
        %1064 = vmatpush1.bf16.xpose.msra.mxu0 0
        %1065 = vmatprep.mubr.bf16.mxu0 0
        %1066 = vmatmul.mubr.bf16.gmra.mrb[0].mxu0 %v1031
        %v1067 = vpop.f32.mrb[0].mxu0
        %v1068 = vadd.f32 0.0, %v1067
        %v1069 = vpop.f32.mrb[0].mxu0
        %v1070 = vpop.f32.mrb[0].mxu0
        %v1071 = vpop.f32.mrb[0].mxu0
        %1072 = vdwg.mxu0
        %v1073 = vsel %vm827, %v1068, -inf
        %v1074 = vsel %vm862, %v1073, -inf
        %1075 = vmax.xlane.f32.xlu0 %v1074
        %v1076 = vpop.xlane.xlu0 %1075
        %v1077 = vsub.f32 %v1073, %v1076
        %v1078 = vmul.f32 %v1077, 1.442695
        %v1079 = vpow.pop %v1078
        %v1080 = vsel %vm862, %v1079, 0.0
        %1081 = vadd.xlane.f32.xlu0 %v1080
        %v1082 = vpop.xlane.xlu0 %1081
        %v1083 = vrcp.pop %v1082
        %v1084 = vmul.f32 %v1079, %v1083
        %v1085 = vpack.c.bf16 %v1084, %v1084
        %v1087 = vsel %vm862, %v1085, 0
        %1089 = vmatprep.subr.bf16.mxu0 0
        %1090 = vmatpush1.bf16.msra.mxu0 %v951
        %1091 = vmatprep.subr.bf16.mxu0 0
        %1092 = vmatpush1.bf16.msra.mxu0 0
        %1093 = vmatprep.subr.bf16.mxu0 0
        %1094 = vmatpush1.bf16.msra.mxu0 0
        %1095 = vmatprep.subr.bf16.mxu0 0
        %1096 = vmatpush1.bf16.msra.mxu0 0
        %1097 = vmatprep.subr.bf16.mxu0 0
        %1098 = vmatpush1.bf16.msra.mxu0 0
        %1099 = vmatprep.subr.bf16.mxu0 0
        %1100 = vmatpush1.bf16.msra.mxu0 0
        %1101 = vmatprep.subr.bf16.mxu0 0
        %1102 = vmatpush1.bf16.msra.mxu0 0
        %1103 = vmatprep.subr.bf16.mxu0 0
        %1104 = vmatpush1.bf16.msra.mxu0 0
        %1105 = vmatprep.subr.bf16.mxu0 0
        %1106 = vmatpush1.bf16.msra.mxu0 0
        %1107 = vmatprep.subr.bf16.mxu0 0
        %1108 = vmatpush1.bf16.msra.mxu0 0
        %1109 = vmatprep.subr.bf16.mxu0 0
        %1110 = vmatpush1.bf16.msra.mxu0 0
        %1111 = vmatprep.subr.bf16.mxu0 0
        %1112 = vmatpush1.bf16.msra.mxu0 0
        %1113 = vmatprep.subr.bf16.mxu0 0
        %1114 = vmatpush1.bf16.msra.mxu0 0
        %1115 = vmatprep.subr.bf16.mxu0 0
        %1116 = vmatpush1.bf16.msra.mxu0 0
        %1117 = vmatprep.subr.bf16.mxu0 0
        %1118 = vmatpush1.bf16.msra.mxu0 0
        %1119 = vmatprep.subr.bf16.mxu0 0
        %1120 = vmatpush1.bf16.msra.mxu0 0
        %1121 = vmatprep.mubr.bf16.mxu0 0
        %1122 = vmatmul.mubr.bf16.gmra.mrb[0].mxu0 %v1087
        %v1123 = vpop.f32.mrb[0].mxu0
        %v1124 = vadd.f32 0.0, %v1123
        %v1125 = vpop.f32.mrb[0].mxu0
        %v1126 = vpop.f32.mrb[0].mxu0
        %v1127 = vpop.f32.mrb[0].mxu0
        %1128 = vdwg.mxu0
        %v1129 = vpack.c.bf16 %v1124, %v1124
        %v1132 = vunpack.c.l.b16 %v830
        %v1133 = vunpack.c.l.b16 %v831
        %v1134 = vpack.c.b16 %v1133, %v1132
        %v1137 = vsel %vm886, %v1129, 0
        %1139 = vmatprep.subr.bf16.mxu0 0
        %1140 = vmatpush1.bf16.msra.mxu0 %v1134
        %1141 = vmatprep.subr.bf16.mxu0 0
        %1142 = vmatpush1.bf16.msra.mxu0 0
        %1143 = vmatprep.subr.bf16.mxu0 0
        %1144 = vmatpush1.bf16.msra.mxu0 0
        %1145 = vmatprep.subr.bf16.mxu0 0
        %1146 = vmatpush1.bf16.msra.mxu0 0
        %1147 = vmatprep.subr.bf16.mxu0 0
        %1148 = vmatpush1.bf16.msra.mxu0 0
        %1149 = vmatprep.subr.bf16.mxu0 0
        %1150 = vmatpush1.bf16.msra.mxu0 0
        %1151 = vmatprep.subr.bf16.mxu0 0
        %1152 = vmatpush1.bf16.msra.mxu0 0
        %1153 = vmatprep.subr.bf16.mxu0 0
        %1154 = vmatpush1.bf16.msra.mxu0 0
        %1155 = vmatprep.subr.bf16.mxu0 0
        %1156 = vmatpush1.bf16.msra.mxu0 0
        %1157 = vmatprep.subr.bf16.mxu0 0
        %1158 = vmatpush1.bf16.msra.mxu0 0
        %1159 = vmatprep.subr.bf16.mxu0 0
        %1160 = vmatpush1.bf16.msra.mxu0 0
        %1161 = vmatprep.subr.bf16.mxu0 0
        %1162 = vmatpush1.bf16.msra.mxu0 0
        %1163 = vmatprep.subr.bf16.mxu0 0
        %1164 = vmatpush1.bf16.msra.mxu0 0
        %1165 = vmatprep.subr.bf16.mxu0 0
        %1166 = vmatpush1.bf16.msra.mxu0 0
        %1167 = vmatprep.subr.bf16.mxu0 0
        %1168 = vmatpush1.bf16.msra.mxu0 0
        %1169 = vmatprep.subr.bf16.mxu0 0
        %1170 = vmatpush1.bf16.msra.mxu0 0
        %1171 = vmatprep.mubr.bf16.mxu0 0
        %1172 = vmatmul.mubr.bf16.gmra.mrb[0].mxu0 %v1137
        %v1173 = vpop.f32.mrb[0].mxu0
        %v1174 = vadd.f32 0.0, %v1173
        %v1175 = vpop.f32.mrb[0].mxu0
        %v1176 = vpop.f32.mrb[0].mxu0
        %v1177 = vpop.f32.mrb[0].mxu0
        %1178 = vdwg.mxu0
        %v1181 = vunpack.c.l.b16 %v828
        %v1182 = vunpack.c.l.b16 %v829
        %v1183 = vpack.c.b16 %v1182, %v1181
        %v1186 = vsel %vm886, %v993, 0
        %1188 = vmatprep.subr.bf16.mxu0 0
        %1189 = vmatpush1.bf16.msra.mxu0 %v1183
        %1190 = vmatprep.subr.bf16.mxu0 0
        %1191 = vmatpush1.bf16.msra.mxu0 0
        %1192 = vmatprep.subr.bf16.mxu0 0
        %1193 = vmatpush1.bf16.msra.mxu0 0
        %1194 = vmatprep.subr.bf16.mxu0 0
        %1195 = vmatpush1.bf16.msra.mxu0 0
        %1196 = vmatprep.subr.bf16.mxu0 0
        %1197 = vmatpush1.bf16.msra.mxu0 0
        %1198 = vmatprep.subr.bf16.mxu0 0
        %1199 = vmatpush1.bf16.msra.mxu0 0
        %1200 = vmatprep.subr.bf16.mxu0 0
        %1201 = vmatpush1.bf16.msra.mxu0 0
        %1202 = vmatprep.subr.bf16.mxu0 0
        %1203 = vmatpush1.bf16.msra.mxu0 0
        %1204 = vmatprep.subr.bf16.mxu0 0
        %1205 = vmatpush1.bf16.msra.mxu0 0
        %1206 = vmatprep.subr.bf16.mxu0 0
        %1207 = vmatpush1.bf16.msra.mxu0 0
        %1208 = vmatprep.subr.bf16.mxu0 0
        %1209 = vmatpush1.bf16.msra.mxu0 0
        %1210 = vmatprep.subr.bf16.mxu0 0
        %1211 = vmatpush1.bf16.msra.mxu0 0
        %1212 = vmatprep.subr.bf16.mxu0 0
        %1213 = vmatpush1.bf16.msra.mxu0 0
        %1214 = vmatprep.subr.bf16.mxu0 0
        %1215 = vmatpush1.bf16.msra.mxu0 0
        %1216 = vmatprep.subr.bf16.mxu0 0
        %1217 = vmatpush1.bf16.msra.mxu0 0
        %1218 = vmatprep.subr.bf16.mxu0 0
        %1219 = vmatpush1.bf16.msra.mxu0 0
        %1220 = vmatprep.mubr.bf16.mxu0 0
        %1221 = vmatmul.mubr.bf16.gmra.mrb[0].mxu0 %v1186
        %v1222 = vpop.f32.mrb[0].mxu0
        %v1223 = vadd.f32 %v1174, %v1222
        %v1224 = vpop.f32.mrb[0].mxu0
        %v1225 = vpop.f32.mrb[0].mxu0
        %v1226 = vpop.f32.mrb[0].mxu0
        %1227 = vdwg.mxu0
        %v1228 = vmul.f32 %v744, %v995
        %v1229 = vmul.f32 %v744, %v999
        %1231 = vrot.lane.b32.xlu0 %v1229, 120
        %v1232 = vpop.permute.xlu0 %1231
        %v1234 = vsub.f32 %v1228, %v1232
        %v1235 = vmul.f32 %v744, %v1008
        %v1236 = vmul.f32 %v744, %v1012
        %1238 = vrot.lane.b32.xlu0 %v1236, 120
        %v1239 = vpop.permute.xlu0 %1238
        %v1241 = vadd.f32 %v1235, %v1239
        %1243 = vrot.lane.b32.xlu0 %v1234, 112
        %v1244 = vpop.permute.xlu0 %1243
        %1247 = vrot.lane.b32.xlu0 %v1241, 120
        %v1248 = vpop.permute.xlu0 %1247
        %v1250 = vsel %vm862, %v1244, %v1248
        %v1251 = vpack.c.bf16 %v1250, %v1250
        %1252 = vrot.lane.b32.xlu0 %v821, 32
        %v1253 = vpop.permute.xlu0 %1252
        %v1255 = vmul.f32 %v672, %v1253
        %1256 = vrot.lane.b32.xlu0 %v822, 40
        %v1257 = vpop.permute.xlu0 %1256
        %v1259 = vmul.f32 %v672, %v1257
        %1261 = vrot.lane.b32.xlu0 %v1259, 120
        %v1262 = vpop.permute.xlu0 %1261
        %v1264 = vsub.f32 %v1255, %v1262
        %1265 = vrot.lane.b32.xlu0 %v822, 32
        %v1266 = vpop.permute.xlu0 %1265
        %v1268 = vmul.f32 %v672, %v1266
        %1269 = vrot.lane.b32.xlu0 %v821, 40
        %v1270 = vpop.permute.xlu0 %1269
        %v1272 = vmul.f32 %v672, %v1270
        %1274 = vrot.lane.b32.xlu0 %v1272, 120
        %v1275 = vpop.permute.xlu0 %1274
        %v1277 = vadd.f32 %v1268, %v1275
        %1279 = vrot.lane.b32.xlu0 %v1264, 96
        %v1280 = vpop.permute.xlu0 %1279
        %1283 = vrot.lane.b32.xlu0 %v1277, 104
        %v1284 = vpop.permute.xlu0 %1283
        %v1286 = vsel %vm862, %v1280, %v1284
        %v1287 = vpack.c.bf16 %v1286, %v1286
        %v1289 = vsel %vm886, %v1287, 0
        %v1292 = vsel %vm886, %v1251, 0
        %1294 = vmatprep.subr.bf16.mxu0 0
        %1295 = vmatpush1.bf16.xpose.msra.mxu0 %v1292
        %1296 = vmatprep.subr.bf16.mxu0 0
        %1297 = vmatpush1.bf16.xpose.msra.mxu0 0
        %1298 = vmatprep.subr.bf16.mxu0 0
        %1299 = vmatpush1.bf16.xpose.msra.mxu0 0
        %1300 = vmatprep.subr.bf16.mxu0 0
        %1301 = vmatpush1.bf16.xpose.msra.mxu0 0
        %1302 = vmatprep.subr.bf16.mxu0 0
        %1303 = vmatpush1.bf16.xpose.msra.mxu0 0
        %1304 = vmatprep.subr.bf16.mxu0 0
        %1305 = vmatpush1.bf16.xpose.msra.mxu0 0
        %1306 = vmatprep.subr.bf16.mxu0 0
        %1307 = vmatpush1.bf16.xpose.msra.mxu0 0
        %1308 = vmatprep.subr.bf16.mxu0 0
        %1309 = vmatpush1.bf16.xpose.msra.mxu0 0
        %1310 = vmatprep.subr.bf16.mxu0 0
        %1311 = vmatpush1.bf16.xpose.msra.mxu0 0
        %1312 = vmatprep.subr.bf16.mxu0 0
        %1313 = vmatpush1.bf16.xpose.msra.mxu0 0
        %1314 = vmatprep.subr.bf16.mxu0 0
        %1315 = vmatpush1.bf16.xpose.msra.mxu0 0
        %1316 = vmatprep.subr.bf16.mxu0 0
        %1317 = vmatpush1.bf16.xpose.msra.mxu0 0
        %1318 = vmatprep.subr.bf16.mxu0 0
        %1319 = vmatpush1.bf16.xpose.msra.mxu0 0
        %1320 = vmatprep.subr.bf16.mxu0 0
        %1321 = vmatpush1.bf16.xpose.msra.mxu0 0
        %1322 = vmatprep.subr.bf16.mxu0 0
        %1323 = vmatpush1.bf16.xpose.msra.mxu0 0
        %1324 = vmatprep.subr.bf16.mxu0 0
        %1325 = vmatpush1.bf16.xpose.msra.mxu0 0
        %1326 = vmatprep.mubr.bf16.mxu0 0
        %1327 = vmatmul.mubr.bf16.gmra.mrb[0].mxu0 %v1289
        %v1328 = vpop.f32.mrb[0].mxu0
        %v1329 = vadd.f32 0.0, %v1328
        %v1330 = vpop.f32.mrb[0].mxu0
        %v1331 = vpop.f32.mrb[0].mxu0
        %v1332 = vpop.f32.mrb[0].mxu0
        %1333 = vdwg.mxu0
        %v1334 = vsel %vm827, %v1329, -inf
        %v1335 = vsel %vm862, %v1334, -inf
        %1336 = vmax.xlane.f32.xlu0 %v1335
        %v1337 = vpop.xlane.xlu0 %1336
        %v1338 = vsub.f32 %v1334, %v1337
        %v1339 = vmul.f32 %v1338, 1.442695
        %v1340 = vpow.pop %v1339
        %v1341 = vsel %vm862, %v1340, 0.0
        %1342 = vadd.xlane.f32.xlu0 %v1341
        %v1343 = vpop.xlane.xlu0 %1342
        %v1344 = vrcp.pop %v1343
        %v1345 = vmul.f32 %v1340, %v1344
        %v1346 = vpack.c.bf16 %v1345, %v1345
        %1348 = vrot.lane.b32.xlu0 %v865, 112
        %v1349 = vpop.permute.xlu0 %1348
        %v1351 = vsel %vm862, %v1346, 0
        %v1354 = vsel %vm949, %v1349, 0
        %1356 = vmatprep.subr.bf16.mxu0 0
        %1357 = vmatpush1.bf16.msra.mxu0 %v1354
        %1358 = vmatprep.subr.bf16.mxu0 0
        %1359 = vmatpush1.bf16.msra.mxu0 0
        %1360 = vmatprep.subr.bf16.mxu0 0
        %1361 = vmatpush1.bf16.msra.mxu0 0
        %1362 = vmatprep.subr.bf16.mxu0 0
        %1363 = vmatpush1.bf16.msra.mxu0 0
        %1364 = vmatprep.subr.bf16.mxu0 0
        %1365 = vmatpush1.bf16.msra.mxu0 0
        %1366 = vmatprep.subr.bf16.mxu0 0
        %1367 = vmatpush1.bf16.msra.mxu0 0
        %1368 = vmatprep.subr.bf16.mxu0 0
        %1369 = vmatpush1.bf16.msra.mxu0 0
        %1370 = vmatprep.subr.bf16.mxu0 0
        %1371 = vmatpush1.bf16.msra.mxu0 0
        %1372 = vmatprep.subr.bf16.mxu0 0
        %1373 = vmatpush1.bf16.msra.mxu0 0
        %1374 = vmatprep.subr.bf16.mxu0 0
        %1375 = vmatpush1.bf16.msra.mxu0 0
        %1376 = vmatprep.subr.bf16.mxu0 0
        %1377 = vmatpush1.bf16.msra.mxu0 0
        %1378 = vmatprep.subr.bf16.mxu0 0
        %1379 = vmatpush1.bf16.msra.mxu0 0
        %1380 = vmatprep.subr.bf16.mxu0 0
        %1381 = vmatpush1.bf16.msra.mxu0 0
        %1382 = vmatprep.subr.bf16.mxu0 0
        %1383 = vmatpush1.bf16.msra.mxu0 0
        %1384 = vmatprep.subr.bf16.mxu0 0
        %1385 = vmatpush1.bf16.msra.mxu0 0
        %1386 = vmatprep.subr.bf16.mxu0 0
        %1387 = vmatpush1.bf16.msra.mxu0 0
        %1388 = vmatprep.mubr.bf16.mxu0 0
        %1389 = vmatmul.mubr.bf16.gmra.mrb[0].mxu0 %v1351
        %v1390 = vpop.f32.mrb[0].mxu0
        %v1391 = vadd.f32 0.0, %v1390
        %v1392 = vpop.f32.mrb[0].mxu0
        %v1393 = vpop.f32.mrb[0].mxu0
        %v1394 = vpop.f32.mrb[0].mxu0
        %1395 = vdwg.mxu0
        %v1396 = vpack.c.bf16 %v1391, %v1391
        %v1399 = vunpack.c.l.b16 %v832
        %v1400 = vunpack.c.l.b16 %v833
        %v1401 = vpack.c.b16 %v1400, %v1399
        %v1404 = vsel %vm886, %v1396, 0
        %1406 = vmatprep.subr.bf16.mxu0 0
        %1407 = vmatpush1.bf16.msra.mxu0 %v1401
        %1408 = vmatprep.subr.bf16.mxu0 0
        %1409 = vmatpush1.bf16.msra.mxu0 0
        %1410 = vmatprep.subr.bf16.mxu0 0
        %1411 = vmatpush1.bf16.msra.mxu0 0
        %1412 = vmatprep.subr.bf16.mxu0 0
        %1413 = vmatpush1.bf16.msra.mxu0 0
        %1414 = vmatprep.subr.bf16.mxu0 0
        %1415 = vmatpush1.bf16.msra.mxu0 0
        %1416 = vmatprep.subr.bf16.mxu0 0
        %1417 = vmatpush1.bf16.msra.mxu0 0
        %1418 = vmatprep.subr.bf16.mxu0 0
        %1419 = vmatpush1.bf16.msra.mxu0 0
        %1420 = vmatprep.subr.bf16.mxu0 0
        %1421 = vmatpush1.bf16.msra.mxu0 0
        %1422 = vmatprep.subr.bf16.mxu0 0
        %1423 = vmatpush1.bf16.msra.mxu0 0
        %1424 = vmatprep.subr.bf16.mxu0 0
        %1425 = vmatpush1.bf16.msra.mxu0 0
        %1426 = vmatprep.subr.bf16.mxu0 0
        %1427 = vmatpush1.bf16.msra.mxu0 0
        %1428 = vmatprep.subr.bf16.mxu0 0
        %1429 = vmatpush1.bf16.msra.mxu0 0
        %1430 = vmatprep.subr.bf16.mxu0 0
        %1431 = vmatpush1.bf16.msra.mxu0 0
        %1432 = vmatprep.subr.bf16.mxu0 0
        %1433 = vmatpush1.bf16.msra.mxu0 0
        %1434 = vmatprep.subr.bf16.mxu0 0
        %1435 = vmatpush1.bf16.msra.mxu0 0
        %1436 = vmatprep.subr.bf16.mxu0 0
        %1437 = vmatpush1.bf16.msra.mxu0 0
        %1438 = vmatprep.mubr.bf16.mxu0 0
        %1439 = vmatmul.mubr.bf16.gmra.mrb[0].mxu0 %v1404
        %v1440 = vpop.f32.mrb[0].mxu0
        %v1441 = vadd.f32 0.0, %v1440
        %v1442 = vpop.f32.mrb[0].mxu0
        %v1443 = vpop.f32.mrb[0].mxu0
        %v1444 = vpop.f32.mrb[0].mxu0
        %1445 = vdwg.mxu0
        %v1446 = vadd.f32 %v1223, %v1441
        %1447 = vrot.lane.b32.xlu0 %v821, 48
        %v1448 = vpop.permute.xlu0 %1447
        %v1450 = vmul.f32 %v672, %v1448
        %1451 = vrot.lane.b32.xlu0 %v822, 56
        %v1452 = vpop.permute.xlu0 %1451
        %v1454 = vmul.f32 %v672, %v1452
        %1456 = vrot.lane.b32.xlu0 %v1454, 120
        %v1457 = vpop.permute.xlu0 %1456
        %v1459 = vsub.f32 %v1450, %v1457
        %1460 = vrot.lane.b32.xlu0 %v822, 48
        %v1461 = vpop.permute.xlu0 %1460
        %v1463 = vmul.f32 %v672, %v1461
        %1464 = vrot.lane.b32.xlu0 %v821, 56
        %v1465 = vpop.permute.xlu0 %1464
        %v1467 = vmul.f32 %v672, %v1465
        %1469 = vrot.lane.b32.xlu0 %v1467, 120
        %v1470 = vpop.permute.xlu0 %1469
        %v1472 = vadd.f32 %v1463, %v1470
        %1474 = vrot.lane.b32.xlu0 %v1459, 80
        %v1475 = vpop.permute.xlu0 %1474
        %1478 = vrot.lane.b32.xlu0 %v1472, 88
        %v1479 = vpop.permute.xlu0 %1478
        %v1481 = vsel %vm862, %v1475, %v1479
        %v1482 = vpack.c.bf16 %v1481, %v1481
        %v1484 = vsel %vm886, %v1482, 0
        %1486 = vmatprep.subr.bf16.mxu0 0
        %1487 = vmatpush1.bf16.xpose.msra.mxu0 %v1292
        %1488 = vmatprep.subr.bf16.mxu0 0
        %1489 = vmatpush1.bf16.xpose.msra.mxu0 0
        %1490 = vmatprep.subr.bf16.mxu0 0
        %1491 = vmatpush1.bf16.xpose.msra.mxu0 0
        %1492 = vmatprep.subr.bf16.mxu0 0
        %1493 = vmatpush1.bf16.xpose.msra.mxu0 0
        %1494 = vmatprep.subr.bf16.mxu0 0
        %1495 = vmatpush1.bf16.xpose.msra.mxu0 0
        %1496 = vmatprep.subr.bf16.mxu0 0
        %1497 = vmatpush1.bf16.xpose.msra.mxu0 0
        %1498 = vmatprep.subr.bf16.mxu0 0
        %1499 = vmatpush1.bf16.xpose.msra.mxu0 0
        %1500 = vmatprep.subr.bf16.mxu0 0
        %1501 = vmatpush1.bf16.xpose.msra.mxu0 0
        %1502 = vmatprep.subr.bf16.mxu0 0
        %1503 = vmatpush1.bf16.xpose.msra.mxu0 0
        %1504 = vmatprep.subr.bf16.mxu0 0
        %1505 = vmatpush1.bf16.xpose.msra.mxu0 0
        %1506 = vmatprep.subr.bf16.mxu0 0
        %1507 = vmatpush1.bf16.xpose.msra.mxu0 0
        %1508 = vmatprep.subr.bf16.mxu0 0
        %1509 = vmatpush1.bf16.xpose.msra.mxu0 0
        %1510 = vmatprep.subr.bf16.mxu0 0
        %1511 = vmatpush1.bf16.xpose.msra.mxu0 0
        %1512 = vmatprep.subr.bf16.mxu0 0
        %1513 = vmatpush1.bf16.xpose.msra.mxu0 0
        %1514 = vmatprep.subr.bf16.mxu0 0
        %1515 = vmatpush1.bf16.xpose.msra.mxu0 0
        %1516 = vmatprep.subr.bf16.mxu0 0
        %1517 = vmatpush1.bf16.xpose.msra.mxu0 0
        %1518 = vmatprep.mubr.bf16.mxu0 0
        %1519 = vmatmul.mubr.bf16.gmra.mrb[0].mxu0 %v1484
        %v1520 = vpop.f32.mrb[0].mxu0
        %v1521 = vadd.f32 0.0, %v1520
        %v1522 = vpop.f32.mrb[0].mxu0
        %v1523 = vpop.f32.mrb[0].mxu0
        %v1524 = vpop.f32.mrb[0].mxu0
        %1525 = vdwg.mxu0
        %v1526 = vsel %vm827, %v1521, -inf
        %v1527 = vsel %vm862, %v1526, -inf
        %1528 = vmax.xlane.f32.xlu0 %v1527
        %v1529 = vpop.xlane.xlu0 %1528
        %v1530 = vsub.f32 %v1526, %v1529
        %v1531 = vmul.f32 %v1530, 1.442695
        %v1532 = vpow.pop %v1531
        %v1533 = vsel %vm862, %v1532, 0.0
        %1534 = vadd.xlane.f32.xlu0 %v1533
        %v1535 = vpop.xlane.xlu0 %1534
        %v1536 = vrcp.pop %v1535
        %v1537 = vmul.f32 %v1532, %v1536
        %v1538 = vpack.c.bf16 %v1537, %v1537
        %v1540 = vsel %vm862, %v1538, 0
        %1542 = vmatprep.subr.bf16.mxu0 0
        %1543 = vmatpush1.bf16.msra.mxu0 %v1354
        %1544 = vmatprep.subr.bf16.mxu0 0
        %1545 = vmatpush1.bf16.msra.mxu0 0
        %1546 = vmatprep.subr.bf16.mxu0 0
        %1547 = vmatpush1.bf16.msra.mxu0 0
        %1548 = vmatprep.subr.bf16.mxu0 0
        %1549 = vmatpush1.bf16.msra.mxu0 0
        %1550 = vmatprep.subr.bf16.mxu0 0
        %1551 = vmatpush1.bf16.msra.mxu0 0
        %1552 = vmatprep.subr.bf16.mxu0 0
        %1553 = vmatpush1.bf16.msra.mxu0 0
        %1554 = vmatprep.subr.bf16.mxu0 0
        %1555 = vmatpush1.bf16.msra.mxu0 0
        %1556 = vmatprep.subr.bf16.mxu0 0
        %1557 = vmatpush1.bf16.msra.mxu0 0
        %1558 = vmatprep.subr.bf16.mxu0 0
        %1559 = vmatpush1.bf16.msra.mxu0 0
        %1560 = vmatprep.subr.bf16.mxu0 0
        %1561 = vmatpush1.bf16.msra.mxu0 0
        %1562 = vmatprep.subr.bf16.mxu0 0
        %1563 = vmatpush1.bf16.msra.mxu0 0
        %1564 = vmatprep.subr.bf16.mxu0 0
        %1565 = vmatpush1.bf16.msra.mxu0 0
        %1566 = vmatprep.subr.bf16.mxu0 0
        %1567 = vmatpush1.bf16.msra.mxu0 0
        %1568 = vmatprep.subr.bf16.mxu0 0
        %1569 = vmatpush1.bf16.msra.mxu0 0
        %1570 = vmatprep.subr.bf16.mxu0 0
        %1571 = vmatpush1.bf16.msra.mxu0 0
        %1572 = vmatprep.subr.bf16.mxu0 0
        %1573 = vmatpush1.bf16.msra.mxu0 0
        %1574 = vmatprep.mubr.bf16.mxu0 0
        %1575 = vmatmul.mubr.bf16.gmra.mrb[0].mxu0 %v1540
        %v1576 = vpop.f32.mrb[0].mxu0
        %v1577 = vadd.f32 0.0, %v1576
        %v1578 = vpop.f32.mrb[0].mxu0
        %v1579 = vpop.f32.mrb[0].mxu0
        %v1580 = vpop.f32.mrb[0].mxu0
        %1581 = vdwg.mxu0
        %v1582 = vpack.c.bf16 %v1577, %v1577
        %v1585 = vunpack.c.l.b16 %v834
        %v1586 = vunpack.c.l.b16 %v835
        %v1587 = vpack.c.b16 %v1586, %v1585
        %v1590 = vsel %vm886, %v1582, 0
        %1592 = vmatprep.subr.bf16.mxu0 0
        %1593 = vmatpush1.bf16.msra.mxu0 %v1587
        %1594 = vmatprep.subr.bf16.mxu0 0
        %1595 = vmatpush1.bf16.msra.mxu0 0
        %1596 = vmatprep.subr.bf16.mxu0 0
        %1597 = vmatpush1.bf16.msra.mxu0 0
        %1598 = vmatprep.subr.bf16.mxu0 0
        %1599 = vmatpush1.bf16.msra.mxu0 0
        %1600 = vmatprep.subr.bf16.mxu0 0
        %1601 = vmatpush1.bf16.msra.mxu0 0
        %1602 = vmatprep.subr.bf16.mxu0 0
        %1603 = vmatpush1.bf16.msra.mxu0 0
        %1604 = vmatprep.subr.bf16.mxu0 0
        %1605 = vmatpush1.bf16.msra.mxu0 0
        %1606 = vmatprep.subr.bf16.mxu0 0
        %1607 = vmatpush1.bf16.msra.mxu0 0
        %1608 = vmatprep.subr.bf16.mxu0 0
        %1609 = vmatpush1.bf16.msra.mxu0 0
        %1610 = vmatprep.subr.bf16.mxu0 0
        %1611 = vmatpush1.bf16.msra.mxu0 0
        %1612 = vmatprep.subr.bf16.mxu0 0
        %1613 = vmatpush1.bf16.msra.mxu0 0
        %1614 = vmatprep.subr.bf16.mxu0 0
        %1615 = vmatpush1.bf16.msra.mxu0 0
        %1616 = vmatprep.subr.bf16.mxu0 0
        %1617 = vmatpush1.bf16.msra.mxu0 0
        %1618 = vmatprep.subr.bf16.mxu0 0
        %1619 = vmatpush1.bf16.msra.mxu0 0
        %1620 = vmatprep.subr.bf16.mxu0 0
        %1621 = vmatpush1.bf16.msra.mxu0 0
        %1622 = vmatprep.subr.bf16.mxu0 0
        %1623 = vmatpush1.bf16.msra.mxu0 0
        %1624 = vmatprep.mubr.bf16.mxu0 0
        %1625 = vmatmul.mubr.bf16.gmra.mrb[0].mxu0 %v1590
        %v1626 = vpop.f32.mrb[0].mxu0
        %v1627 = vadd.f32 0.0, %v1626
        %v1628 = vpop.f32.mrb[0].mxu0
        %v1629 = vpop.f32.mrb[0].mxu0
        %v1630 = vpop.f32.mrb[0].mxu0
        %1631 = vdwg.mxu0
        %v1632 = vadd.f32 %v1446, %v1627
        %v1633 = vadd.f32 %v582, %v1632
        %v1634 = vmul.f32 %v1633, %v1633
        %v1635 = vsel %vm584, %v1634, 0.0
        %1636 = vadd.xlane.f32.xlu0 %v1635
        %v1637 = vpop.xlane.xlu0 %1636
        %v1638 = vmul.f32 %v1637, %v588
        %v1639 = vadd.f32 %v1638, 1e-05
        %v1640 = vrsqrt.pop %v1639
        %v1641 = vmul.f32 %v1633, %v1640
        %v1642 = vld [vmem:[#allocation16] sm:$0x1]
        %v1644 = vlaneseq
        %v1645 = vshrl.u32 %v1644, 7
        %v1646 = vsub.s32 0, %v1645
        %v1647 = vrot.slane %v1642, %v1646
        %v1649 = vmul.f32 %v1641, %v1647
        %v1650 = vpack.c.bf16 %v1649, %v1649
        %v1651 = vld [vmem:[#allocation17] sm:$0xff]
        %v1652 = vld [vmem:[#allocation17 + $0x8] sm:$0xff]
        %v1653 = vld [vmem:[#allocation17 + $0x10] sm:$0xff]
        %v1654 = vld [vmem:[#allocation17 + $0x18] sm:$0xff]
        %v1655 = vld [vmem:[#allocation17 + $0x20] sm:$0xff]
        %v1656 = vld [vmem:[#allocation17 + $0x28] sm:$0xff]
        %v1657 = vld [vmem:[#allocation17 + $0x30] sm:$0xff]
        %v1658 = vld [vmem:[#allocation17 + $0x38] sm:$0xff]
        %v1667 = vunpack.c.l.b16 %v1651
        %v1668 = vunpack.c.h.b16 %v1651
        %v1669 = vunpack.c.l.b16 %v1652
        %v1670 = vunpack.c.h.b16 %v1652
        %v1671 = vunpack.c.l.b16 %v1653
        %v1672 = vunpack.c.h.b16 %v1653
        %v1673 = vunpack.c.l.b16 %v1654
        %v1674 = vunpack.c.h.b16 %v1654
        %v1675 = vunpack.c.l.b16 %v1655
        %v1676 = vunpack.c.h.b16 %v1655
        %v1677 = vunpack.c.l.b16 %v1656
        %v1678 = vunpack.c.h.b16 %v1656
        %v1679 = vunpack.c.l.b16 %v1657
        %v1680 = vunpack.c.h.b16 %v1657
        %v1681 = vunpack.c.l.b16 %v1658
        %v1682 = vunpack.c.h.b16 %v1658
        %v1683 = vpack.c.b16 %v1669, %v1667
        %v1684 = vpack.c.b16 %v1670, %v1668
        %v1685 = vpack.c.b16 %v1673, %v1671
        %v1686 = vpack.c.b16 %v1674, %v1672
        %v1687 = vpack.c.b16 %v1677, %v1675
        %v1688 = vpack.c.b16 %v1678, %v1676
        %v1689 = vpack.c.b16 %v1681, %v1679
        %v1690 = vpack.c.b16 %v1682, %v1680
        %v1700 = vsel %vm584, %v1650, 0
        %1702 = vmatprep.subr.bf16.mxu0 %v1684
        %1703 = vmatpush1.bf16.msra.mxu0 %v1683
        %1704 = vmatprep.subr.bf16.mxu0 %v1686
        %1705 = vmatpush1.bf16.msra.mxu0 %v1685
        %1706 = vmatprep.subr.bf16.mxu0 %v1688
        %1707 = vmatpush1.bf16.msra.mxu0 %v1687
        %1708 = vmatprep.subr.bf16.mxu0 %v1690
        %1709 = vmatpush1.bf16.msra.mxu0 %v1689
        %1710 = vmatprep.subr.bf16.mxu0 0
        %1711 = vmatpush1.bf16.msra.mxu0 0
        %1712 = vmatprep.subr.bf16.mxu0 0
        %1713 = vmatpush1.bf16.msra.mxu0 0
        %1714 = vmatprep.subr.bf16.mxu0 0
        %1715 = vmatpush1.bf16.msra.mxu0 0
        %1716 = vmatprep.subr.bf16.mxu0 0
        %1717 = vmatpush1.bf16.msra.mxu0 0
        %1718 = vmatprep.subr.bf16.mxu0 0
        %1719 = vmatpush1.bf16.msra.mxu0 0
        %1720 = vmatprep.subr.bf16.mxu0 0
        %1721 = vmatpush1.bf16.msra.mxu0 0
        %1722 = vmatprep.subr.bf16.mxu0 0
        %1723 = vmatpush1.bf16.msra.mxu0 0
        %1724 = vmatprep.subr.bf16.mxu0 0
        %1725 = vmatpush1.bf16.msra.mxu0 0
        %1726 = vmatprep.subr.bf16.mxu0 0
        %1727 = vmatpush1.bf16.msra.mxu0 0
        %1728 = vmatprep.subr.bf16.mxu0 0
        %1729 = vmatpush1.bf16.msra.mxu0 0
        %1730 = vmatprep.subr.bf16.mxu0 0
        %1731 = vmatpush1.bf16.msra.mxu0 0
        %1732 = vmatprep.subr.bf16.mxu0 0
        %1733 = vmatpush1.bf16.msra.mxu0 0
        %1734 = vmatprep.mubr.bf16.mxu0 0
        %1735 = vmatmul.mubr.bf16.gmra.mrb[0].mxu0 %v1700
        %v1736 = vpop.f32.mrb[0].mxu0
        %v1737 = vadd.f32 0.0, %v1736
        %v1738 = vpop.f32.mrb[0].mxu0
        %v1739 = vadd.f32 0.0, %v1738
        %v1740 = vpop.f32.mrb[0].mxu0
        %v1741 = vpop.f32.mrb[0].mxu0
        %1742 = vdwg.mxu0
        %v1743 = vld [vmem:[#allocation20] sm:$0xff]
        %v1744 = vld [vmem:[#allocation20 + $0x8] sm:$0xff]
        %v1745 = vld [vmem:[#allocation20 + $0x10] sm:$0xff]
        %v1746 = vld [vmem:[#allocation20 + $0x18] sm:$0xff]
        %v1747 = vld [vmem:[#allocation20 + $0x20] sm:$0xff]
        %v1748 = vld [vmem:[#allocation20 + $0x28] sm:$0xff]
        %v1749 = vld [vmem:[#allocation20 + $0x30] sm:$0xff]
        %v1750 = vld [vmem:[#allocation20 + $0x38] sm:$0xff]
        %v1759 = vunpack.c.l.b16 %v1743
        %v1760 = vunpack.c.h.b16 %v1743
        %v1761 = vunpack.c.l.b16 %v1744
        %v1762 = vunpack.c.h.b16 %v1744
        %v1763 = vunpack.c.l.b16 %v1745
        %v1764 = vunpack.c.h.b16 %v1745
        %v1765 = vunpack.c.l.b16 %v1746
        %v1766 = vunpack.c.h.b16 %v1746
        %v1767 = vunpack.c.l.b16 %v1747
        %v1768 = vunpack.c.h.b16 %v1747
        %v1769 = vunpack.c.l.b16 %v1748
        %v1770 = vunpack.c.h.b16 %v1748
        %v1771 = vunpack.c.l.b16 %v1749
        %v1772 = vunpack.c.h.b16 %v1749
        %v1773 = vunpack.c.l.b16 %v1750
        %v1774 = vunpack.c.h.b16 %v1750
        %v1775 = vpack.c.b16 %v1761, %v1759
        %v1776 = vpack.c.b16 %v1762, %v1760
        %v1777 = vpack.c.b16 %v1765, %v1763
        %v1778 = vpack.c.b16 %v1766, %v1764
        %v1779 = vpack.c.b16 %v1769, %v1767
        %v1780 = vpack.c.b16 %v1770, %v1768
        %v1781 = vpack.c.b16 %v1773, %v1771
        %v1782 = vpack.c.b16 %v1774, %v1772
        %1791 = vmatprep.subr.bf16.mxu0 %v1776
        %1792 = vmatpush1.bf16.msra.mxu0 %v1775
        %1793 = vmatprep.subr.bf16.mxu0 %v1778
        %1794 = vmatpush1.bf16.msra.mxu0 %v1777
        %1795 = vmatprep.subr.bf16.mxu0 %v1780
        %1796 = vmatpush1.bf16.msra.mxu0 %v1779
        %1797 = vmatprep.subr.bf16.mxu0 %v1782
        %1798 = vmatpush1.bf16.msra.mxu0 %v1781
        %1799 = vmatprep.subr.bf16.mxu0 0
        %1800 = vmatpush1.bf16.msra.mxu0 0
        %1801 = vmatprep.subr.bf16.mxu0 0
        %1802 = vmatpush1.bf16.msra.mxu0 0
        %1803 = vmatprep.subr.bf16.mxu0 0
        %1804 = vmatpush1.bf16.msra.mxu0 0
        %1805 = vmatprep.subr.bf16.mxu0 0
        %1806 = vmatpush1.bf16.msra.mxu0 0
        %1807 = vmatprep.subr.bf16.mxu0 0
        %1808 = vmatpush1.bf16.msra.mxu0 0
        %1809 = vmatprep.subr.bf16.mxu0 0
        %1810 = vmatpush1.bf16.msra.mxu0 0
        %1811 = vmatprep.subr.bf16.mxu0 0
        %1812 = vmatpush1.bf16.msra.mxu0 0
        %1813 = vmatprep.subr.bf16.mxu0 0
        %1814 = vmatpush1.bf16.msra.mxu0 0
        %1815 = vmatprep.subr.bf16.mxu0 0
        %1816 = vmatpush1.bf16.msra.mxu0 0
        %1817 = vmatprep.subr.bf16.mxu0 0
        %1818 = vmatpush1.bf16.msra.mxu0 0
        %1819 = vmatprep.subr.bf16.mxu0 0
        %1820 = vmatpush1.bf16.msra.mxu0 0
        %1821 = vmatprep.subr.bf16.mxu0 0
        %1822 = vmatpush1.bf16.msra.mxu0 0
        %1823 = vmatprep.mubr.bf16.mxu0 0
        %1824 = vmatmul.mubr.bf16.gmra.mrb[0].mxu0 %v1700
        %v1825 = vpop.f32.mrb[0].mxu0
        %v1826 = vadd.f32 0.0, %v1825
        %v1827 = vpop.f32.mrb[0].mxu0
        %v1828 = vadd.f32 0.0, %v1827
        %v1829 = vpop.f32.mrb[0].mxu0
        %v1830 = vpop.f32.mrb[0].mxu0
        %1831 = vdwg.mxu0
        %v1832 = vxor.u32 %v1737, 2147483648
        %v1833 = vxor.u32 %v1739, 2147483648
        %v1834 = vmul.f32 %v1832, 1.442695
        %v1835 = vpow.pop %v1834
        %v1836 = vmul.f32 %v1833, 1.442695
        %v1837 = vpow.pop %v1836
        %v1838 = vadd.f32 %v1835, 1.0
        %v1839 = vadd.f32 %v1837, 1.0
        %v1840 = vrcp.pop %v1838
        %v1841 = vmul.f32 1.0, %v1840
        %v1842 = vrcp.pop %v1839
        %v1843 = vmul.f32 1.0, %v1842
        %v1844 = vmul.f32 %v1737, %v1841
        %v1845 = vmul.f32 %v1739, %v1843
        %v1846 = vmul.f32 %v1844, %v1826
        %v1847 = vmul.f32 %v1845, %v1828
        %v1848 = vpack.c.bf16 %v1846, %v1846
        %v1849 = vpack.c.bf16 %v1847, %v1847
        %v1850 = vld [vmem:[#allocation19] sm:$0xf]
        %v1851 = vld [vmem:[#allocation19 + $0x4] sm:$0xf]
        %v1852 = vld [vmem:[#allocation19 + $0x8] sm:$0xf]
        %v1853 = vld [vmem:[#allocation19 + $0xc] sm:$0xf]
        %v1854 = vld [vmem:[#allocation19 + $0x10] sm:$0xf]
        %v1855 = vld [vmem:[#allocation19 + $0x14] sm:$0xf]
        %v1856 = vld [vmem:[#allocation19 + $0x18] sm:$0xf]
        %v1857 = vld [vmem:[#allocation19 + $0x1c] sm:$0xf]
        %v1858 = vld [vmem:[#allocation19 + $0x20] sm:$0xf]
        %v1859 = vld [vmem:[#allocation19 + $0x24] sm:$0xf]
        %v1860 = vld [vmem:[#allocation19 + $0x28] sm:$0xf]
        %v1861 = vld [vmem:[#allocation19 + $0x2c] sm:$0xf]
        %v1862 = vld [vmem:[#allocation19 + $0x30] sm:$0xf]
        %v1863 = vld [vmem:[#allocation19 + $0x34] sm:$0xf]
        %v1864 = vld [vmem:[#allocation19 + $0x38] sm:$0xf]
        %v1865 = vld [vmem:[#allocation19 + $0x3c] sm:$0xf]
        %v1866 = vld [vmem:[#allocation19 + $0x40] sm:$0xf]
        %v1867 = vld [vmem:[#allocation19 + $0x44] sm:$0xf]
        %v1868 = vld [vmem:[#allocation19 + $0x48] sm:$0xf]
        %v1869 = vld [vmem:[#allocation19 + $0x4c] sm:$0xf]
        %v1870 = vld [vmem:[#allocation19 + $0x50] sm:$0xf]
        %v1871 = vld [vmem:[#allocation19 + $0x54] sm:$0xf]
        %v1872 = vld [vmem:[#allocation19 + $0x58] sm:$0xf]
        %v1873 = vld [vmem:[#allocation19 + $0x5c] sm:$0xf]
        %v1898 = vunpack.c.l.b16 %v1850
        %v1899 = vunpack.c.l.b16 %v1851
        %v1900 = vunpack.c.l.b16 %v1852
        %v1901 = vunpack.c.l.b16 %v1853
        %v1902 = vunpack.c.l.b16 %v1854
        %v1903 = vunpack.c.l.b16 %v1855
        %v1904 = vunpack.c.l.b16 %v1856
        %v1905 = vunpack.c.l.b16 %v1857
        %v1906 = vunpack.c.l.b16 %v1858
        %v1907 = vunpack.c.l.b16 %v1859
        %v1908 = vunpack.c.l.b16 %v1860
        %v1909 = vunpack.c.l.b16 %v1861
        %v1910 = vunpack.c.l.b16 %v1862
        %v1911 = vunpack.c.l.b16 %v1863
        %v1912 = vunpack.c.l.b16 %v1864
        %v1913 = vunpack.c.l.b16 %v1865
        %v1914 = vunpack.c.l.b16 %v1866
        %v1915 = vunpack.c.l.b16 %v1867
        %v1916 = vunpack.c.l.b16 %v1868
        %v1917 = vunpack.c.l.b16 %v1869
        %v1918 = vunpack.c.l.b16 %v1870
        %v1919 = vunpack.c.l.b16 %v1871
        %v1920 = vunpack.c.l.b16 %v1872
        %v1921 = vunpack.c.l.b16 %v1873
        %v1922 = vpack.c.b16 %v1899, %v1898
        %v1923 = vpack.c.b16 %v1901, %v1900
        %v1924 = vpack.c.b16 %v1903, %v1902
        %v1925 = vpack.c.b16 %v1905, %v1904
        %v1926 = vpack.c.b16 %v1907, %v1906
        %v1927 = vpack.c.b16 %v1909, %v1908
        %v1928 = vpack.c.b16 %v1911, %v1910
        %v1929 = vpack.c.b16 %v1913, %v1912
        %v1930 = vpack.c.b16 %v1915, %v1914
        %v1931 = vpack.c.b16 %v1917, %v1916
        %v1932 = vpack.c.b16 %v1919, %v1918
        %v1933 = vpack.c.b16 %v1921, %v1920
        %v1947 = vsel %vm584, %v1849, 0
        %1949 = vmatprep.subr.bf16.mxu0 0
        %1950 = vmatpush1.bf16.msra.mxu0 %v1922
        %1951 = vmatprep.subr.bf16.mxu0 0
        %1952 = vmatpush1.bf16.msra.mxu0 %v1923
        %1953 = vmatprep.subr.bf16.mxu0 0
        %1954 = vmatpush1.bf16.msra.mxu0 %v1924
        %1955 = vmatprep.subr.bf16.mxu0 0
        %1956 = vmatpush1.bf16.msra.mxu0 %v1925
        %1957 = vmatprep.subr.bf16.mxu0 0
        %1958 = vmatpush1.bf16.msra.mxu0 %v1926
        %1959 = vmatprep.subr.bf16.mxu0 0
        %1960 = vmatpush1.bf16.msra.mxu0 %v1927
        %1961 = vmatprep.subr.bf16.mxu0 0
        %1962 = vmatpush1.bf16.msra.mxu0 %v1928
        %1963 = vmatprep.subr.bf16.mxu0 0
        %1964 = vmatpush1.bf16.msra.mxu0 %v1929
        %1965 = vmatprep.subr.bf16.mxu0 0
        %1966 = vmatpush1.bf16.msra.mxu0 %v1930
        %1967 = vmatprep.subr.bf16.mxu0 0
        %1968 = vmatpush1.bf16.msra.mxu0 %v1931
        %1969 = vmatprep.subr.bf16.mxu0 0
        %1970 = vmatpush1.bf16.msra.mxu0 %v1932
        %1971 = vmatprep.subr.bf16.mxu0 0
        %1972 = vmatpush1.bf16.msra.mxu0 %v1933
        %1973 = vmatprep.subr.bf16.mxu0 0
        %1974 = vmatpush1.bf16.msra.mxu0 0
        %1975 = vmatprep.subr.bf16.mxu0 0
        %1976 = vmatpush1.bf16.msra.mxu0 0
        %1977 = vmatprep.subr.bf16.mxu0 0
        %1978 = vmatpush1.bf16.msra.mxu0 0
        %1979 = vmatprep.subr.bf16.mxu0 0
        %1980 = vmatpush1.bf16.msra.mxu0 0
        %1981 = vmatprep.mubr.bf16.mxu0 %v1947
        %1982 = vmatmul.mubr.bf16.gmra.mrb[0].mxu0 %v1848
        %v1983 = vpop.f32.mrb[0].mxu0
        %v1984 = vadd.f32 0.0, %v1983
        %v1985 = vpop.f32.mrb[0].mxu0
        %v1986 = vpop.f32.mrb[0].mxu0
        %v1987 = vpop.f32.mrb[0].mxu0
        %1988 = vdwg.mxu0
        %v1989 = vadd.f32 %v1633, %v1984
        %1990 = vst.msk [vmem:[%s580] sm:$0xff] %vm584, %v1989
        %s1991 = sand.u32 %s300, 1
        %s1992 = scalar_lea.sflag [#allocation4], %s1991
        %s1993 = sand.u32 %s300, 1
        %s1994 = smul.addr %s1993, 8
        %s1995 = scalar_lea.vmem [#allocation22], %s1994
        // Predicated region
        $region117: #{tpu_custom_call.1} parent=67 // pred_check
          %p1996 = pneg %p310
        $region118: #{tpu_custom_call.1} parent=67 // pred_check_branch
          %1998 = sbr.rel (%p1996) target = $region120
        $region119: #{tpu_custom_call.1} parent=67 // pred_region
          %s2000 = ssub.s32 128, 128
          %2001 = vsyncadd %s1992, %s2000
          %s2002 = smul.addr %s35, 128
          %s2003 = scalar_lea.hbm %s12, %s2002
          %s2005 = sshll.u32 %s1995, 4
          %s2006 = int_to_ptr.vmem [resolvable:$true] %s2005
          %2008 = dma.vmem_to_hbm [thread:$0]  %s2006, 128, %s2003, %s1992
        $region120: #{tpu_custom_call.1} parent=67 // pred_fallthru
          _
      $region68: #{tpu_custom_call.1} parent=5 // pred_fallthru
        _
      %p2009 = scmp.le.s32.totalorder 2, %s30
      // Predicated region
      $region121: #{tpu_custom_call.1} parent=5 // pred_check
        %p2010 = pneg %p2009
      $region122: #{tpu_custom_call.1} parent=5 // pred_check_branch
        %2012 = sbr.rel (%p2010) target = $region124
      $region123: #{tpu_custom_call.1} parent=5 // pred_region
        %s2013 = ssub.s32 %s30, 2
        // Predicated region
        $region125: #{tpu_custom_call.1} parent=123 // pred_check
          %p2014 = pneg %p316
        $region126: #{tpu_custom_call.1} parent=123 // pred_check_branch
          %2016 = sbr.rel (%p2014) target = $region128
        $region127: #{tpu_custom_call.1} parent=123 // pred_region
          %s2017 = sand.u32 %s301, 1
          %s2018 = scalar_lea.sflag [#allocation4], %s2017
          %s2019 = sand.u32 %s301, 1
          %s2020 = smul.addr %s2019, 8
          %s2021 = scalar_lea.vmem [#allocation22], %s2020
          %2022 = dma.done %s2018, 128
        $region128: #{tpu_custom_call.1} parent=123 // pred_fallthru
          _
      $region124: #{tpu_custom_call.1} parent=5 // pred_fallthru
        _
    $region6: #{tpu_custom_call.1} parent=1 // loop_footer
      %s34 = sadd.s32 1, %s30
    $region7: #{tpu_custom_call.1} parent=1 // loop_footer_branch
      %29 = sbr.rel target = $region3
    $region8: #{tpu_custom_call.1} parent=1 // loop_exit
      _
    %2023 = vsyncpa [#allocation3], 1
    %s2024 = scalar_lea.sflag [#allocation3], 1
    %2025 = vsyncpa %s2024, 1
    %2026 = vsyncpa [#allocation6], 1
    %2027 = vsyncpa [#allocation9], 1
    %2028 = vsyncpa [#allocation12], 1
    %2029 = vsyncpa [#allocation15], 1
    %2030 = vsyncpa [#allocation18], 1
    %2031 = vsyncpa [#allocation21], 1
    %2032 = vsyncpa [#allocation4], 1
    %s2033 = scalar_lea.sflag [#allocation4], 1
    %2034 = vsyncpa %s2033, 1

// kernel: tpu_custom_call.1
$region0: #{tpu_custom_call.1}
  #allocation0 [shape = 'u32[]', space=smem, size = 0x4, offset = 0x4, fixed_abs, tag = 'smem constant byte address 0x4 - core index']
  #allocation1 [shape = 'u32[144,128]{1,0:T(1,128)}', space=vmem, size = 0x12000, scoped, tag = 'internal scratch']
  %s0 = inlined_call_operand.hbm [shape: f32[2,8,64], index: 0, kind: input, shape index: {}]
  %s1 = inlined_call_operand.hbm [shape: f32[8,8], index: 1, kind: input, shape index: {}]
  %s2 = inlined_call_operand.hbm [shape: f32[8,8], index: 2, kind: input, shape index: {}]
  %s3 = inlined_call_operand.hbm [shape: f32[1,64], index: 3, kind: input, shape index: {}]
  %s4 = inlined_call_operand.hbm [shape: bf16[64,64], index: 4, kind: input, shape index: {}]
  %s5 = inlined_call_operand.hbm [shape: bf16[64,32], index: 5, kind: input, shape index: {}]
  %s6 = inlined_call_operand.hbm [shape: bf16[64,32], index: 6, kind: input, shape index: {}]
  %s7 = inlined_call_operand.hbm [shape: bf16[64,64], index: 7, kind: input, shape index: {}]
  %s8 = inlined_call_operand.hbm [shape: f32[1,64], index: 8, kind: input, shape index: {}]
  %s9 = inlined_call_operand.hbm [shape: bf16[64,192], index: 9, kind: input, shape index: {}]
  %s10 = inlined_call_operand.hbm [shape: bf16[192,64], index: 10, kind: input, shape index: {}]
  %s11 = inlined_call_operand.hbm [shape: bf16[64,192], index: 11, kind: input, shape index: {}]
  %s12 = inlined_call_operand.hbm [shape: f32[2,8,64], index: 12, kind: output, shape index: {}]
  %s13 = sld [smem:[#allocation0]]
  $region129: #{tpu_custom_call.1} parent=0
    _
  %s15 = ssub.s32 1, %s13
  %s16 = scalar_select 0, %s15, %s13
  $region1: #{tpu_custom_call.1} parent=0
    #allocation2 [shape = 'u8[8192]{0}', space=vmem, size = 0x2000, scoped, tag = 'input window, operand 0']
    #allocation3 [shape = 's32[2]{0}', space=sflag, size = 0x8, scoped, tag = 'scoped memory for tpu_custom_call.1']
    #allocation4 [shape = 's32[2]{0}', space=sflag, size = 0x8, scoped, tag = 'scoped memory for tpu_custom_call.1']
    #allocation5 [shape = 'u8[4096]{0}', space=vmem, size = 0x1000, scoped, tag = 'input window, operand 1, single buffered']
    #allocation6 [shape = 's32[1]{0}', space=sflag, size = 0x4, scoped, tag = 'scoped memory for tpu_custom_call.1']
    #allocation7 [shape = 'u8[4096]{0}', space=vmem, size = 0x1000, scoped, tag = 'input window, operand 2, single buffered']
    #allocation8 [shape = 'u8[512]{0}', space=vmem, size = 0x400, scoped, tag = 'input window, operand 3, single buffered']
    #allocation9 [shape = 's32[1]{0}', space=sflag, size = 0x4, scoped, tag = 'scoped memory for tpu_custom_call.1']
    #allocation10 [shape = 'u8[16384]{0}', space=vmem, size = 0x4000, scoped, tag = 'input window, operand 4, single buffered']
    #allocation11 [shape = 'u8[16384]{0}', space=vmem, size = 0x4000, scoped, tag = 'input window, operand 5, single buffered']
    #allocation12 [shape = 's32[1]{0}', space=sflag, size = 0x4, scoped, tag = 'scoped memory for tpu_custom_call.1']
    #allocation13 [shape = 'u8[16384]{0}', space=vmem, size = 0x4000, scoped, tag = 'input window, operand 6, single buffered']
    #allocation14 [shape = 'u8[16384]{0}', space=vmem, size = 0x4000, scoped, tag = 'input window, operand 7, single buffered']
    #allocation15 [shape = 's32[1]{0}', space=sflag, size = 0x4, scoped, tag = 'scoped memory for tpu_custom_call.1']
    #allocation16 [shape = 'u8[512]{0}', space=vmem, size = 0x400, scoped, tag = 'input window, operand 8, single buffered']
    #allocation17 [shape = 'u8[32768]{0}', space=vmem, size = 0x8000, scoped, tag = 'input window, operand 9, single buffered']
    #allocation18 [shape = 's32[1]{0}', space=sflag, size = 0x4, scoped, tag = 'scoped memory for tpu_custom_call.1']
    #allocation19 [shape = 'u8[49152]{0}', space=vmem, size = 0xc000, scoped, tag = 'input window, operand 10, single buffered']
    #allocation20 [shape = 'u8[32768]{0}', space=vmem, size = 0x8000, scoped, tag = 'input window, operand 11, single buffered']
    #allocation21 [shape = 's32[1]{0}', space=sflag, size = 0x4, scoped, tag = 'scoped memory for tpu_custom_call.1']
    #allocation22 [shape = 'u8[8192]{0}', space=vmem, size = 0x2000, scoped, tag = 'output window, operand 0']
    %17 = vsyncpa [#allocation3], 0
    %s18 = scalar_lea.sflag [#allocation3], 1
    %19 = vsyncpa %s18, 0
    %20 = vsyncpa [#allocation6], 0
    %21 = vsyncpa [#allocation9], 0
    %22 = vsyncpa [#allocation12], 0
    %23 = vsyncpa [#allocation15], 0
    %24 = vsyncpa [#allocation18], 0
    %25 = vsyncpa [#allocation21], 0
    %26 = vsyncpa [#allocation4], 0
    %s27 = scalar_lea.sflag [#allocation4], 1
    %28 = vsyncpa %s27, 0
    loop: start=0, step=1, limit=4
    $region2: #{tpu_custom_call.1} parent=1 // loop_pre_header
      _
    $region3: #{tpu_custom_call.1} parent=1 // loop_header
      %s30 = sphi 0, %s34
      %p31 = scmp.ge.s32.totalorder %s30, 4
      %s40 = sphi 0, %s42
      %s43 = sphi 0, %s40
      %s44 = sphi 0, %s43
      %s60 = sphi 0, %s44
      %s64 = sphi 0, %s64
      %s66 = sphi 0, %s64
      %s67 = sphi 0, %s66
      %s81 = sphi 0, %s67
      %s85 = sphi 0, %s85
      %s87 = sphi 0, %s85
      %s88 = sphi 0, %s87
      %s102 = sphi 0, %s88
      %s106 = sphi 0, %s106
      %s108 = sphi 0, %s106
      %s109 = sphi 0, %s108
      %s123 = sphi 0, %s109
      %s127 = sphi 0, %s127
      %s129 = sphi 0, %s127
      %s130 = sphi 0, %s129
      %s144 = sphi 0, %s130
      %s148 = sphi 0, %s148
      %s150 = sphi 0, %s148
      %s151 = sphi 0, %s150
      %s165 = sphi 0, %s151
      %s169 = sphi 0, %s169
      %s171 = sphi 0, %s169
      %s172 = sphi 0, %s171
      %s186 = sphi 0, %s172
      %s190 = sphi 0, %s190
      %s192 = sphi 0, %s190
      %s193 = sphi 0, %s192
      %s207 = sphi 0, %s193
      %s211 = sphi 0, %s211
      %s213 = sphi 0, %s211
      %s214 = sphi 0, %s213
      %s228 = sphi 0, %s214
      %s232 = sphi 0, %s232
      %s234 = sphi 0, %s232
      %s235 = sphi 0, %s234
      %s249 = sphi 0, %s235
      %s253 = sphi 0, %s253
      %s255 = sphi 0, %s253
      %s256 = sphi 0, %s255
      %s270 = sphi 0, %s256
      %s274 = sphi 0, %s274
      %s276 = sphi 0, %s274
      %s277 = sphi 0, %s276
      %s291 = sphi 0, %s277
      %s297 = sphi 0, %s299
      %s300 = sphi 0, %s297
      %s301 = sphi 0, %s300
      %s317 = sphi 0, %s301
    $region4: #{tpu_custom_call.1} parent=1 // loop_header_branch
      %33 = sbr.rel (%p31) target = $region8
    $region5: #{tpu_custom_call.1} parent=1 // loop_body
      %s35 = ssub.s32 %s30, 1
      %s36 = ssub.s32 %s30, 2
      %s37 = sadd.s32 %s30, 1
      %s38 = ssub.s32 %s30, %s37
      %p39 = scmp.eq.s32.totalorder %s38, 0
      %s41 = sadd.s32 %s40, 1
      %s42 = scalar_select %p39, %s40, %s41
      %p45 = pneg %p39
      %p46 = scmp.eq.s32.totalorder %s30, 1
      %p47 = por %p45, %p46
      %p48 = scmp.ne.s32.totalorder %s40, %s43
      %p49 = scmp.eq.s32.totalorder %s30, 0
      %p50 = por %p48, %p49
      %p51 = scmp.ne.s32.totalorder %s40, %s43
      %p52 = scmp.eq.s32.totalorder %s35, 1
      %p53 = por %p51, %p52
      %p54 = scmp.ne.s32.totalorder %s43, %s44
      %p55 = scmp.eq.s32.totalorder %s35, 0
      %p56 = por %p54, %p55
      %p57 = scmp.ne.s32.totalorder %s43, %s44
      %p58 = scmp.eq.s32.totalorder %s36, 1
      %p59 = por %p57, %p58
      %p61 = scmp.ne.s32.totalorder %s44, %s60
      %p62 = scmp.eq.s32.totalorder %s36, 0
      %p63 = por %p61, %p62
      %s65 = sadd.s32 %s64, 1
      %p68 = scmp.eq.s32.totalorder %s30, 1
      %p69 = scmp.ne.s32.totalorder %s64, %s66
      %p70 = scmp.eq.s32.totalorder %s30, 0
      %p71 = por %p69, %p70
      %p72 = scmp.ne.s32.totalorder %s64, %s66
      %p73 = scmp.eq.s32.totalorder %s35, 1
      %p74 = por %p72, %p73
      %p75 = scmp.ne.s32.totalorder %s66, %s67
      %p76 = scmp.eq.s32.totalorder %s35, 0
      %p77 = por %p75, %p76
      %p78 = scmp.ne.s32.totalorder %s66, %s67
      %p79 = scmp.eq.s32.totalorder %s36, 1
      %p80 = por %p78, %p79
      %p82 = scmp.ne.s32.totalorder %s67, %s81
      %p83 = scmp.eq.s32.totalorder %s36, 0
      %p84 = por %p82, %p83
      %s86 = sadd.s32 %s85, 1
      %p89 = scmp.eq.s32.totalorder %s30, 1
      %p90 = scmp.ne.s32.totalorder %s85, %s87
      %p91 = scmp.eq.s32.totalorder %s30, 0
      %p92 = por %p90, %p91
      %p93 = scmp.ne.s32.totalorder %s85, %s87
      %p94 = scmp.eq.s32.totalorder %s35, 1
      %p95 = por %p93, %p94
      %p96 = scmp.ne.s32.totalorder %s87, %s88
      %p97 = scmp.eq.s32.totalorder %s35, 0
      %p98 = por %p96, %p97
      %p99 = scmp.ne.s32.totalorder %s87, %s88
      %p100 = scmp.eq.s32.totalorder %s36, 1
      %p101 = por %p99, %p100
      %p103 = scmp.ne.s32.totalorder %s88, %s102
      %p104 = scmp.eq.s32.totalorder %s36, 0
      %p105 = por %p103, %p104
      %s107 = sadd.s32 %s106, 1
      %p110 = scmp.eq.s32.totalorder %s30, 1
      %p111 = scmp.ne.s32.totalorder %s106, %s108
      %p112 = scmp.eq.s32.totalorder %s30, 0
      %p113 = por %p111, %p112
      %p114 = scmp.ne.s32.totalorder %s106, %s108
      %p115 = scmp.eq.s32.totalorder %s35, 1
      %p116 = por %p114, %p115
      %p117 = scmp.ne.s32.totalorder %s108, %s109
      %p118 = scmp.eq.s32.totalorder %s35, 0
      %p119 = por %p117, %p118
      %p120 = scmp.ne.s32.totalorder %s108, %s109
      %p121 = scmp.eq.s32.totalorder %s36, 1
      %p122 = por %p120, %p121
      %p124 = scmp.ne.s32.totalorder %s109, %s123
      %p125 = scmp.eq.s32.totalorder %s36, 0
      %p126 = por %p124, %p125
      %s128 = sadd.s32 %s127, 1
      %p131 = scmp.eq.s32.totalorder %s30, 1
      %p132 = scmp.ne.s32.totalorder %s127, %s129
      %p133 = scmp.eq.s32.totalorder %s30, 0
      %p134 = por %p132, %p133
      %p135 = scmp.ne.s32.totalorder %s127, %s129
      %p136 = scmp.eq.s32.totalorder %s35, 1
      %p137 = por %p135, %p136
      %p138 = scmp.ne.s32.totalorder %s129, %s130
      %p139 = scmp.eq.s32.totalorder %s35, 0
      %p140 = por %p138, %p139
      %p141 = scmp.ne.s32.totalorder %s129, %s130
      %p142 = scmp.eq.s32.totalorder %s36, 1
      %p143 = por %p141, %p142
      %p145 = scmp.ne.s32.totalorder %s130, %s144
      %p146 = scmp.eq.s32.totalorder %s36, 0
      %p147 = por %p145, %p146
      %s149 = sadd.s32 %s148, 1
      %p152 = scmp.eq.s32.totalorder %s30, 1
      %p153 = scmp.ne.s32.totalorder %s148, %s150
      %p154 = scmp.eq.s32.totalorder %s30, 0
      %p155 = por %p153, %p154
      %p156 = scmp.ne.s32.totalorder %s148, %s150
      %p157 = scmp.eq.s32.totalorder %s35, 1
      %p158 = por %p156, %p157
      %p159 = scmp.ne.s32.totalorder %s150, %s151
      %p160 = scmp.eq.s32.totalorder %s35, 0
      %p161 = por %p159, %p160
      %p162 = scmp.ne.s32.totalorder %s150, %s151
      %p163 = scmp.eq.s32.totalorder %s36, 1
      %p164 = por %p162, %p163
      %p166 = scmp.ne.s32.totalorder %s151, %s165
      %p167 = scmp.eq.s32.totalorder %s36, 0
      %p168 = por %p166, %p167
      %s170 = sadd.s32 %s169, 1
      %p173 = scmp.eq.s32.totalorder %s30, 1
      %p174 = scmp.ne.s32.totalorder %s169, %s171
      %p175 = scmp.eq.s32.totalorder %s30, 0
      %p176 = por %p174, %p175
      %p177 = scmp.ne.s32.totalorder %s169, %s171
      %p178 = scmp.eq.s32.totalorder %s35, 1
      %p179 = por %p177, %p178
      %p180 = scmp.ne.s32.totalorder %s171, %s172
      %p181 = scmp.eq.s32.totalorder %s35, 0
      %p182 = por %p180, %p181
      %p183 = scmp.ne.s32.totalorder %s171, %s172
      %p184 = scmp.eq.s32.totalorder %s36, 1
      %p185 = por %p183, %p184
      %p187 = scmp.ne.s32.totalorder %s172, %s186
      %p188 = scmp.eq.s32.totalorder %s36, 0
      %p189 = por %p187, %p188
      %s191 = sadd.s32 %s190, 1
      %p194 = scmp.eq.s32.totalorder %s30, 1
      %p195 = scmp.ne.s32.totalorder %s190, %s192
      %p196 = scmp.eq.s32.totalorder %s30, 0
      %p197 = por %p195, %p196
      %p198 = scmp.ne.s32.totalorder %s190, %s192
      %p199 = scmp.eq.s32.totalorder %s35, 1
      %p200 = por %p198, %p199
      %p201 = scmp.ne.s32.totalorder %s192, %s193
      %p202 = scmp.eq.s32.totalorder %s35, 0
      %p203 = por %p201, %p202
      %p204 = scmp.ne.s32.totalorder %s192, %s193
      %p205 = scmp.eq.s32.totalorder %s36, 1
      %p206 = por %p204, %p205
      %p208 = scmp.ne.s32.totalorder %s193, %s207
      %p209 = scmp.eq.s32.totalorder %s36, 0
      %p210 = por %p208, %p209
      %s212 = sadd.s32 %s211, 1
      %p215 = scmp.eq.s32.totalorder %s30, 1
      %p216 = scmp.ne.s32.totalorder %s211, %s213
      %p217 = scmp.eq.s32.totalorder %s30, 0
      %p218 = por %p216, %p217
      %p219 = scmp.ne.s32.totalorder %s211, %s213
      %p220 = scmp.eq.s32.totalorder %s35, 1
      %p221 = por %p219, %p220
      %p222 = scmp.ne.s32.totalorder %s213, %s214
      %p223 = scmp.eq.s32.totalorder %s35, 0
      %p224 = por %p222, %p223
      %p225 = scmp.ne.s32.totalorder %s213, %s214
      %p226 = scmp.eq.s32.totalorder %s36, 1
      %p227 = por %p225, %p226
      %p229 = scmp.ne.s32.totalorder %s214, %s228
      %p230 = scmp.eq.s32.totalorder %s36, 0
      %p231 = por %p229, %p230
      %s233 = sadd.s32 %s232, 1
      %p236 = scmp.eq.s32.totalorder %s30, 1
      %p237 = scmp.ne.s32.totalorder %s232, %s234
      %p238 = scmp.eq.s32.totalorder %s30, 0
      %p239 = por %p237, %p238
      %p240 = scmp.ne.s32.totalorder %s232, %s234
      %p241 = scmp.eq.s32.totalorder %s35, 1
      %p242 = por %p240, %p241
      %p243 = scmp.ne.s32.totalorder %s234, %s235
      %p244 = scmp.eq.s32.totalorder %s35, 0
      %p245 = por %p243, %p244
      %p246 = scmp.ne.s32.totalorder %s234, %s235
      %p247 = scmp.eq.s32.totalorder %s36, 1
      %p248 = por %p246, %p247
      %p250 = scmp.ne.s32.totalorder %s235, %s249
      %p251 = scmp.eq.s32.totalorder %s36, 0
      %p252 = por %p250, %p251
      %s254 = sadd.s32 %s253, 1
      %p257 = scmp.eq.s32.totalorder %s30, 1
      %p258 = scmp.ne.s32.totalorder %s253, %s255
      %p259 = scmp.eq.s32.totalorder %s30, 0
      %p260 = por %p258, %p259
      %p261 = scmp.ne.s32.totalorder %s253, %s255
      %p262 = scmp.eq.s32.totalorder %s35, 1
      %p263 = por %p261, %p262
      %p264 = scmp.ne.s32.totalorder %s255, %s256
      %p265 = scmp.eq.s32.totalorder %s35, 0
      %p266 = por %p264, %p265
      %p267 = scmp.ne.s32.totalorder %s255, %s256
      %p268 = scmp.eq.s32.totalorder %s36, 1
      %p269 = por %p267, %p268
      %p271 = scmp.ne.s32.totalorder %s256, %s270
      %p272 = scmp.eq.s32.totalorder %s36, 0
      %p273 = por %p271, %p272
      %s275 = sadd.s32 %s274, 1
      %p278 = scmp.eq.s32.totalorder %s30, 1
      %p279 = scmp.ne.s32.totalorder %s274, %s276
      %p280 = scmp.eq.s32.totalorder %s30, 0
      %p281 = por %p279, %p280
      %p282 = scmp.ne.s32.totalorder %s274, %s276
      %p283 = scmp.eq.s32.totalorder %s35, 1
      %p284 = por %p282, %p283
      %p285 = scmp.ne.s32.totalorder %s276, %s277
      %p286 = scmp.eq.s32.totalorder %s35, 0
      %p287 = por %p285, %p286
      %p288 = scmp.ne.s32.totalorder %s276, %s277
      %p289 = scmp.eq.s32.totalorder %s36, 1
      %p290 = por %p288, %p289
      %p292 = scmp.ne.s32.totalorder %s277, %s291
      %p293 = scmp.eq.s32.totalorder %s36, 0
      %p294 = por %p292, %p293
      %s295 = ssub.s32 %s30, %s37
      %p296 = scmp.eq.s32.totalorder %s295, 0
      %s298 = sadd.s32 %s297, 1
      %s299 = scalar_select %p296, %s297, %s298
      %p302 = pneg %p296
      %p303 = scmp.eq.s32.totalorder %s30, 1
      %p304 = por %p302, %p303
      %p305 = scmp.ne.s32.totalorder %s297, %s300
      %p306 = scmp.eq.s32.totalorder %s30, 0
      %p307 = por %p305, %p306
      %p308 = scmp.ne.s32.totalorder %s297, %s300
      %p309 = scmp.eq.s32.totalorder %s35, 1
      %p310 = por %p308, %p309
      %p311 = scmp.ne.s32.totalorder %s300, %s301
      %p312 = scmp.eq.s32.totalorder %s35, 0
      %p313 = por %p311, %p312
      %p314 = scmp.ne.s32.totalorder %s300, %s301
      %p315 = scmp.eq.s32.totalorder %s36, 1
      %p316 = por %p314, %p315
      %p318 = scmp.ne.s32.totalorder %s301, %s317
      %p319 = scmp.eq.s32.totalorder %s36, 0
      %p320 = por %p318, %p319
      %p321 = scmp.le.s32.totalorder 1, %s30
      %p322 = scmp.lt.s32.totalorder %s30, 3
      %p323 = pnand %p321, %p322
      %p324 = pneg %p323
      // Predicated region
      $region9: #{tpu_custom_call.1} parent=5 // pred_check
        _
      $region10: #{tpu_custom_call.1} parent=5 // pred_check_branch
        %326 = sbr.rel (%p323) target = $region12
      $region11: #{tpu_custom_call.1} parent=5 // pred_region
        %s327 = ssub.s32 %s30, 1
        // Predicated region
        $region13: #{tpu_custom_call.1} parent=11 // pred_check
          %p328 = pneg %p77
        $region14: #{tpu_custom_call.1} parent=11 // pred_check_branch
          %330 = sbr.rel (%p328) target = $region16
        $region15: #{tpu_custom_call.1} parent=11 // pred_region
          %s332 = ssub.s32 128, 128
          %333 = vsyncadd [#allocation6], %s332
          %s335 = sshll.u32 [#allocation5], 4
          %s336 = int_to_ptr.vmem [resolvable:$true] %s335
          %338 = dma.hbm_to_vmem [thread:$0]  %s1, 128, %s336, [#allocation6]
        $region16: #{tpu_custom_call.1} parent=11 // pred_fallthru
          _
        // Predicated region
        $region17: #{tpu_custom_call.1} parent=11 // pred_check
          %p339 = pneg %p98
        $region18: #{tpu_custom_call.1} parent=11 // pred_check_branch
          %341 = sbr.rel (%p339) target = $region20
        $region19: #{tpu_custom_call.1} parent=11 // pred_region
          %s343 = ssub.s32 128, 128
          %344 = vsyncadd [#allocation6], %s343
          %s346 = sshll.u32 [#allocation7], 4
          %s347 = int_to_ptr.vmem [resolvable:$true] %s346
          %349 = dma.hbm_to_vmem [thread:$0]  %s2, 128, %s347, [#allocation6]
        $region20: #{tpu_custom_call.1} parent=11 // pred_fallthru
          _
        // Predicated region
        $region21: #{tpu_custom_call.1} parent=11 // pred_check
          %p350 = pneg %p119
        $region22: #{tpu_custom_call.1} parent=11 // pred_check_branch
          %352 = sbr.rel (%p350) target = $region24
        $region23: #{tpu_custom_call.1} parent=11 // pred_region
          %s354 = ssub.s32 16, 16
          %355 = vsyncadd [#allocation9], %s354
          %s357 = sshll.u32 [#allocation8], 4
          %s358 = int_to_ptr.vmem [resolvable:$true] %s357
          %360 = dma.hbm_to_vmem [thread:$0]  %s3, 16, %s358, [#allocation9]
        $region24: #{tpu_custom_call.1} parent=11 // pred_fallthru
          _
        // Predicated region
        $region25: #{tpu_custom_call.1} parent=11 // pred_check
          %p361 = pneg %p140
        $region26: #{tpu_custom_call.1} parent=11 // pred_check_branch
          %363 = sbr.rel (%p361) target = $region28
        $region27: #{tpu_custom_call.1} parent=11 // pred_region
          %s365 = ssub.s32 512, 512
          %366 = vsyncadd [#allocation9], %s365
          %s367 = sshll.u32 [#allocation10], 4
          %s368 = int_to_ptr.vmem [resolvable:$true] %s367
          %373 = dma.hbm_to_vmem [thread:$0]  %s4, 512, %s368, [#allocation9], 64, 64, 4
        $region28: #{tpu_custom_call.1} parent=11 // pred_fallthru
          _
        // Predicated region
        $region29: #{tpu_custom_call.1} parent=11 // pred_check
          %p374 = pneg %p161
        $region30: #{tpu_custom_call.1} parent=11 // pred_check_branch
          %376 = sbr.rel (%p374) target = $region32
        $region31: #{tpu_custom_call.1} parent=11 // pred_region
          %s378 = ssub.s32 512, 512
          %379 = vsyncadd [#allocation12], %s378
          %s380 = sshll.u32 [#allocation11], 4
          %s381 = int_to_ptr.vmem [resolvable:$true] %s380
          %386 = dma.hbm_to_vmem [thread:$0]  %s5, 512, %s381, [#allocation12], 64, 64, 4
        $region32: #{tpu_custom_call.1} parent=11 // pred_fallthru
          _
        // Predicated region
        $region33: #{tpu_custom_call.1} parent=11 // pred_check
          %p387 = pneg %p182
        $region34: #{tpu_custom_call.1} parent=11 // pred_check_branch
          %389 = sbr.rel (%p387) target = $region36
        $region35: #{tpu_custom_call.1} parent=11 // pred_region
          %s391 = ssub.s32 512, 512
          %392 = vsyncadd [#allocation12], %s391
          %s393 = sshll.u32 [#allocation13], 4
          %s394 = int_to_ptr.vmem [resolvable:$true] %s393
          %399 = dma.hbm_to_vmem [thread:$0]  %s6, 512, %s394, [#allocation12], 64, 64, 4
        $region36: #{tpu_custom_call.1} parent=11 // pred_fallthru
          _
        // Predicated region
        $region37: #{tpu_custom_call.1} parent=11 // pred_check
          %p400 = pneg %p203
        $region38: #{tpu_custom_call.1} parent=11 // pred_check_branch
          %402 = sbr.rel (%p400) target = $region40
        $region39: #{tpu_custom_call.1} parent=11 // pred_region
          %s404 = ssub.s32 512, 512
          %405 = vsyncadd [#allocation15], %s404
          %s406 = sshll.u32 [#allocation14], 4
          %s407 = int_to_ptr.vmem [resolvable:$true] %s406
          %412 = dma.hbm_to_vmem [thread:$0]  %s7, 512, %s407, [#allocation15], 64, 64, 4
        $region40: #{tpu_custom_call.1} parent=11 // pred_fallthru
          _
        // Predicated region
        $region41: #{tpu_custom_call.1} parent=11 // pred_check
          %p413 = pneg %p224
        $region42: #{tpu_custom_call.1} parent=11 // pred_check_branch
          %415 = sbr.rel (%p413) target = $region44
        $region43: #{tpu_custom_call.1} parent=11 // pred_region
          %s417 = ssub.s32 16, 16
          %418 = vsyncadd [#allocation15], %s417
          %s420 = sshll.u32 [#allocation16], 4
          %s421 = int_to_ptr.vmem [resolvable:$true] %s420
          %423 = dma.hbm_to_vmem [thread:$0]  %s8, 16, %s421, [#allocation15]
        $region44: #{tpu_custom_call.1} parent=11 // pred_fallthru
          _
        // Predicated region
        $region45: #{tpu_custom_call.1} parent=11 // pred_check
          %p424 = pneg %p245
        $region46: #{tpu_custom_call.1} parent=11 // pred_check_branch
          %426 = sbr.rel (%p424) target = $region48
        $region47: #{tpu_custom_call.1} parent=11 // pred_region
          %s428 = ssub.s32 1024, 1024
          %429 = vsyncadd [#allocation18], %s428
          %s430 = sshll.u32 [#allocation17], 4
          %s431 = int_to_ptr.vmem [resolvable:$true] %s430
          %436 = dma.hbm_to_vmem [thread:$0]  %s9, 1024, %s431, [#allocation18], 128, 128, 8
        $region48: #{tpu_custom_call.1} parent=11 // pred_fallthru
          _
        // Predicated region
        $region49: #{tpu_custom_call.1} parent=11 // pred_check
          %p437 = pneg %p266
        $region50: #{tpu_custom_call.1} parent=11 // pred_check_branch
          %439 = sbr.rel (%p437) target = $region52
        $region51: #{tpu_custom_call.1} parent=11 // pred_region
          %s441 = ssub.s32 1536, 1536
          %442 = vsyncadd [#allocation18], %s441
          %s443 = sshll.u32 [#allocation19], 4
          %s444 = int_to_ptr.vmem [resolvable:$true] %s443
          %449 = dma.hbm_to_vmem [thread:$0]  %s10, 1536, %s444, [#allocation18], 64, 64, 4
        $region52: #{tpu_custom_call.1} parent=11 // pred_fallthru
          _
        // Predicated region
        $region53: #{tpu_custom_call.1} parent=11 // pred_check
          %p450 = pneg %p287
        $region54: #{tpu_custom_call.1} parent=11 // pred_check_branch
          %452 = sbr.rel (%p450) target = $region56
        $region55: #{tpu_custom_call.1} parent=11 // pred_region
          %s454 = ssub.s32 1024, 1024
          %455 = vsyncadd [#allocation21], %s454
          %s456 = sshll.u32 [#allocation20], 4
          %s457 = int_to_ptr.vmem [resolvable:$true] %s456
          %462 = dma.hbm_to_vmem [thread:$0]  %s11, 1024, %s457, [#allocation21], 128, 128, 8
        $region56: #{tpu_custom_call.1} parent=11 // pred_fallthru
          _
      $region12: #{tpu_custom_call.1} parent=5 // pred_fallthru
        _
      %p463 = scmp.lt.s32.totalorder %s30, 2
      // Predicated region
      $region57: #{tpu_custom_call.1} parent=5 // pred_check
        %p464 = pneg %p463
      $region58: #{tpu_custom_call.1} parent=5 // pred_check_branch
        %466 = sbr.rel (%p464) target = $region60
      $region59: #{tpu_custom_call.1} parent=5 // pred_region
        // Predicated region
        $region61: #{tpu_custom_call.1} parent=59 // pred_check
          %p467 = pneg %p50
        $region62: #{tpu_custom_call.1} parent=59 // pred_check_branch
          %469 = sbr.rel (%p467) target = $region64
        $region63: #{tpu_custom_call.1} parent=59 // pred_region
          %s470 = sand.u32 %s40, 1
          %s471 = scalar_lea.sflag [#allocation3], %s470
          %s472 = sand.u32 %s40, 1
          %s473 = smul.addr %s472, 8
          %s474 = scalar_lea.vmem [#allocation2], %s473
          %s476 = ssub.s32 128, 128
          %477 = vsyncadd %s471, %s476
          %s478 = smul.addr %s30, 128
          %s479 = scalar_lea.hbm %s0, %s478
          %s481 = sshll.u32 %s474, 4
          %s482 = int_to_ptr.vmem [resolvable:$true] %s481
          %484 = dma.hbm_to_vmem [thread:$0]  %s479, 128, %s482, %s471
        $region64: #{tpu_custom_call.1} parent=59 // pred_fallthru
          _
      $region60: #{tpu_custom_call.1} parent=5 // pred_fallthru
        _
      %p485 = scmp.le.s32.totalorder 1, %s30
      %p486 = scmp.lt.s32.totalorder %s30, 3
      %p487 = pnand %p485, %p486
      %p488 = pneg %p487
      // Predicated region
      $region65: #{tpu_custom_call.1} parent=5 // pred_check
        _
      $region66: #{tpu_custom_call.1} parent=5 // pred_check_branch
        %490 = sbr.rel (%p487) target = $region68
      $region67: #{tpu_custom_call.1} parent=5 // pred_region
        %s491 = ssub.s32 %s30, 1
        %s492 = sand.u32 %s43, 1
        %s493 = scalar_lea.sflag [#allocation3], %s492
        %s494 = sand.u32 %s43, 1
        %s495 = smul.addr %s494, 8
        %s496 = scalar_lea.vmem [#allocation2], %s495
        // Predicated region
        $region69: #{tpu_custom_call.1} parent=67 // pred_check
          %p497 = pneg %p56
        $region70: #{tpu_custom_call.1} parent=67 // pred_check_branch
          %499 = sbr.rel (%p497) target = $region72
        $region71: #{tpu_custom_call.1} parent=67 // pred_region
          %500 = dma.done %s493, 128
        $region72: #{tpu_custom_call.1} parent=67 // pred_fallthru
          _
        // Predicated region
        $region73: #{tpu_custom_call.1} parent=67 // pred_check
          %p501 = pneg %p77
        $region74: #{tpu_custom_call.1} parent=67 // pred_check_branch
          %503 = sbr.rel (%p501) target = $region76
        $region75: #{tpu_custom_call.1} parent=67 // pred_region
          %504 = dma.done [#allocation6], 128
        $region76: #{tpu_custom_call.1} parent=67 // pred_fallthru
          _
        // Predicated region
        $region77: #{tpu_custom_call.1} parent=67 // pred_check
          %p505 = pneg %p98
        $region78: #{tpu_custom_call.1} parent=67 // pred_check_branch
          %507 = sbr.rel (%p505) target = $region80
        $region79: #{tpu_custom_call.1} parent=67 // pred_region
          %508 = dma.done [#allocation6], 128
        $region80: #{tpu_custom_call.1} parent=67 // pred_fallthru
          _
        // Predicated region
        $region81: #{tpu_custom_call.1} parent=67 // pred_check
          %p509 = pneg %p119
        $region82: #{tpu_custom_call.1} parent=67 // pred_check_branch
          %511 = sbr.rel (%p509) target = $region84
        $region83: #{tpu_custom_call.1} parent=67 // pred_region
          %512 = dma.done [#allocation9], 16
        $region84: #{tpu_custom_call.1} parent=67 // pred_fallthru
          _
        // Predicated region
        $region85: #{tpu_custom_call.1} parent=67 // pred_check
          %p513 = pneg %p140
        $region86: #{tpu_custom_call.1} parent=67 // pred_check_branch
          %515 = sbr.rel (%p513) target = $region88
        $region87: #{tpu_custom_call.1} parent=67 // pred_region
          %516 = dma.done [#allocation9], 512
        $region88: #{tpu_custom_call.1} parent=67 // pred_fallthru
          _
        // Predicated region
        $region89: #{tpu_custom_call.1} parent=67 // pred_check
          %p517 = pneg %p161
        $region90: #{tpu_custom_call.1} parent=67 // pred_check_branch
          %519 = sbr.rel (%p517) target = $region92
        $region91: #{tpu_custom_call.1} parent=67 // pred_region
          %520 = dma.done [#allocation12], 512
        $region92: #{tpu_custom_call.1} parent=67 // pred_fallthru
          _
        // Predicated region
        $region93: #{tpu_custom_call.1} parent=67 // pred_check
          %p521 = pneg %p182
        $region94: #{tpu_custom_call.1} parent=67 // pred_check_branch
          %523 = sbr.rel (%p521) target = $region96
        $region95: #{tpu_custom_call.1} parent=67 // pred_region
          %524 = dma.done [#allocation12], 512
        $region96: #{tpu_custom_call.1} parent=67 // pred_fallthru
          _
        // Predicated region
        $region97: #{tpu_custom_call.1} parent=67 // pred_check
          %p525 = pneg %p203
        $region98: #{tpu_custom_call.1} parent=67 // pred_check_branch
          %527 = sbr.rel (%p525) target = $region100
        $region99: #{tpu_custom_call.1} parent=67 // pred_region
          %528 = dma.done [#allocation15], 512
        $region100: #{tpu_custom_call.1} parent=67 // pred_fallthru
          _
        // Predicated region
        $region101: #{tpu_custom_call.1} parent=67 // pred_check
          %p529 = pneg %p224
        $region102: #{tpu_custom_call.1} parent=67 // pred_check_branch
          %531 = sbr.rel (%p529) target = $region104
        $region103: #{tpu_custom_call.1} parent=67 // pred_region
          %532 = dma.done [#allocation15], 16
        $region104: #{tpu_custom_call.1} parent=67 // pred_fallthru
          _
        // Predicated region
        $region105: #{tpu_custom_call.1} parent=67 // pred_check
          %p533 = pneg %p245
        $region106: #{tpu_custom_call.1} parent=67 // pred_check_branch
          %535 = sbr.rel (%p533) target = $region108
        $region107: #{tpu_custom_call.1} parent=67 // pred_region
          %536 = dma.done [#allocation18], 1024
        $region108: #{tpu_custom_call.1} parent=67 // pred_fallthru
          _
        // Predicated region
        $region109: #{tpu_custom_call.1} parent=67 // pred_check
          %p537 = pneg %p266
        $region110: #{tpu_custom_call.1} parent=67 // pred_check_branch
          %539 = sbr.rel (%p537) target = $region112
        $region111: #{tpu_custom_call.1} parent=67 // pred_region
          %540 = dma.done [#allocation18], 1536
        $region112: #{tpu_custom_call.1} parent=67 // pred_fallthru
          _
        // Predicated region
        $region113: #{tpu_custom_call.1} parent=67 // pred_check
          %p541 = pneg %p287
        $region114: #{tpu_custom_call.1} parent=67 // pred_check_branch
          %543 = sbr.rel (%p541) target = $region116
        $region115: #{tpu_custom_call.1} parent=67 // pred_region
          %544 = dma.done [#allocation21], 1024
        $region116: #{tpu_custom_call.1} parent=67 // pred_fallthru
          _
        %s545 = sand.u32 %s43, 1
        %s546 = scalar_lea.sflag [#allocation3], %s545
        %s547 = sand.u32 %s43, 1
        %s548 = smul.addr %s547, 8
        %s549 = scalar_lea.vmem [#allocation2], %s548
        %p550 = pneg %p56
        %p551 = pneg %p53
        %p552 = pneg %p77
        %p553 = pneg %p74
        %p554 = pneg %p98
        %p555 = pneg %p95
        %p556 = pneg %p119
        %p557 = pneg %p116
        %p558 = pneg %p140
        %p559 = pneg %p137
        %p560 = pneg %p161
        %p561 = pneg %p158
        %p562 = pneg %p182
        %p563 = pneg %p179
        %p564 = pneg %p203
        %p565 = pneg %p200
        %p566 = pneg %p224
        %p567 = pneg %p221
        %p568 = pneg %p245
        %p569 = pneg %p242
        %p570 = pneg %p266
        %p571 = pneg %p263
        %p572 = pneg %p287
        %p573 = pneg %p284
        %p574 = pneg %p313
        %p575 = pneg %p310
        %s576 = sand.u32 %s300, 1
        %s577 = scalar_lea.sflag [#allocation4], %s576
        %s578 = sand.u32 %s300, 1
        %s579 = smul.addr %s578, 8
        %s580 = scalar_lea.vmem [#allocation22], %s579
        %v582 = vld [vmem:[%s496] sm:$0xff]
        %v583 = vmul.f32 %v582, %v582
        %vm584 = vcmask 523264
        %v585 = vsel %vm584, %v583, 0.0
        %586 = vadd.xlane.f32.xlu0 %v585
        %v587 = vpop.xlane.xlu0 %586
        %v588 = vrcp.pop 64.0
        %v589 = vmul.f32 %v587, %v588
        %v590 = vadd.f32 %v589, 1e-05
        %v591 = vrsqrt.pop %v590
        %v592 = vmul.f32 %v582, %v591
        %v593 = vld [vmem:[#allocation8] sm:$0x1]
        %v595 = vlaneseq
        %v596 = vshrl.u32 %v595, 7
        %v597 = vsub.s32 0, %v596
        %v598 = vrot.slane %v593, %v597
        %v600 = vmul.f32 %v592, %v598
        %v601 = vpack.c.bf16 %v600, %v600
        %v602 = vld [vmem:[#allocation10] sm:$0xf]
        %v603 = vld [vmem:[#allocation10 + $0x4] sm:$0xf]
        %v604 = vld [vmem:[#allocation10 + $0x8] sm:$0xf]
        %v605 = vld [vmem:[#allocation10 + $0xc] sm:$0xf]
        %v606 = vld [vmem:[#allocation10 + $0x10] sm:$0xf]
        %v607 = vld [vmem:[#allocation10 + $0x14] sm:$0xf]
        %v608 = vld [vmem:[#allocation10 + $0x18] sm:$0xf]
        %v609 = vld [vmem:[#allocation10 + $0x1c] sm:$0xf]
        %v618 = vunpack.c.l.b16 %v602
        %v619 = vunpack.c.l.b16 %v603
        %v620 = vunpack.c.l.b16 %v604
        %v621 = vunpack.c.l.b16 %v605
        %v622 = vunpack.c.l.b16 %v606
        %v623 = vunpack.c.l.b16 %v607
        %v624 = vunpack.c.l.b16 %v608
        %v625 = vunpack.c.l.b16 %v609
        %v626 = vpack.c.b16 %v619, %v618
        %v627 = vpack.c.b16 %v621, %v620
        %v628 = vpack.c.b16 %v623, %v622
        %v629 = vpack.c.b16 %v625, %v624
        %v635 = vsel %vm584, %v601, 0
        %637 = vmatprep.subr.bf16.mxu0 0
        %638 = vmatpush1.bf16.msra.mxu0 %v626
        %639 = vmatprep.subr.bf16.mxu0 0
        %640 = vmatpush1.bf16.msra.mxu0 %v627
        %641 = vmatprep.subr.bf16.mxu0 0
        %642 = vmatpush1.bf16.msra.mxu0 %v628
        %643 = vmatprep.subr.bf16.mxu0 0
        %644 = vmatpush1.bf16.msra.mxu0 %v629
        %645 = vmatprep.subr.bf16.mxu0 0
        %646 = vmatpush1.bf16.msra.mxu0 0
        %647 = vmatprep.subr.bf16.mxu0 0
        %648 = vmatpush1.bf16.msra.mxu0 0
        %649 = vmatprep.subr.bf16.mxu0 0
        %650 = vmatpush1.bf16.msra.mxu0 0
        %651 = vmatprep.subr.bf16.mxu0 0
        %652 = vmatpush1.bf16.msra.mxu0 0
        %653 = vmatprep.subr.bf16.mxu0 0
        %654 = vmatpush1.bf16.msra.mxu0 0
        %655 = vmatprep.subr.bf16.mxu0 0
        %656 = vmatpush1.bf16.msra.mxu0 0
        %657 = vmatprep.subr.bf16.mxu0 0
        %658 = vmatpush1.bf16.msra.mxu0 0
        %659 = vmatprep.subr.bf16.mxu0 0
        %660 = vmatpush1.bf16.msra.mxu0 0
        %661 = vmatprep.subr.bf16.mxu0 0
        %662 = vmatpush1.bf16.msra.mxu0 0
        %663 = vmatprep.subr.bf16.mxu0 0
        %664 = vmatpush1.bf16.msra.mxu0 0
        %665 = vmatprep.subr.bf16.mxu0 0
        %666 = vmatpush1.bf16.msra.mxu0 0
        %667 = vmatprep.subr.bf16.mxu0 0
        %668 = vmatpush1.bf16.msra.mxu0 0
        %669 = vmatprep.mubr.bf16.mxu0 0
        %670 = vmatmul.mubr.bf16.gmra.mrb[0].mxu0 %v635
        %v671 = vpop.f32.mrb[0].mxu0
        %v672 = vadd.f32 0.0, %v671
        %v673 = vpop.f32.mrb[0].mxu0
        %v674 = vpop.f32.mrb[0].mxu0
        %v675 = vpop.f32.mrb[0].mxu0
        %676 = vdwg.mxu0
        %v677 = vld [vmem:[#allocation11] sm:$0xf]
        %v678 = vld [vmem:[#allocation11 + $0x4] sm:$0xf]
        %v679 = vld [vmem:[#allocation11 + $0x8] sm:$0xf]
        %v680 = vld [vmem:[#allocation11 + $0xc] sm:$0xf]
        %v681 = vld [vmem:[#allocation11 + $0x10] sm:$0xf]
        %v682 = vld [vmem:[#allocation11 + $0x14] sm:$0xf]
        %v683 = vld [vmem:[#allocation11 + $0x18] sm:$0xf]
        %v684 = vld [vmem:[#allocation11 + $0x1c] sm:$0xf]
        %v693 = vunpack.c.l.b16 %v677
        %v694 = vunpack.c.l.b16 %v678
        %v695 = vunpack.c.l.b16 %v679
        %v696 = vunpack.c.l.b16 %v680
        %v697 = vunpack.c.l.b16 %v681
        %v698 = vunpack.c.l.b16 %v682
        %v699 = vunpack.c.l.b16 %v683
        %v700 = vunpack.c.l.b16 %v684
        %v701 = vpack.c.b16 %v694, %v693
        %v702 = vpack.c.b16 %v696, %v695
        %v703 = vpack.c.b16 %v698, %v697
        %v704 = vpack.c.b16 %v700, %v699
        %709 = vmatprep.subr.bf16.mxu0 0
        %710 = vmatpush1.bf16.msra.mxu0 %v701
        %711 = vmatprep.subr.bf16.mxu0 0
        %712 = vmatpush1.bf16.msra.mxu0 %v702
        %713 = vmatprep.subr.bf16.mxu0 0
        %714 = vmatpush1.bf16.msra.mxu0 %v703
        %715 = vmatprep.subr.bf16.mxu0 0
        %716 = vmatpush1.bf16.msra.mxu0 %v704
        %717 = vmatprep.subr.bf16.mxu0 0
        %718 = vmatpush1.bf16.msra.mxu0 0
        %719 = vmatprep.subr.bf16.mxu0 0
        %720 = vmatpush1.bf16.msra.mxu0 0
        %721 = vmatprep.subr.bf16.mxu0 0
        %722 = vmatpush1.bf16.msra.mxu0 0
        %723 = vmatprep.subr.bf16.mxu0 0
        %724 = vmatpush1.bf16.msra.mxu0 0
        %725 = vmatprep.subr.bf16.mxu0 0
        %726 = vmatpush1.bf16.msra.mxu0 0
        %727 = vmatprep.subr.bf16.mxu0 0
        %728 = vmatpush1.bf16.msra.mxu0 0
        %729 = vmatprep.subr.bf16.mxu0 0
        %730 = vmatpush1.bf16.msra.mxu0 0
        %731 = vmatprep.subr.bf16.mxu0 0
        %732 = vmatpush1.bf16.msra.mxu0 0
        %733 = vmatprep.subr.bf16.mxu0 0
        %734 = vmatpush1.bf16.msra.mxu0 0
        %735 = vmatprep.subr.bf16.mxu0 0
        %736 = vmatpush1.bf16.msra.mxu0 0
        %737 = vmatprep.subr.bf16.mxu0 0
        %738 = vmatpush1.bf16.msra.mxu0 0
        %739 = vmatprep.subr.bf16.mxu0 0
        %740 = vmatpush1.bf16.msra.mxu0 0
        %741 = vmatprep.mubr.bf16.mxu0 0
        %742 = vmatmul.mubr.bf16.gmra.mrb[0].mxu0 %v635
        %v743 = vpop.f32.mrb[0].mxu0
        %v744 = vadd.f32 0.0, %v743
        %v745 = vpop.f32.mrb[0].mxu0
        %v746 = vpop.f32.mrb[0].mxu0
        %v747 = vpop.f32.mrb[0].mxu0
        %748 = vdwg.mxu0
        %v749 = vld [vmem:[#allocation13] sm:$0xf]
        %v750 = vld [vmem:[#allocation13 + $0x4] sm:$0xf]
        %v751 = vld [vmem:[#allocation13 + $0x8] sm:$0xf]
        %v752 = vld [vmem:[#allocation13 + $0xc] sm:$0xf]
        %v753 = vld [vmem:[#allocation13 + $0x10] sm:$0xf]
        %v754 = vld [vmem:[#allocation13 + $0x14] sm:$0xf]
        %v755 = vld [vmem:[#allocation13 + $0x18] sm:$0xf]
        %v756 = vld [vmem:[#allocation13 + $0x1c] sm:$0xf]
        %v765 = vunpack.c.l.b16 %v749
        %v766 = vunpack.c.l.b16 %v750
        %v767 = vunpack.c.l.b16 %v751
        %v768 = vunpack.c.l.b16 %v752
        %v769 = vunpack.c.l.b16 %v753
        %v770 = vunpack.c.l.b16 %v754
        %v771 = vunpack.c.l.b16 %v755
        %v772 = vunpack.c.l.b16 %v756
        %v773 = vpack.c.b16 %v766, %v765
        %v774 = vpack.c.b16 %v768, %v767
        %v775 = vpack.c.b16 %v770, %v769
        %v776 = vpack.c.b16 %v772, %v771
        %781 = vmatprep.subr.bf16.mxu0 0
        %782 = vmatpush1.bf16.msra.mxu0 %v773
        %783 = vmatprep.subr.bf16.mxu0 0
        %784 = vmatpush1.bf16.msra.mxu0 %v774
        %785 = vmatprep.subr.bf16.mxu0 0
        %786 = vmatpush1.bf16.msra.mxu0 %v775
        %787 = vmatprep.subr.bf16.mxu0 0
        %788 = vmatpush1.bf16.msra.mxu0 %v776
        %789 = vmatprep.subr.bf16.mxu0 0
        %790 = vmatpush1.bf16.msra.mxu0 0
        %791 = vmatprep.subr.bf16.mxu0 0
        %792 = vmatpush1.bf16.msra.mxu0 0
        %793 = vmatprep.subr.bf16.mxu0 0
        %794 = vmatpush1.bf16.msra.mxu0 0
        %795 = vmatprep.subr.bf16.mxu0 0
        %796 = vmatpush1.bf16.msra.mxu0 0
        %797 = vmatprep.subr.bf16.mxu0 0
        %798 = vmatpush1.bf16.msra.mxu0 0
        %799 = vmatprep.subr.bf16.mxu0 0
        %800 = vmatpush1.bf16.msra.mxu0 0
        %801 = vmatprep.subr.bf16.mxu0 0
        %802 = vmatpush1.bf16.msra.mxu0 0
        %803 = vmatprep.subr.bf16.mxu0 0
        %804 = vmatpush1.bf16.msra.mxu0 0
        %805 = vmatprep.subr.bf16.mxu0 0
        %806 = vmatpush1.bf16.msra.mxu0 0
        %807 = vmatprep.subr.bf16.mxu0 0
        %808 = vmatpush1.bf16.msra.mxu0 0
        %809 = vmatprep.subr.bf16.mxu0 0
        %810 = vmatpush1.bf16.msra.mxu0 0
        %811 = vmatprep.subr.bf16.mxu0 0
        %812 = vmatpush1.bf16.msra.mxu0 0
        %813 = vmatprep.mubr.bf16.mxu0 0
        %814 = vmatmul.mubr.bf16.gmra.mrb[0].mxu0 %v635
        %v815 = vpop.f32.mrb[0].mxu0
        %v816 = vadd.f32 0.0, %v815
        %v817 = vpop.f32.mrb[0].mxu0
        %v818 = vpop.f32.mrb[0].mxu0
        %v819 = vpop.f32.mrb[0].mxu0
        %820 = vdwg.mxu0
        %v821 = vld [vmem:[#allocation5] sm:$0xff]
        %v822 = vld [vmem:[#allocation7] sm:$0xff]
        %v823 = vlaneseq
        %v824 = vshrl.u32 %v823, 7
        %v825 = vlaneseq
        %v826 = vand.u32 %v825, 127
        %vm827 = vcmp.ge.s32.totalorder %v824, %v826
        %v828 = vld [vmem:[#allocation14] sm:$0xf]
        %v829 = vld [vmem:[#allocation14 + $0x4] sm:$0xf]
        %v830 = vld [vmem:[#allocation14 + $0x8] sm:$0xf]
        %v831 = vld [vmem:[#allocation14 + $0xc] sm:$0xf]
        %v832 = vld [vmem:[#allocation14 + $0x10] sm:$0xf]
        %v833 = vld [vmem:[#allocation14 + $0x14] sm:$0xf]
        %v834 = vld [vmem:[#allocation14 + $0x18] sm:$0xf]
        %v835 = vld [vmem:[#allocation14 + $0x1c] sm:$0xf]
        %v836 = vmul.f32 %v744, %v821
        %838 = vrot.lane.b32.xlu0 %v822, 8
        %v839 = vpop.permute.xlu0 %838
        %v841 = vmul.f32 %v744, %v839
        %843 = vrot.lane.b32.xlu0 %v841, 120
        %v844 = vpop.permute.xlu0 %843
        %v846 = vsub.f32 %v836, %v844
        %v847 = vmul.f32 %v744, %v822
        %849 = vrot.lane.b32.xlu0 %v821, 8
        %v850 = vpop.permute.xlu0 %849
        %v852 = vmul.f32 %v744, %v850
        %854 = vrot.lane.b32.xlu0 %v852, 120
        %v855 = vpop.permute.xlu0 %854
        %v857 = vadd.f32 %v847, %v855
        %859 = vrot.lane.b32.xlu0 %v857, 8
        %v860 = vpop.permute.xlu0 %859
        %vm862 = vcmask 64512
        %v863 = vsel %vm862, %v846, %v860
        %v864 = vpack.c.bf16 %v863, %v863
        %v865 = vpack.c.bf16 %v816, %v816
        %v866 = vmul.f32 %v672, %v821
        %v867 = vmul.f32 %v672, %v839
        %869 = vrot.lane.b32.xlu0 %v867, 120
        %v870 = vpop.permute.xlu0 %869
        %v872 = vsub.f32 %v866, %v870
        %v873 = vmul.f32 %v672, %v822
        %v874 = vmul.f32 %v672, %v850
        %876 = vrot.lane.b32.xlu0 %v874, 120
        %v877 = vpop.permute.xlu0 %876
        %v879 = vadd.f32 %v873, %v877
        %881 = vrot.lane.b32.xlu0 %v879, 8
        %v882 = vpop.permute.xlu0 %881
        %v884 = vsel %vm862, %v872, %v882
        %v885 = vpack.c.bf16 %v884, %v884
        %vm886 = vcmask 130048
        %v888 = vsel %vm886, %v885, 0
        %v891 = vsel %vm886, %v864, 0
        %893 = vmatprep.subr.bf16.mxu0 0
        %894 = vmatpush1.bf16.xpose.msra.mxu0 %v891
        %895 = vmatprep.subr.bf16.mxu0 0
        %896 = vmatpush1.bf16.xpose.msra.mxu0 0
        %897 = vmatprep.subr.bf16.mxu0 0
        %898 = vmatpush1.bf16.xpose.msra.mxu0 0
        %899 = vmatprep.subr.bf16.mxu0 0
        %900 = vmatpush1.bf16.xpose.msra.mxu0 0
        %901 = vmatprep.subr.bf16.mxu0 0
        %902 = vmatpush1.bf16.xpose.msra.mxu0 0
        %903 = vmatprep.subr.bf16.mxu0 0
        %904 = vmatpush1.bf16.xpose.msra.mxu0 0
        %905 = vmatprep.subr.bf16.mxu0 0
        %906 = vmatpush1.bf16.xpose.msra.mxu0 0
        %907 = vmatprep.subr.bf16.mxu0 0
        %908 = vmatpush1.bf16.xpose.msra.mxu0 0
        %909 = vmatprep.subr.bf16.mxu0 0
        %910 = vmatpush1.bf16.xpose.msra.mxu0 0
        %911 = vmatprep.subr.bf16.mxu0 0
        %912 = vmatpush1.bf16.xpose.msra.mxu0 0
        %913 = vmatprep.subr.bf16.mxu0 0
        %914 = vmatpush1.bf16.xpose.msra.mxu0 0
        %915 = vmatprep.subr.bf16.mxu0 0
        %916 = vmatpush1.bf16.xpose.msra.mxu0 0
        %917 = vmatprep.subr.bf16.mxu0 0
        %918 = vmatpush1.bf16.xpose.msra.mxu0 0
        %919 = vmatprep.subr.bf16.mxu0 0
        %920 = vmatpush1.bf16.xpose.msra.mxu0 0
        %921 = vmatprep.subr.bf16.mxu0 0
        %922 = vmatpush1.bf16.xpose.msra.mxu0 0
        %923 = vmatprep.subr.bf16.mxu0 0
        %924 = vmatpush1.bf16.xpose.msra.mxu0 0
        %925 = vmatprep.mubr.bf16.mxu0 0
        %926 = vmatmul.mubr.bf16.gmra.mrb[0].mxu0 %v888
        %v927 = vpop.f32.mrb[0].mxu0
        %v928 = vadd.f32 0.0, %v927
        %v929 = vpop.f32.mrb[0].mxu0
        %v930 = vpop.f32.mrb[0].mxu0
        %v931 = vpop.f32.mrb[0].mxu0
        %932 = vdwg.mxu0
        %v933 = vsel %vm827, %v928, -inf
        %v934 = vsel %vm862, %v933, -inf
        %935 = vmax.xlane.f32.xlu0 %v934
        %v936 = vpop.xlane.xlu0 %935
        %v937 = vsub.f32 %v933, %v936
        %v938 = vmul.f32 %v937, 1.442695
        %v939 = vpow.pop %v938
        %v940 = vsel %vm862, %v939, 0.0
        %941 = vadd.xlane.f32.xlu0 %v940
        %v942 = vpop.xlane.xlu0 %941
        %v943 = vrcp.pop %v942
        %v944 = vmul.f32 %v939, %v943
        %v945 = vpack.c.bf16 %v944, %v944
        %v947 = vsel %vm862, %v945, 0
        %vm949 = vcmask 1043456
        %v951 = vsel %vm949, %v865, 0
        %953 = vmatprep.subr.bf16.mxu0 0
        %954 = vmatpush1.bf16.msra.mxu0 %v951
        %955 = vmatprep.subr.bf16.mxu0 0
        %956 = vmatpush1.bf16.msra.mxu0 0
        %957 = vmatprep.subr.bf16.mxu0 0
        %958 = vmatpush1.bf16.msra.mxu0 0
        %959 = vmatprep.subr.bf16.mxu0 0
        %960 = vmatpush1.bf16.msra.mxu0 0
        %961 = vmatprep.subr.bf16.mxu0 0
        %962 = vmatpush1.bf16.msra.mxu0 0
        %963 = vmatprep.subr.bf16.mxu0 0
        %964 = vmatpush1.bf16.msra.mxu0 0
        %965 = vmatprep.subr.bf16.mxu0 0
        %966 = vmatpush1.bf16.msra.mxu0 0
        %967 = vmatprep.subr.bf16.mxu0 0
        %968 = vmatpush1.bf16.msra.mxu0 0
        %969 = vmatprep.subr.bf16.mxu0 0
        %970 = vmatpush1.bf16.msra.mxu0 0
        %971 = vmatprep.subr.bf16.mxu0 0
        %972 = vmatpush1.bf16.msra.mxu0 0
        %973 = vmatprep.subr.bf16.mxu0 0
        %974 = vmatpush1.bf16.msra.mxu0 0
        %975 = vmatprep.subr.bf16.mxu0 0
        %976 = vmatpush1.bf16.msra.mxu0 0
        %977 = vmatprep.subr.bf16.mxu0 0
        %978 = vmatpush1.bf16.msra.mxu0 0
        %979 = vmatprep.subr.bf16.mxu0 0
        %980 = vmatpush1.bf16.msra.mxu0 0
        %981 = vmatprep.subr.bf16.mxu0 0
        %982 = vmatpush1.bf16.msra.mxu0 0
        %983 = vmatprep.subr.bf16.mxu0 0
        %984 = vmatpush1.bf16.msra.mxu0 0
        %985 = vmatprep.mubr.bf16.mxu0 0
        %986 = vmatmul.mubr.bf16.gmra.mrb[0].mxu0 %v947
        %v987 = vpop.f32.mrb[0].mxu0
        %v988 = vadd.f32 0.0, %v987
        %v989 = vpop.f32.mrb[0].mxu0
        %v990 = vpop.f32.mrb[0].mxu0
        %v991 = vpop.f32.mrb[0].mxu0
        %992 = vdwg.mxu0
        %v993 = vpack.c.bf16 %v988, %v988
        %994 = vrot.lane.b32.xlu0 %v821, 16
        %v995 = vpop.permute.xlu0 %994
        %v997 = vmul.f32 %v672, %v995
        %998 = vrot.lane.b32.xlu0 %v822, 24
        %v999 = vpop.permute.xlu0 %998
        %v1001 = vmul.f32 %v672, %v999
        %1003 = vrot.lane.b32.xlu0 %v1001, 120
        %v1004 = vpop.permute.xlu0 %1003
        %v1006 = vsub.f32 %v997, %v1004
        %1007 = vrot.lane.b32.xlu0 %v822, 16
        %v1008 = vpop.permute.xlu0 %1007
        %v1010 = vmul.f32 %v672, %v1008
        %1011 = vrot.lane.b32.xlu0 %v821, 24
        %v1012 = vpop.permute.xlu0 %1011
        %v1014 = vmul.f32 %v672, %v1012
        %1016 = vrot.lane.b32.xlu0 %v1014, 120
        %v1017 = vpop.permute.xlu0 %1016
        %v1019 = vadd.f32 %v1010, %v1017
        %1021 = vrot.lane.b32.xlu0 %v1006, 112
        %v1022 = vpop.permute.xlu0 %1021
        %1025 = vrot.lane.b32.xlu0 %v1019, 120
        %v1026 = vpop.permute.xlu0 %1025
        %v1028 = vsel %vm862, %v1022, %v1026
        %v1029 = vpack.c.bf16 %v1028, %v1028
        %v1031 = vsel %vm886, %v1029, 0
        %1033 = vmatprep.subr.bf16.mxu0 0
        %1034 = vmatpush1.bf16.xpose.msra.mxu0 %v891
        %1035 = vmatprep.subr.bf16.mxu0 0
        %1036 = vmatpush1.bf16.xpose.msra.mxu0 0
        %1037 = vmatprep.subr.bf16.mxu0 0
        %1038 = vmatpush1.bf16.xpose.msra.mxu0 0
        %1039 = vmatprep.subr.bf16.mxu0 0
        %1040 = vmatpush1.bf16.xpose.msra.mxu0 0
        %1041 = vmatprep.subr.bf16.mxu0 0
        %1042 = vmatpush1.bf16.xpose.msra.mxu0 0
        %1043 = vmatprep.subr.bf16.mxu0 0
        %1044 = vmatpush1.bf16.xpose.msra.mxu0 0
        %1045 = vmatprep.subr.bf16.mxu0 0
        %1046 = vmatpush1.bf16.xpose.msra.mxu0 0
        %1047 = vmatprep.subr.bf16.mxu0 0
        %1048 = vmatpush1.bf16.xpose.msra.mxu0 0
        %1049 = vmatprep.subr.bf16.mxu0 0
        %1050 = vmatpush1.bf16.xpose.msra.mxu0 0
        %1051 = vmatprep.subr.bf16.mxu0 0
        %1052 = vmatpush1.bf16.xpose.msra.mxu0 0
        %1053 = vmatprep.subr.bf16.mxu0 0
        %1054 = vmatpush1.bf16.xpose.msra.mxu0 0
        %1055 = vmatprep.subr.bf16.mxu0 0
        %1056 = vmatpush1.bf16.xpose.msra.mxu0 0
        %1057 = vmatprep.subr.bf16.mxu0 0
        %1058 = vmatpush1.bf16.xpose.msra.mxu0 0
        %1059 = vmatprep.subr.bf16.mxu0 0
        %1060 = vmatpush1.bf16.xpose.msra.mxu0 0
        %1061 = vmatprep.subr.bf16.mxu0 0
        %1062 = vmatpush1.bf16.xpose.msra.mxu0 0
        %1063 = vmatprep.subr.bf16.mxu0 0
        %1064 = vmatpush1.bf16.xpose.msra.mxu0 0
        %1065 = vmatprep.mubr.bf16.mxu0 0
        %1066 = vmatmul.mubr.bf16.gmra.mrb[0].mxu0 %v1031
        %v1067 = vpop.f32.mrb[0].mxu0
        %v1068 = vadd.f32 0.0, %v1067
        %v1069 = vpop.f32.mrb[0].mxu0
        %v1070 = vpop.f32.mrb[0].mxu0
        %v1071 = vpop.f32.mrb[0].mxu0
        %1072 = vdwg.mxu0
        %v1073 = vsel %vm827, %v1068, -inf
        %v1074 = vsel %vm862, %v1073, -inf
        %1075 = vmax.xlane.f32.xlu0 %v1074
        %v1076 = vpop.xlane.xlu0 %1075
        %v1077 = vsub.f32 %v1073, %v1076
        %v1078 = vmul.f32 %v1077, 1.442695
        %v1079 = vpow.pop %v1078
        %v1080 = vsel %vm862, %v1079, 0.0
        %1081 = vadd.xlane.f32.xlu0 %v1080
        %v1082 = vpop.xlane.xlu0 %1081
        %v1083 = vrcp.pop %v1082
        %v1084 = vmul.f32 %v1079, %v1083
        %v1085 = vpack.c.bf16 %v1084, %v1084
        %v1087 = vsel %vm862, %v1085, 0
        %1089 = vmatprep.subr.bf16.mxu0 0
        %1090 = vmatpush1.bf16.msra.mxu0 %v951
        %1091 = vmatprep.subr.bf16.mxu0 0
        %1092 = vmatpush1.bf16.msra.mxu0 0
        %1093 = vmatprep.subr.bf16.mxu0 0
        %1094 = vmatpush1.bf16.msra.mxu0 0
        %1095 = vmatprep.subr.bf16.mxu0 0
        %1096 = vmatpush1.bf16.msra.mxu0 0
        %1097 = vmatprep.subr.bf16.mxu0 0
        %1098 = vmatpush1.bf16.msra.mxu0 0
        %1099 = vmatprep.subr.bf16.mxu0 0
        %1100 = vmatpush1.bf16.msra.mxu0 0
        %1101 = vmatprep.subr.bf16.mxu0 0
        %1102 = vmatpush1.bf16.msra.mxu0 0
        %1103 = vmatprep.subr.bf16.mxu0 0
        %1104 = vmatpush1.bf16.msra.mxu0 0
        %1105 = vmatprep.subr.bf16.mxu0 0
        %1106 = vmatpush1.bf16.msra.mxu0 0
        %1107 = vmatprep.subr.bf16.mxu0 0
        %1108 = vmatpush1.bf16.msra.mxu0 0
        %1109 = vmatprep.subr.bf16.mxu0 0
        %1110 = vmatpush1.bf16.msra.mxu0 0
        %1111 = vmatprep.subr.bf16.mxu0 0
        %1112 = vmatpush1.bf16.msra.mxu0 0
        %1113 = vmatprep.subr.bf16.mxu0 0
        %1114 = vmatpush1.bf16.msra.mxu0 0
        %1115 = vmatprep.subr.bf16.mxu0 0
        %1116 = vmatpush1.bf16.msra.mxu0 0
        %1117 = vmatprep.subr.bf16.mxu0 0
        %1118 = vmatpush1.bf16.msra.mxu0 0
        %1119 = vmatprep.subr.bf16.mxu0 0
        %1120 = vmatpush1.bf16.msra.mxu0 0
        %1121 = vmatprep.mubr.bf16.mxu0 0
        %1122 = vmatmul.mubr.bf16.gmra.mrb[0].mxu0 %v1087
        %v1123 = vpop.f32.mrb[0].mxu0
        %v1124 = vadd.f32 0.0, %v1123
        %v1125 = vpop.f32.mrb[0].mxu0
        %v1126 = vpop.f32.mrb[0].mxu0
        %v1127 = vpop.f32.mrb[0].mxu0
        %1128 = vdwg.mxu0
        %v1129 = vpack.c.bf16 %v1124, %v1124
        %v1132 = vunpack.c.l.b16 %v830
        %v1133 = vunpack.c.l.b16 %v831
        %v1134 = vpack.c.b16 %v1133, %v1132
        %v1137 = vsel %vm886, %v1129, 0
        %1139 = vmatprep.subr.bf16.mxu0 0
        %1140 = vmatpush1.bf16.msra.mxu0 %v1134
        %1141 = vmatprep.subr.bf16.mxu0 0
        %1142 = vmatpush1.bf16.msra.mxu0 0
        %1143 = vmatprep.subr.bf16.mxu0 0
        %1144 = vmatpush1.bf16.msra.mxu0 0
        %1145 = vmatprep.subr.bf16.mxu0 0
        %1146 = vmatpush1.bf16.msra.mxu0 0
        %1147 = vmatprep.subr.bf16.mxu0 0
        %1148 = vmatpush1.bf16.msra.mxu0 0
        %1149 = vmatprep.subr.bf16.mxu0 0
        %1150 = vmatpush1.bf16.msra.mxu0 0
        %1151 = vmatprep.subr.bf16.mxu0 0
        %1152 = vmatpush1.bf16.msra.mxu0 0
        %1153 = vmatprep.subr.bf16.mxu0 0
        %1154 = vmatpush1.bf16.msra.mxu0 0
        %1155 = vmatprep.subr.bf16.mxu0 0
        %1156 = vmatpush1.bf16.msra.mxu0 0
        %1157 = vmatprep.subr.bf16.mxu0 0
        %1158 = vmatpush1.bf16.msra.mxu0 0
        %1159 = vmatprep.subr.bf16.mxu0 0
        %1160 = vmatpush1.bf16.msra.mxu0 0
        %1161 = vmatprep.subr.bf16.mxu0 0
        %1162 = vmatpush1.bf16.msra.mxu0 0
        %1163 = vmatprep.subr.bf16.mxu0 0
        %1164 = vmatpush1.bf16.msra.mxu0 0
        %1165 = vmatprep.subr.bf16.mxu0 0
        %1166 = vmatpush1.bf16.msra.mxu0 0
        %1167 = vmatprep.subr.bf16.mxu0 0
        %1168 = vmatpush1.bf16.msra.mxu0 0
        %1169 = vmatprep.subr.bf16.mxu0 0
        %1170 = vmatpush1.bf16.msra.mxu0 0
        %1171 = vmatprep.mubr.bf16.mxu0 0
        %1172 = vmatmul.mubr.bf16.gmra.mrb[0].mxu0 %v1137
        %v1173 = vpop.f32.mrb[0].mxu0
        %v1174 = vadd.f32 0.0, %v1173
        %v1175 = vpop.f32.mrb[0].mxu0
        %v1176 = vpop.f32.mrb[0].mxu0
        %v1177 = vpop.f32.mrb[0].mxu0
        %1178 = vdwg.mxu0
        %v1181 = vunpack.c.l.b16 %v828
        %v1182 = vunpack.c.l.b16 %v829
        %v1183 = vpack.c.b16 %v1182, %v1181
        %v1186 = vsel %vm886, %v993, 0
        %1188 = vmatprep.subr.bf16.mxu0 0
        %1189 = vmatpush1.bf16.msra.mxu0 %v1183
        %1190 = vmatprep.subr.bf16.mxu0 0
        %1191 = vmatpush1.bf16.msra.mxu0 0
        %1192 = vmatprep.subr.bf16.mxu0 0
        %1193 = vmatpush1.bf16.msra.mxu0 0
        %1194 = vmatprep.subr.bf16.mxu0 0
        %1195 = vmatpush1.bf16.msra.mxu0 0
        %1196 = vmatprep.subr.bf16.mxu0 0
        %1197 = vmatpush1.bf16.msra.mxu0 0
        %1198 = vmatprep.subr.bf16.mxu0 0
        %1199 = vmatpush1.bf16.msra.mxu0 0
        %1200 = vmatprep.subr.bf16.mxu0 0
        %1201 = vmatpush1.bf16.msra.mxu0 0
        %1202 = vmatprep.subr.bf16.mxu0 0
        %1203 = vmatpush1.bf16.msra.mxu0 0
        %1204 = vmatprep.subr.bf16.mxu0 0
        %1205 = vmatpush1.bf16.msra.mxu0 0
        %1206 = vmatprep.subr.bf16.mxu0 0
        %1207 = vmatpush1.bf16.msra.mxu0 0
        %1208 = vmatprep.subr.bf16.mxu0 0
        %1209 = vmatpush1.bf16.msra.mxu0 0
        %1210 = vmatprep.subr.bf16.mxu0 0
        %1211 = vmatpush1.bf16.msra.mxu0 0
        %1212 = vmatprep.subr.bf16.mxu0 0
        %1213 = vmatpush1.bf16.msra.mxu0 0
        %1214 = vmatprep.subr.bf16.mxu0 0
        %1215 = vmatpush1.bf16.msra.mxu0 0
        %1216 = vmatprep.subr.bf16.mxu0 0
        %1217 = vmatpush1.bf16.msra.mxu0 0
        %1218 = vmatprep.subr.bf16.mxu0 0
        %1219 = vmatpush1.bf16.msra.mxu0 0
        %1220 = vmatprep.mubr.bf16.mxu0 0
        %1221 = vmatmul.mubr.bf16.gmra.mrb[0].mxu0 %v1186
        %v1222 = vpop.f32.mrb[0].mxu0
        %v1223 = vadd.f32 %v1174, %v1222
        %v1224 = vpop.f32.mrb[0].mxu0
        %v1225 = vpop.f32.mrb[0].mxu0
        %v1226 = vpop.f32.mrb[0].mxu0
        %1227 = vdwg.mxu0
        %v1228 = vmul.f32 %v744, %v995
        %v1229 = vmul.f32 %v744, %v999
        %1231 = vrot.lane.b32.xlu0 %v1229, 120
        %v1232 = vpop.permute.xlu0 %1231
        %v1234 = vsub.f32 %v1228, %v1232
        %v1235 = vmul.f32 %v744, %v1008
        %v1236 = vmul.f32 %v744, %v1012
        %1238 = vrot.lane.b32.xlu0 %v1236, 120
        %v1239 = vpop.permute.xlu0 %1238
        %v1241 = vadd.f32 %v1235, %v1239
        %1243 = vrot.lane.b32.xlu0 %v1234, 112
        %v1244 = vpop.permute.xlu0 %1243
        %1247 = vrot.lane.b32.xlu0 %v1241, 120
        %v1248 = vpop.permute.xlu0 %1247
        %v1250 = vsel %vm862, %v1244, %v1248
        %v1251 = vpack.c.bf16 %v1250, %v1250
        %1252 = vrot.lane.b32.xlu0 %v821, 32
        %v1253 = vpop.permute.xlu0 %1252
        %v1255 = vmul.f32 %v672, %v1253
        %1256 = vrot.lane.b32.xlu0 %v822, 40
        %v1257 = vpop.permute.xlu0 %1256
        %v1259 = vmul.f32 %v672, %v1257
        %1261 = vrot.lane.b32.xlu0 %v1259, 120
        %v1262 = vpop.permute.xlu0 %1261
        %v1264 = vsub.f32 %v1255, %v1262
        %1265 = vrot.lane.b32.xlu0 %v822, 32
        %v1266 = vpop.permute.xlu0 %1265
        %v1268 = vmul.f32 %v672, %v1266
        %1269 = vrot.lane.b32.xlu0 %v821, 40
        %v1270 = vpop.permute.xlu0 %1269
        %v1272 = vmul.f32 %v672, %v1270
        %1274 = vrot.lane.b32.xlu0 %v1272, 120
        %v1275 = vpop.permute.xlu0 %1274
        %v1277 = vadd.f32 %v1268, %v1275
        %1279 = vrot.lane.b32.xlu0 %v1264, 96
        %v1280 = vpop.permute.xlu0 %1279
        %1283 = vrot.lane.b32.xlu0 %v1277, 104
        %v1284 = vpop.permute.xlu0 %1283
        %v1286 = vsel %vm862, %v1280, %v1284
        %v1287 = vpack.c.bf16 %v1286, %v1286
        %v1289 = vsel %vm886, %v1287, 0
        %v1292 = vsel %vm886, %v1251, 0
        %1294 = vmatprep.subr.bf16.mxu0 0
        %1295 = vmatpush1.bf16.xpose.msra.mxu0 %v1292
        %1296 = vmatprep.subr.bf16.mxu0 0
        %1297 = vmatpush1.bf16.xpose.msra.mxu0 0
        %1298 = vmatprep.subr.bf16.mxu0 0
        %1299 = vmatpush1.bf16.xpose.msra.mxu0 0
        %1300 = vmatprep.subr.bf16.mxu0 0
        %1301 = vmatpush1.bf16.xpose.msra.mxu0 0
        %1302 = vmatprep.subr.bf16.mxu0 0
        %1303 = vmatpush1.bf16.xpose.msra.mxu0 0
        %1304 = vmatprep.subr.bf16.mxu0 0
        %1305 = vmatpush1.bf16.xpose.msra.mxu0 0
        %1306 = vmatprep.subr.bf16.mxu0 0
        %1307 = vmatpush1.bf16.xpose.msra.mxu0 0
        %1308 = vmatprep.subr.bf16.mxu0 0
        %1309 = vmatpush1.bf16.xpose.msra.mxu0 0
        %1310 = vmatprep.subr.bf16.mxu0 0
        %1311 = vmatpush1.bf16.xpose.msra.mxu0 0
        %1312 = vmatprep.subr.bf16.mxu0 0
        %1313 = vmatpush1.bf16.xpose.msra.mxu0 0
        %1314 = vmatprep.subr.bf16.mxu0 0
        %1315 = vmatpush1.bf16.xpose.msra.mxu0 0
        %1316 = vmatprep.subr.bf16.mxu0 0
        %1317 = vmatpush1.bf16.xpose.msra.mxu0 0
        %1318 = vmatprep.subr.bf16.mxu0 0
        %1319 = vmatpush1.bf16.xpose.msra.mxu0 0
        %1320 = vmatprep.subr.bf16.mxu0 0
        %1321 = vmatpush1.bf16.xpose.msra.mxu0 0
        %1322 = vmatprep.subr.bf16.mxu0 0
        %1323 = vmatpush1.bf16.xpose.msra.mxu0 0
        %1324 = vmatprep.subr.bf16.mxu0 0
        %1325 = vmatpush1.bf16.xpose.msra.mxu0 0
        %1326 = vmatprep.mubr.bf16.mxu0 0
        %1327 = vmatmul.mubr.bf16.gmra.mrb[0].mxu0 %v1289
        %v1328 = vpop.f32.mrb[0].mxu0
        %v1329 = vadd.f32 0.0, %v1328
        %v1330 = vpop.f32.mrb[0].mxu0
        %v1331 = vpop.f32.mrb[0].mxu0
        %v1332 = vpop.f32.mrb[0].mxu0
        %1333 = vdwg.mxu0
        %v1334 = vsel %vm827, %v1329, -inf
        %v1335 = vsel %vm862, %v1334, -inf
        %1336 = vmax.xlane.f32.xlu0 %v1335
        %v1337 = vpop.xlane.xlu0 %1336
        %v1338 = vsub.f32 %v1334, %v1337
        %v1339 = vmul.f32 %v1338, 1.442695
        %v1340 = vpow.pop %v1339
        %v1341 = vsel %vm862, %v1340, 0.0
        %1342 = vadd.xlane.f32.xlu0 %v1341
        %v1343 = vpop.xlane.xlu0 %1342
        %v1344 = vrcp.pop %v1343
        %v1345 = vmul.f32 %v1340, %v1344
        %v1346 = vpack.c.bf16 %v1345, %v1345
        %1348 = vrot.lane.b32.xlu0 %v865, 112
        %v1349 = vpop.permute.xlu0 %1348
        %v1351 = vsel %vm862, %v1346, 0
        %v1354 = vsel %vm949, %v1349, 0
        %1356 = vmatprep.subr.bf16.mxu0 0
        %1357 = vmatpush1.bf16.msra.mxu0 %v1354
        %1358 = vmatprep.subr.bf16.mxu0 0
        %1359 = vmatpush1.bf16.msra.mxu0 0
        %1360 = vmatprep.subr.bf16.mxu0 0
        %1361 = vmatpush1.bf16.msra.mxu0 0
        %1362 = vmatprep.subr.bf16.mxu0 0
        %1363 = vmatpush1.bf16.msra.mxu0 0
        %1364 = vmatprep.subr.bf16.mxu0 0
        %1365 = vmatpush1.bf16.msra.mxu0 0
        %1366 = vmatprep.subr.bf16.mxu0 0
        %1367 = vmatpush1.bf16.msra.mxu0 0
        %1368 = vmatprep.subr.bf16.mxu0 0
        %1369 = vmatpush1.bf16.msra.mxu0 0
        %1370 = vmatprep.subr.bf16.mxu0 0
        %1371 = vmatpush1.bf16.msra.mxu0 0
        %1372 = vmatprep.subr.bf16.mxu0 0
        %1373 = vmatpush1.bf16.msra.mxu0 0
        %1374 = vmatprep.subr.bf16.mxu0 0
        %1375 = vmatpush1.bf16.msra.mxu0 0
        %1376 = vmatprep.subr.bf16.mxu0 0
        %1377 = vmatpush1.bf16.msra.mxu0 0
        %1378 = vmatprep.subr.bf16.mxu0 0
        %1379 = vmatpush1.bf16.msra.mxu0 0
        %1380 = vmatprep.subr.bf16.mxu0 0
        %1381 = vmatpush1.bf16.msra.mxu0 0
        %1382 = vmatprep.subr.bf16.mxu0 0
        %1383 = vmatpush1.bf16.msra.mxu0 0
        %1384 = vmatprep.subr.bf16.mxu0 0
        %1385 = vmatpush1.bf16.msra.mxu0 0
        %1386 = vmatprep.subr.bf16.mxu0 0
        %1387 = vmatpush1.bf16.msra.mxu0 0
        %1388 = vmatprep.mubr.bf16.mxu0 0
        %1389 = vmatmul.mubr.bf16.gmra.mrb[0].mxu0 %v1351
        %v1390 = vpop.f32.mrb[0].mxu0
        %v1391 = vadd.f32 0.0, %v1390
        %v1392 = vpop.f32.mrb[0].mxu0
        %v1393 = vpop.f32.mrb[0].mxu0
        %v1394 = vpop.f32.mrb[0].mxu0
        %1395 = vdwg.mxu0
        %v1396 = vpack.c.bf16 %v1391, %v1391
        %v1399 = vunpack.c.l.b16 %v832
        %v1400 = vunpack.c.l.b16 %v833
        %v1401 = vpack.c.b16 %v1400, %v1399
        %v1404 = vsel %vm886, %v1396, 0
        %1406 = vmatprep.subr.bf16.mxu0 0
        %1407 = vmatpush1.bf16.msra.mxu0 %v1401
        %1408 = vmatprep.subr.bf16.mxu0 0
        %1409 = vmatpush1.bf16.msra.mxu0 0
        %1410 = vmatprep.subr.bf16.mxu0 0
        %1411 = vmatpush1.bf16.msra.mxu0 0
        %1412 = vmatprep.subr.bf16.mxu0 0
        %1413 = vmatpush1.bf16.msra.mxu0 0
        %1414 = vmatprep.subr.bf16.mxu0 0
        %1415 = vmatpush1.bf16.msra.mxu0 0
        %1416 = vmatprep.subr.bf16.mxu0 0
        %1417 = vmatpush1.bf16.msra.mxu0 0
        %1418 = vmatprep.subr.bf16.mxu0 0
        %1419 = vmatpush1.bf16.msra.mxu0 0
        %1420 = vmatprep.subr.bf16.mxu0 0
        %1421 = vmatpush1.bf16.msra.mxu0 0
        %1422 = vmatprep.subr.bf16.mxu0 0
        %1423 = vmatpush1.bf16.msra.mxu0 0
        %1424 = vmatprep.subr.bf16.mxu0 0
        %1425 = vmatpush1.bf16.msra.mxu0 0
        %1426 = vmatprep.subr.bf16.mxu0 0
        %1427 = vmatpush1.bf16.msra.mxu0 0
        %1428 = vmatprep.subr.bf16.mxu0 0
        %1429 = vmatpush1.bf16.msra.mxu0 0
        %1430 = vmatprep.subr.bf16.mxu0 0
        %1431 = vmatpush1.bf16.msra.mxu0 0
        %1432 = vmatprep.subr.bf16.mxu0 0
        %1433 = vmatpush1.bf16.msra.mxu0 0
        %1434 = vmatprep.subr.bf16.mxu0 0
        %1435 = vmatpush1.bf16.msra.mxu0 0
        %1436 = vmatprep.subr.bf16.mxu0 0
        %1437 = vmatpush1.bf16.msra.mxu0 0
        %1438 = vmatprep.mubr.bf16.mxu0 0
        %1439 = vmatmul.mubr.bf16.gmra.mrb[0].mxu0 %v1404
        %v1440 = vpop.f32.mrb[0].mxu0
        %v1441 = vadd.f32 0.0, %v1440
        %v1442 = vpop.f32.mrb[0].mxu0
        %v1443 = vpop.f32.mrb[0].mxu0
        %v1444 = vpop.f32.mrb[0].mxu0
        %1445 = vdwg.mxu0
        %v1446 = vadd.f32 %v1223, %v1441
        %1447 = vrot.lane.b32.xlu0 %v821, 48
        %v1448 = vpop.permute.xlu0 %1447
        %v1450 = vmul.f32 %v672, %v1448
        %1451 = vrot.lane.b32.xlu0 %v822, 56
        %v1452 = vpop.permute.xlu0 %1451
        %v1454 = vmul.f32 %v672, %v1452
        %1456 = vrot.lane.b32.xlu0 %v1454, 120
        %v1457 = vpop.permute.xlu0 %1456
        %v1459 = vsub.f32 %v1450, %v1457
        %1460 = vrot.lane.b32.xlu0 %v822, 48
        %v1461 = vpop.permute.xlu0 %1460
        %v1463 = vmul.f32 %v672, %v1461
        %1464 = vrot.lane.b32.xlu0 %v821, 56
        %v1465 = vpop.permute.xlu0 %1464
        %v1467 = vmul.f32 %v672, %v1465
        %1469 = vrot.lane.b32.xlu0 %v1467, 120
        %v1470 = vpop.permute.xlu0 %1469
        %v1472 = vadd.f32 %v1463, %v1470
        %1474 = vrot.lane.b32.xlu0 %v1459, 80
        %v1475 = vpop.permute.xlu0 %1474
        %1478 = vrot.lane.b32.xlu0 %v1472, 88
        %v1479 = vpop.permute.xlu0 %1478
        %v1481 = vsel %vm862, %v1475, %v1479
        %v1482 = vpack.c.bf16 %v1481, %v1481
        %v1484 = vsel %vm886, %v1482, 0
        %1486 = vmatprep.subr.bf16.mxu0 0
        %1487 = vmatpush1.bf16.xpose.msra.mxu0 %v1292
        %1488 = vmatprep.subr.bf16.mxu0 0
        %1489 = vmatpush1.bf16.xpose.msra.mxu0 0
        %1490 = vmatprep.subr.bf16.mxu0 0
        %1491 = vmatpush1.bf16.xpose.msra.mxu0 0
        %1492 = vmatprep.subr.bf16.mxu0 0
        %1493 = vmatpush1.bf16.xpose.msra.mxu0 0
        %1494 = vmatprep.subr.bf16.mxu0 0
        %1495 = vmatpush1.bf16.xpose.msra.mxu0 0
        %1496 = vmatprep.subr.bf16.mxu0 0
        %1497 = vmatpush1.bf16.xpose.msra.mxu0 0
        %1498 = vmatprep.subr.bf16.mxu0 0
        %1499 = vmatpush1.bf16.xpose.msra.mxu0 0
        %1500 = vmatprep.subr.bf16.mxu0 0
        %1501 = vmatpush1.bf16.xpose.msra.mxu0 0
        %1502 = vmatprep.subr.bf16.mxu0 0
        %1503 = vmatpush1.bf16.xpose.msra.mxu0 0
        %1504 = vmatprep.subr.bf16.mxu0 0
        %1505 = vmatpush1.bf16.xpose.msra.mxu0 0
        %1506 = vmatprep.subr.bf16.mxu0 0
        %1507 = vmatpush1.bf16.xpose.msra.mxu0 0
        %1508 = vmatprep.subr.bf16.mxu0 0
        %1509 = vmatpush1.bf16.xpose.msra.mxu0 0
        %1510 = vmatprep.subr.bf16.mxu0 0
        %1511 = vmatpush1.bf16.xpose.msra.mxu0 0
        %1512 = vmatprep.subr.bf16.mxu0 0
        %1513 = vmatpush1.bf16.xpose.msra.mxu0 0
        %1514 = vmatprep.subr.bf16.mxu0 0
        %1515 = vmatpush1.bf16.xpose.msra.mxu0 0
        %1516 = vmatprep.subr.bf16.mxu0 0
        %1517 = vmatpush1.bf16.xpose.msra.mxu0 0
        %1518 = vmatprep.mubr.bf16.mxu0 0
        %1519 = vmatmul.mubr.bf16.gmra.mrb[0].mxu0 %v1484
        %v1520 = vpop.f32.mrb[0].mxu0
        %v1521 = vadd.f32 0.0, %v1520
        %v1522 = vpop.f32.mrb[0].mxu0
        %v1523 = vpop.f32.mrb[0].mxu0
        %v1524 = vpop.f32.mrb[0].mxu0
        %1525 = vdwg.mxu0
        %v1526 = vsel %vm827, %v1521, -inf
        %v1527 = vsel %vm862, %v1526, -inf
        %1528 = vmax.xlane.f32.xlu0 %v1527
        %v1529 = vpop.xlane.xlu0 %1528
        %v1530 = vsub.f32 %v1526, %v1529
        %v1531 = vmul.f32 %v1530, 1.442695
        %v1532 = vpow.pop %v1531
        %v1533 = vsel %vm862, %v1532, 0.0
        %1534 = vadd.xlane.f32.xlu0 %v1533
        %v1535 = vpop.xlane.xlu0 %1534
        %v1536 = vrcp.pop %v1535
        %v1537 = vmul.f32 %v1532, %v1536
        %v1538 = vpack.c.bf16 %v1537, %v1537
        %v1540 = vsel %vm862, %v1538, 0
        %1542 = vmatprep.subr.bf16.mxu0 0
        %1543 = vmatpush1.bf16.msra.mxu0 %v1354
        %1544 = vmatprep.subr.bf16.mxu0 0
        %1545 = vmatpush1.bf16.msra.mxu0 0
        %1546 = vmatprep.subr.bf16.mxu0 0
        %1547 = vmatpush1.bf16.msra.mxu0 0
        %1548 = vmatprep.subr.bf16.mxu0 0
        %1549 = vmatpush1.bf16.msra.mxu0 0
        %1550 = vmatprep.subr.bf16.mxu0 0
        %1551 = vmatpush1.bf16.msra.mxu0 0
        %1552 = vmatprep.subr.bf16.mxu0 0
        %1553 = vmatpush1.bf16.msra.mxu0 0
        %1554 = vmatprep.subr.bf16.mxu0 0
        %1555 = vmatpush1.bf16.msra.mxu0 0
        %1556 = vmatprep.subr.bf16.mxu0 0
        %1557 = vmatpush1.bf16.msra.mxu0 0
        %1558 = vmatprep.subr.bf16.mxu0 0
        %1559 = vmatpush1.bf16.msra.mxu0 0
        %1560 = vmatprep.subr.bf16.mxu0 0
        %1561 = vmatpush1.bf16.msra.mxu0 0
        %1562 = vmatprep.subr.bf16.mxu0 0
        %1563 = vmatpush1.bf16.msra.mxu0 0
        %1564 = vmatprep.subr.bf16.mxu0 0
        %1565 = vmatpush1.bf16.msra.mxu0 0
        %1566 = vmatprep.subr.bf16.mxu0 0
        %1567 = vmatpush1.bf16.msra.mxu0 0
        %1568 = vmatprep.subr.bf16.mxu0 0
        %1569 = vmatpush1.bf16.msra.mxu0 0
        %1570 = vmatprep.subr.bf16.mxu0 0
        %1571 = vmatpush1.bf16.msra.mxu0 0
        %1572 = vmatprep.subr.bf16.mxu0 0
        %1573 = vmatpush1.bf16.msra.mxu0 0
        %1574 = vmatprep.mubr.bf16.mxu0 0
        %1575 = vmatmul.mubr.bf16.gmra.mrb[0].mxu0 %v1540
        %v1576 = vpop.f32.mrb[0].mxu0
        %v1577 = vadd.f32 0.0, %v1576
        %v1578 = vpop.f32.mrb[0].mxu0
        %v1579 = vpop.f32.mrb[0].mxu0
        %v1580 = vpop.f32.mrb[0].mxu0
        %1581 = vdwg.mxu0
        %v1582 = vpack.c.bf16 %v1577, %v1577
        %v1585 = vunpack.c.l.b16 %v834
        %v1586 = vunpack.c.l.b16 %v835
        %v1587 = vpack.c.b16 %v1586, %v1585
        %v1590 = vsel %vm886, %v1582, 0
        %1592 = vmatprep.subr.bf16.mxu0 0
        %1593 = vmatpush1.bf16.msra.mxu0 %v1587
        %1594 = vmatprep.subr.bf16.mxu0 0
        %1595 = vmatpush1.bf16.msra.mxu0 0
        %1596 = vmatprep.subr.bf16.mxu0 0
        %1597 = vmatpush1.bf16.msra.mxu0 0
        %1598 = vmatprep.subr.bf16.mxu0 0
        %1599 = vmatpush1.bf16.msra.mxu0 0
        %1600 = vmatprep.subr.bf16.mxu0 0
        %1601 = vmatpush1.bf16.msra.mxu0 0
        %1602 = vmatprep.subr.bf16.mxu0 0
        %1603 = vmatpush1.bf16.msra.mxu0 0
        %1604 = vmatprep.subr.bf16.mxu0 0
        %1605 = vmatpush1.bf16.msra.mxu0 0
        %1606 = vmatprep.subr.bf16.mxu0 0
        %1607 = vmatpush1.bf16.msra.mxu0 0
        %1608 = vmatprep.subr.bf16.mxu0 0
        %1609 = vmatpush1.bf16.msra.mxu0 0
        %1610 = vmatprep.subr.bf16.mxu0 0
        %1611 = vmatpush1.bf16.msra.mxu0 0
        %1612 = vmatprep.subr.bf16.mxu0 0
        %1613 = vmatpush1.bf16.msra.mxu0 0
        %1614 = vmatprep.subr.bf16.mxu0 0
        %1615 = vmatpush1.bf16.msra.mxu0 0
        %1616 = vmatprep.subr.bf16.mxu0 0
        %1617 = vmatpush1.bf16.msra.mxu0 0
        %1618 = vmatprep.subr.bf16.mxu0 0
        %1619 = vmatpush1.bf16.msra.mxu0 0
        %1620 = vmatprep.subr.bf16.mxu0 0
        %1621 = vmatpush1.bf16.msra.mxu0 0
        %1622 = vmatprep.subr.bf16.mxu0 0
        %1623 = vmatpush1.bf16.msra.mxu0 0
        %1624 = vmatprep.mubr.bf16.mxu0 0
        %1625 = vmatmul.mubr.bf16.gmra.mrb[0].mxu0 %v1590
        %v1626 = vpop.f32.mrb[0].mxu0
        %v1627 = vadd.f32 0.0, %v1626
        %v1628 = vpop.f32.mrb[0].mxu0
        %v1629 = vpop.f32.mrb[0].mxu0
        %v1630 = vpop.f32.mrb[0].mxu0
        %1631 = vdwg.mxu0
        %v1632 = vadd.f32 %v1446, %v1627
        %v1633 = vadd.f32 %v582, %v1632
        %v1634 = vmul.f32 %v1633, %v1633
        %v1635 = vsel %vm584, %v1634, 0.0
        %1636 = vadd.xlane.f32.xlu0 %v1635
        %v1637 = vpop.xlane.xlu0 %1636
        %v1638 = vmul.f32 %v1637, %v588
        %v1639 = vadd.f32 %v1638, 1e-05
        %v1640 = vrsqrt.pop %v1639
        %v1641 = vmul.f32 %v1633, %v1640
        %v1642 = vld [vmem:[#allocation16] sm:$0x1]
        %v1644 = vlaneseq
        %v1645 = vshrl.u32 %v1644, 7
        %v1646 = vsub.s32 0, %v1645
        %v1647 = vrot.slane %v1642, %v1646
        %v1649 = vmul.f32 %v1641, %v1647
        %v1650 = vpack.c.bf16 %v1649, %v1649
        %v1651 = vld [vmem:[#allocation17] sm:$0xff]
        %v1652 = vld [vmem:[#allocation17 + $0x8] sm:$0xff]
        %v1653 = vld [vmem:[#allocation17 + $0x10] sm:$0xff]
        %v1654 = vld [vmem:[#allocation17 + $0x18] sm:$0xff]
        %v1655 = vld [vmem:[#allocation17 + $0x20] sm:$0xff]
        %v1656 = vld [vmem:[#allocation17 + $0x28] sm:$0xff]
        %v1657 = vld [vmem:[#allocation17 + $0x30] sm:$0xff]
        %v1658 = vld [vmem:[#allocation17 + $0x38] sm:$0xff]
        %v1667 = vunpack.c.l.b16 %v1651
        %v1668 = vunpack.c.h.b16 %v1651
        %v1669 = vunpack.c.l.b16 %v1652
        %v1670 = vunpack.c.h.b16 %v1652
        %v1671 = vunpack.c.l.b16 %v1653
        %v1672 = vunpack.c.h.b16 %v1653
        %v1673 = vunpack.c.l.b16 %v1654
        %v1674 = vunpack.c.h.b16 %v1654
        %v1675 = vunpack.c.l.b16 %v1655
        %v1676 = vunpack.c.h.b16 %v1655
        %v1677 = vunpack.c.l.b16 %v1656
        %v1678 = vunpack.c.h.b16 %v1656
        %v1679 = vunpack.c.l.b16 %v1657
        %v1680 = vunpack.c.h.b16 %v1657
        %v1681 = vunpack.c.l.b16 %v1658
        %v1682 = vunpack.c.h.b16 %v1658
        %v1683 = vpack.c.b16 %v1669, %v1667
        %v1684 = vpack.c.b16 %v1670, %v1668
        %v1685 = vpack.c.b16 %v1673, %v1671
        %v1686 = vpack.c.b16 %v1674, %v1672
        %v1687 = vpack.c.b16 %v1677, %v1675
        %v1688 = vpack.c.b16 %v1678, %v1676
        %v1689 = vpack.c.b16 %v1681, %v1679
        %v1690 = vpack.c.b16 %v1682, %v1680
        %v1700 = vsel %vm584, %v1650, 0
        %1702 = vmatprep.subr.bf16.mxu0 %v1684
        %1703 = vmatpush1.bf16.msra.mxu0 %v1683
        %1704 = vmatprep.subr.bf16.mxu0 %v1686
        %1705 = vmatpush1.bf16.msra.mxu0 %v1685
        %1706 = vmatprep.subr.bf16.mxu0 %v1688
        %1707 = vmatpush1.bf16.msra.mxu0 %v1687
        %1708 = vmatprep.subr.bf16.mxu0 %v1690
        %1709 = vmatpush1.bf16.msra.mxu0 %v1689
        %1710 = vmatprep.subr.bf16.mxu0 0
        %1711 = vmatpush1.bf16.msra.mxu0 0
        %1712 = vmatprep.subr.bf16.mxu0 0
        %1713 = vmatpush1.bf16.msra.mxu0 0
        %1714 = vmatprep.subr.bf16.mxu0 0
        %1715 = vmatpush1.bf16.msra.mxu0 0
        %1716 = vmatprep.subr.bf16.mxu0 0
        %1717 = vmatpush1.bf16.msra.mxu0 0
        %1718 = vmatprep.subr.bf16.mxu0 0
        %1719 = vmatpush1.bf16.msra.mxu0 0
        %1720 = vmatprep.subr.bf16.mxu0 0
        %1721 = vmatpush1.bf16.msra.mxu0 0
        %1722 = vmatprep.subr.bf16.mxu0 0
        %1723 = vmatpush1.bf16.msra.mxu0 0
        %1724 = vmatprep.subr.bf16.mxu0 0
        %1725 = vmatpush1.bf16.msra.mxu0 0
        %1726 = vmatprep.subr.bf16.mxu0 0
        %1727 = vmatpush1.bf16.msra.mxu0 0
        %1728 = vmatprep.subr.bf16.mxu0 0
        %1729 = vmatpush1.bf16.msra.mxu0 0
        %1730 = vmatprep.subr.bf16.mxu0 0
        %1731 = vmatpush1.bf16.msra.mxu0 0
        %1732 = vmatprep.subr.bf16.mxu0 0
        %1733 = vmatpush1.bf16.msra.mxu0 0
        %1734 = vmatprep.mubr.bf16.mxu0 0
        %1735 = vmatmul.mubr.bf16.gmra.mrb[0].mxu0 %v1700
        %v1736 = vpop.f32.mrb[0].mxu0
        %v1737 = vadd.f32 0.0, %v1736
        %v1738 = vpop.f32.mrb[0].mxu0
        %v1739 = vadd.f32 0.0, %v1738
        %v1740 = vpop.f32.mrb[0].mxu0
        %v1741 = vpop.f32.mrb[0].mxu0
        %1742 = vdwg.mxu0
        %v1743 = vld [vmem:[#allocation20] sm:$0xff]
        %v1744 = vld [vmem:[#allocation20 + $0x8] sm:$0xff]
        %v1745 = vld [vmem:[#allocation20 + $0x10] sm:$0xff]
        %v1746 = vld [vmem:[#allocation20 + $0x18] sm:$0xff]
        %v1747 = vld [vmem:[#allocation20 + $0x20] sm:$0xff]
        %v1748 = vld [vmem:[#allocation20 + $0x28] sm:$0xff]
        %v1749 = vld [vmem:[#allocation20 + $0x30] sm:$0xff]
        %v1750 = vld [vmem:[#allocation20 + $0x38] sm:$0xff]
        %v1759 = vunpack.c.l.b16 %v1743
        %v1760 = vunpack.c.h.b16 %v1743
        %v1761 = vunpack.c.l.b16 %v1744
        %v1762 = vunpack.c.h.b16 %v1744
        %v1763 = vunpack.c.l.b16 %v1745
        %v1764 = vunpack.c.h.b16 %v1745
        %v1765 = vunpack.c.l.b16 %v1746
        %v1766 = vunpack.c.h.b16 %v1746
        %v1767 = vunpack.c.l.b16 %v1747
        %v1768 = vunpack.c.h.b16 %v1747
        %v1769 = vunpack.c.l.b16 %v1748
        %v1770 = vunpack.c.h.b16 %v1748
        %v1771 = vunpack.c.l.b16 %v1749
        %v1772 = vunpack.c.h.b16 %v1749
        %v1773 = vunpack.c.l.b16 %v1750
        %v1774 = vunpack.c.h.b16 %v1750
        %v1775 = vpack.c.b16 %v1761, %v1759
        %v1776 = vpack.c.b16 %v1762, %v1760
        %v1777 = vpack.c.b16 %v1765, %v1763
        %v1778 = vpack.c.b16 %v1766, %v1764
        %v1779 = vpack.c.b16 %v1769, %v1767
        %v1780 = vpack.c.b16 %v1770, %v1768
        %v1781 = vpack.c.b16 %v1773, %v1771
        %v1782 = vpack.c.b16 %v1774, %v1772
        %1791 = vmatprep.subr.bf16.mxu0 %v1776
        %1792 = vmatpush1.bf16.msra.mxu0 %v1775
        %1793 = vmatprep.subr.bf16.mxu0 %v1778
        %1794 = vmatpush1.bf16.msra.mxu0 %v1777
        %1795 = vmatprep.subr.bf16.mxu0 %v1780
        %1796 = vmatpush1.bf16.msra.mxu0 %v1779
        %1797 = vmatprep.subr.bf16.mxu0 %v1782
        %1798 = vmatpush1.bf16.msra.mxu0 %v1781
        %1799 = vmatprep.subr.bf16.mxu0 0
        %1800 = vmatpush1.bf16.msra.mxu0 0
        %1801 = vmatprep.subr.bf16.mxu0 0
        %1802 = vmatpush1.bf16.msra.mxu0 0
        %1803 = vmatprep.subr.bf16.mxu0 0
        %1804 = vmatpush1.bf16.msra.mxu0 0
        %1805 = vmatprep.subr.bf16.mxu0 0
        %1806 = vmatpush1.bf16.msra.mxu0 0
        %1807 = vmatprep.subr.bf16.mxu0 0
        %1808 = vmatpush1.bf16.msra.mxu0 0
        %1809 = vmatprep.subr.bf16.mxu0 0
        %1810 = vmatpush1.bf16.msra.mxu0 0
        %1811 = vmatprep.subr.bf16.mxu0 0
        %1812 = vmatpush1.bf16.msra.mxu0 0
        %1813 = vmatprep.subr.bf16.mxu0 0
        %1814 = vmatpush1.bf16.msra.mxu0 0
        %1815 = vmatprep.subr.bf16.mxu0 0
        %1816 = vmatpush1.bf16.msra.mxu0 0
        %1817 = vmatprep.subr.bf16.mxu0 0
        %1818 = vmatpush1.bf16.msra.mxu0 0
        %1819 = vmatprep.subr.bf16.mxu0 0
        %1820 = vmatpush1.bf16.msra.mxu0 0
        %1821 = vmatprep.subr.bf16.mxu0 0
        %1822 = vmatpush1.bf16.msra.mxu0 0
        %1823 = vmatprep.mubr.bf16.mxu0 0
        %1824 = vmatmul.mubr.bf16.gmra.mrb[0].mxu0 %v1700
        %v1825 = vpop.f32.mrb[0].mxu0
        %v1826 = vadd.f32 0.0, %v1825
        %v1827 = vpop.f32.mrb[0].mxu0
        %v1828 = vadd.f32 0.0, %v1827
        %v1829 = vpop.f32.mrb[0].mxu0
        %v1830 = vpop.f32.mrb[0].mxu0
        %1831 = vdwg.mxu0
        %v1832 = vxor.u32 %v1737, 2147483648
        %v1833 = vxor.u32 %v1739, 2147483648
        %v1834 = vmul.f32 %v1832, 1.442695
        %v1835 = vpow.pop %v1834
        %v1836 = vmul.f32 %v1833, 1.442695
        %v1837 = vpow.pop %v1836
        %v1838 = vadd.f32 %v1835, 1.0
        %v1839 = vadd.f32 %v1837, 1.0
        %v1840 = vrcp.pop %v1838
        %v1841 = vmul.f32 1.0, %v1840
        %v1842 = vrcp.pop %v1839
        %v1843 = vmul.f32 1.0, %v1842
        %v1844 = vmul.f32 %v1737, %v1841
        %v1845 = vmul.f32 %v1739, %v1843
        %v1846 = vmul.f32 %v1844, %v1826
        %v1847 = vmul.f32 %v1845, %v1828
        %v1848 = vpack.c.bf16 %v1846, %v1846
        %v1849 = vpack.c.bf16 %v1847, %v1847
        %v1850 = vld [vmem:[#allocation19] sm:$0xf]
        %v1851 = vld [vmem:[#allocation19 + $0x4] sm:$0xf]
        %v1852 = vld [vmem:[#allocation19 + $0x8] sm:$0xf]
        %v1853 = vld [vmem:[#allocation19 + $0xc] sm:$0xf]
        %v1854 = vld [vmem:[#allocation19 + $0x10] sm:$0xf]
        %v1855 = vld [vmem:[#allocation19 + $0x14] sm:$0xf]
        %v1856 = vld [vmem:[#allocation19 + $0x18] sm:$0xf]
        %v1857 = vld [vmem:[#allocation19 + $0x1c] sm:$0xf]
        %v1858 = vld [vmem:[#allocation19 + $0x20] sm:$0xf]
        %v1859 = vld [vmem:[#allocation19 + $0x24] sm:$0xf]
        %v1860 = vld [vmem:[#allocation19 + $0x28] sm:$0xf]
        %v1861 = vld [vmem:[#allocation19 + $0x2c] sm:$0xf]
        %v1862 = vld [vmem:[#allocation19 + $0x30] sm:$0xf]
        %v1863 = vld [vmem:[#allocation19 + $0x34] sm:$0xf]
        %v1864 = vld [vmem:[#allocation19 + $0x38] sm:$0xf]
        %v1865 = vld [vmem:[#allocation19 + $0x3c] sm:$0xf]
        %v1866 = vld [vmem:[#allocation19 + $0x40] sm:$0xf]
        %v1867 = vld [vmem:[#allocation19 + $0x44] sm:$0xf]
        %v1868 = vld [vmem:[#allocation19 + $0x48] sm:$0xf]
        %v1869 = vld [vmem:[#allocation19 + $0x4c] sm:$0xf]
        %v1870 = vld [vmem:[#allocation19 + $0x50] sm:$0xf]
        %v1871 = vld [vmem:[#allocation19 + $0x54] sm:$0xf]
        %v1872 = vld [vmem:[#allocation19 + $0x58] sm:$0xf]
        %v1873 = vld [vmem:[#allocation19 + $0x5c] sm:$0xf]
        %v1898 = vunpack.c.l.b16 %v1850
        %v1899 = vunpack.c.l.b16 %v1851
        %v1900 = vunpack.c.l.b16 %v1852
        %v1901 = vunpack.c.l.b16 %v1853
        %v1902 = vunpack.c.l.b16 %v1854
        %v1903 = vunpack.c.l.b16 %v1855
        %v1904 = vunpack.c.l.b16 %v1856
        %v1905 = vunpack.c.l.b16 %v1857
        %v1906 = vunpack.c.l.b16 %v1858
        %v1907 = vunpack.c.l.b16 %v1859
        %v1908 = vunpack.c.l.b16 %v1860
        %v1909 = vunpack.c.l.b16 %v1861
        %v1910 = vunpack.c.l.b16 %v1862
        %v1911 = vunpack.c.l.b16 %v1863
        %v1912 = vunpack.c.l.b16 %v1864
        %v1913 = vunpack.c.l.b16 %v1865
        %v1914 = vunpack.c.l.b16 %v1866
        %v1915 = vunpack.c.l.b16 %v1867
        %v1916 = vunpack.c.l.b16 %v1868
        %v1917 = vunpack.c.l.b16 %v1869
        %v1918 = vunpack.c.l.b16 %v1870
        %v1919 = vunpack.c.l.b16 %v1871
        %v1920 = vunpack.c.l.b16 %v1872
        %v1921 = vunpack.c.l.b16 %v1873
        %v1922 = vpack.c.b16 %v1899, %v1898
        %v1923 = vpack.c.b16 %v1901, %v1900
        %v1924 = vpack.c.b16 %v1903, %v1902
        %v1925 = vpack.c.b16 %v1905, %v1904
        %v1926 = vpack.c.b16 %v1907, %v1906
        %v1927 = vpack.c.b16 %v1909, %v1908
        %v1928 = vpack.c.b16 %v1911, %v1910
        %v1929 = vpack.c.b16 %v1913, %v1912
        %v1930 = vpack.c.b16 %v1915, %v1914
        %v1931 = vpack.c.b16 %v1917, %v1916
        %v1932 = vpack.c.b16 %v1919, %v1918
        %v1933 = vpack.c.b16 %v1921, %v1920
        %v1947 = vsel %vm584, %v1849, 0
        %1949 = vmatprep.subr.bf16.mxu0 0
        %1950 = vmatpush1.bf16.msra.mxu0 %v1922
        %1951 = vmatprep.subr.bf16.mxu0 0
        %1952 = vmatpush1.bf16.msra.mxu0 %v1923
        %1953 = vmatprep.subr.bf16.mxu0 0
        %1954 = vmatpush1.bf16.msra.mxu0 %v1924
        %1955 = vmatprep.subr.bf16.mxu0 0
        %1956 = vmatpush1.bf16.msra.mxu0 %v1925
        %1957 = vmatprep.subr.bf16.mxu0 0
        %1958 = vmatpush1.bf16.msra.mxu0 %v1926
        %1959 = vmatprep.subr.bf16.mxu0 0
        %1960 = vmatpush1.bf16.msra.mxu0 %v1927
        %1961 = vmatprep.subr.bf16.mxu0 0
        %1962 = vmatpush1.bf16.msra.mxu0 %v1928
        %1963 = vmatprep.subr.bf16.mxu0 0
        %1964 = vmatpush1.bf16.msra.mxu0 %v1929
        %1965 = vmatprep.subr.bf16.mxu0 0
        %1966 = vmatpush1.bf16.msra.mxu0 %v1930
        %1967 = vmatprep.subr.bf16.mxu0 0
        %1968 = vmatpush1.bf16.msra.mxu0 %v1931
        %1969 = vmatprep.subr.bf16.mxu0 0
        %1970 = vmatpush1.bf16.msra.mxu0 %v1932
        %1971 = vmatprep.subr.bf16.mxu0 0
        %1972 = vmatpush1.bf16.msra.mxu0 %v1933
        %1973 = vmatprep.subr.bf16.mxu0 0
        %1974 = vmatpush1.bf16.msra.mxu0 0
        %1975 = vmatprep.subr.bf16.mxu0 0
        %1976 = vmatpush1.bf16.msra.mxu0 0
        %1977 = vmatprep.subr.bf16.mxu0 0
        %1978 = vmatpush1.bf16.msra.mxu0 0
        %1979 = vmatprep.subr.bf16.mxu0 0
        %1980 = vmatpush1.bf16.msra.mxu0 0
        %1981 = vmatprep.mubr.bf16.mxu0 %v1947
        %1982 = vmatmul.mubr.bf16.gmra.mrb[0].mxu0 %v1848
        %v1983 = vpop.f32.mrb[0].mxu0
        %v1984 = vadd.f32 0.0, %v1983
        %v1985 = vpop.f32.mrb[0].mxu0
        %v1986 = vpop.f32.mrb[0].mxu0
        %v1987 = vpop.f32.mrb[0].mxu0
        %1988 = vdwg.mxu0
        %v1989 = vadd.f32 %v1633, %v1984
        %1990 = vst.msk [vmem:[%s580] sm:$0xff] %vm584, %v1989
        %s1991 = sand.u32 %s300, 1
        %s1992 = scalar_lea.sflag [#allocation4], %s1991
        %s1993 = sand.u32 %s300, 1
        %s1994 = smul.addr %s1993, 8
        %s1995 = scalar_lea.vmem [#allocation22], %s1994
        // Predicated region
        $region117: #{tpu_custom_call.1} parent=67 // pred_check
          %p1996 = pneg %p310
        $region118: #{tpu_custom_call.1} parent=67 // pred_check_branch
          %1998 = sbr.rel (%p1996) target = $region120
        $region119: #{tpu_custom_call.1} parent=67 // pred_region
          %s2000 = ssub.s32 128, 128
          %2001 = vsyncadd %s1992, %s2000
          %s2002 = smul.addr %s35, 128
          %s2003 = scalar_lea.hbm %s12, %s2002
          %s2005 = sshll.u32 %s1995, 4
          %s2006 = int_to_ptr.vmem [resolvable:$true] %s2005
          %2008 = dma.vmem_to_hbm [thread:$0]  %s2006, 128, %s2003, %s1992
        $region120: #{tpu_custom_call.1} parent=67 // pred_fallthru
          _
      $region68: #{tpu_custom_call.1} parent=5 // pred_fallthru
        _
      %p2009 = scmp.le.s32.totalorder 2, %s30
      // Predicated region
      $region121: #{tpu_custom_call.1} parent=5 // pred_check
        %p2010 = pneg %p2009
      $region122: #{tpu_custom_call.1} parent=5 // pred_check_branch
        %2012 = sbr.rel (%p2010) target = $region124
      $region123: #{tpu_custom_call.1} parent=5 // pred_region
        %s2013 = ssub.s32 %s30, 2
        // Predicated region
        $region125: #{tpu_custom_call.1} parent=123 // pred_check
          %p2014 = pneg %p316
        $region126: #{tpu_custom_call.1} parent=123 // pred_check_branch
          %2016 = sbr.rel (%p2014) target = $region128
        $region127: #{tpu_custom_call.1} parent=123 // pred_region
          %s2017 = sand.u32 %s301, 1
          %s2018 = scalar_lea.sflag [#allocation4], %s2017
          %s2019 = sand.u32 %s301, 1
          %s2020 = smul.addr %s2019, 8
          %s2021 = scalar_lea.vmem [#allocation22], %s2020
          %2022 = dma.done %s2018, 128
        $region128: #{tpu_custom_call.1} parent=123 // pred_fallthru
          _
      $region124: #{tpu_custom_call.1} parent=5 // pred_fallthru
        _
    $region6: #{tpu_custom_call.1} parent=1 // loop_footer
      %s34 = sadd.s32 1, %s30
    $region7: #{tpu_custom_call.1} parent=1 // loop_footer_branch
      %29 = sbr.rel target = $region3
    $region8: #{tpu_custom_call.1} parent=1 // loop_exit
      _
    %2023 = vsyncpa [#allocation3], 1
    %s2024 = scalar_lea.sflag [#allocation3], 1
    %2025 = vsyncpa %s2024, 1
    %2026 = vsyncpa [#allocation6], 1
    %2027 = vsyncpa [#allocation9], 1
    %2028 = vsyncpa [#allocation12], 1
    %2029 = vsyncpa [#allocation15], 1
    %2030 = vsyncpa [#allocation18], 1
    %2031 = vsyncpa [#allocation21], 1
    %2032 = vsyncpa [#allocation4], 1
    %s2033 = scalar_lea.sflag [#allocation4], 1
    %2034 = vsyncpa %s2033, 1

</llo_original>
